<compile_context>
chip_gen: v7x
topology: tpu7x:2x2x1
jax: 0.10.0
libtpu: 0.0.40
codegen_flags: <defaults>
</compile_context>

<pallas_src>
import jax
import jax.numpy as jnp
from jax.experimental import pallas as pl
from jax.experimental.pallas import tpu as pltpu

ROWS, COLS = 8, 8
HW = ROWS * COLS                     # 64 board squares
MAX_BOARDS_PER_TILE = 32             # up to 2048-row matmul tiles per grid step
_PAD = 16                            # zero guard rows in the staging buffer
_TAPS = tuple((dy, dx) for dy in (-1, 0, 1) for dx in (-1, 0, 1))
_HIGH = jax.lax.Precision.HIGHEST    # used only by the pure-JAX reference


# ------------------------------ fused kernel ------------------------------- #

def _alphazero_kernel(x_ref, mask_ref, sel_ref,
                      w1_ref, b1_ref, w2_ref, b2_ref, w3_ref, b3_ref,
                      wpv_ref, bpv_ref,
                      wp0t_ref, wp1t_ref, wv1t_ref, bhead_ref,
                      wv2_ref, bv2_ref,
                      out_ref,
                      nbuf_ref, wbuf_ref):
    """Full AlphaZeroNet forward for one tile of boards, fully VMEM-resident."""
    f32 = jnp.float32
    bf16 = jnp.bfloat16
    m = x_ref.shape[1]               # rows in this tile = boards_per_tile * 64
    bpt = m // HW

    # Zero ONLY the guard rows (2 x 16 rows x 128 cols), every grid step (each
    # megacore half owns its own scratch, so no program_id==0 gating).
    nbuf_ref[0:_PAD, :] = jnp.zeros((_PAD, 128), f32)
    nbuf_ref[_PAD + m:, :] = jnp.zeros((_PAD, 128), f32)

    # ---- conv1: one (m, 27) @ (27, 64) im2col matmul, patches from wrapper.
    a = jnp.dot(x_ref[0], w1_ref[...], preferred_element_type=f32) + b1_ref[...]
    a = jnp.maximum(a, 0.0)                                    # (m, 64) f32

    def conv3x3(a_val, w_ref, b_ref):
        """3x3 'same' conv: stage the input once (f32, so the odd-row shifted
        loads stay cheap), build the (m, 9*Cin) im2col in bf16 VMEM, then run a
        single matmul whose K the compiler chunks at the native MXU depth."""
        cin = a_val.shape[1]
        nbuf_ref[_PAD:_PAD + m, 0:cin] = a_val
        for k, (dy, dx) in enumerate(_TAPS):
            start = _PAD + dy * COLS + dx                      # static window
            src = nbuf_ref[start:start + m, 0:cin]
            if not (dy == 0 and dx == 0):
                src = src * mask_ref[:, k:k + 1]               # hoisted 0/1 mask
            wbuf_ref[:, k * cin:(k + 1) * cin] = src.astype(bf16)
        patches = wbuf_ref[:, 0:9 * cin]                       # (m, 9*cin) bf16
        acc = jnp.dot(patches, w_ref[...], preferred_element_type=f32)
        return jnp.maximum(acc + b_ref[...], 0.0)

    a = conv3x3(a, w2_ref, b2_ref)                             # (m, 128)
    a = conv3x3(a, w3_ref, b3_ref)                             # (m, 128)

    # ---- merged 1x1 policy_conv (2 ch) + value_conv (1 ch): pv = [p0|p1|v].
    pv = jnp.dot(a.astype(bf16), wpv_ref[...],
                 preferred_element_type=f32) + bpv_ref[...]
    pv = jnp.maximum(pv, 0.0)                                  # (m, 3)

    # ---- fused head: scale board-tiled FC weights per row on the VPU, then a
    # single (bpt, m) @ (m, 128) fold matmul gives [policy logits | value fc1].
    t = (pv[:, 0:1] * wp0t_ref[...]
         + pv[:, 1:2] * wp1t_ref[...]
         + pv[:, 2:3] * wv1t_ref[...])                         # (m, 128) f32
    head = jnp.dot(sel_ref[...], t.astype(bf16),
                   preferred_element_type=f32) + bhead_ref[...]  # (bpt, 128)

    logits = head[:, 0:HW]
    zmax = jnp.max(logits, axis=-1, keepdims=True)
    z = logits - zmax
    logp = z - jnp.log(jnp.sum(jnp.exp(z), axis=-1, keepdims=True))

    hdn = jnp.maximum(head[:, HW:2 * HW], 0.0)
    val = jnp.tanh(jnp.sum(hdn * wv2_ref[...], axis=-1, keepdims=True)
                   + bv2_ref[...])

    # Lane-dense packed output block: [log_policy (64) | value (1) | pad (63)].
    out_ref[0] = jnp.concatenate(
        [logp, val, jnp.zeros((bpt, HW - 1), f32)], axis=-1)


# ------------------------------ params / prep ------------------------------- #

def init_params(key):
    """Deterministic init with PyTorch parameter layouts (as in the nn.Module)."""
    def nrm(k, shape, scale=0.1):
        return scale * jax.random.normal(k, shape, dtype=jnp.float32)

    ks = jax.random.split(key, 16)
    return {
        "conv1_w": nrm(ks[0], (64, 3, 3, 3)),    "conv1_b": nrm(ks[1], (64,), 0.05),
        "conv2_w": nrm(ks[2], (128, 64, 3, 3)),  "conv2_b": nrm(ks[3], (128,), 0.05),
        "conv3_w": nrm(ks[4], (128, 128, 3, 3)), "conv3_b": nrm(ks[5], (128,), 0.05),
        "pconv_w": nrm(ks[6], (2, 128, 1, 1)),   "pconv_b": nrm(ks[7], (2,), 0.05),
        "pfc_w":   nrm(ks[8], (HW, 2 * HW)),     "pfc_b":   nrm(ks[9], (HW,), 0.05),
        "vconv_w": nrm(ks[10], (1, 128, 1, 1)),  "vconv_b": nrm(ks[11], (1,), 0.05),
        "vfc1_w":  nrm(ks[12], (64, HW)),        "vfc1_b":  nrm(ks[13], (64,), 0.05),
        "vfc2_w":  nrm(ks[14], (1, 64)),         "vfc2_b":  nrm(ks[15], (1,), 0.05),
    }


def prepare_params(p):
    """One-time re-layout of torch-format weights (incl. bf16 casts) into the
    kernel's matmul layouts."""
    bf16 = jnp.bfloat16

    def conv_w(wt):  # (Cout, Cin, 3, 3) -> (9*Cin, Cout), row = (ky*3+kx)*Cin + c
        co, ci = wt.shape[0], wt.shape[1]
        return jnp.transpose(wt, (2, 3, 1, 0)).reshape(9 * ci, co).astype(bf16)

    wpv = jnp.concatenate([p["pconv_w"].reshape(2, 128).T,
                           p["vconv_w"].reshape(1, 128).T], axis=1).astype(bf16)
    bpv = jnp.concatenate([p["pconv_b"], p["vconv_b"]]).reshape(1, 3)

    return {
        "w1": conv_w(p["conv1_w"]), "b1": p["conv1_b"].reshape(1, -1),
        "w2": conv_w(p["conv2_w"]), "b2": p["conv2_b"].reshape(1, -1),
        "w3": conv_w(p["conv3_w"]), "b3": p["conv3_b"].reshape(1, -1),
        "wpv": wpv, "bpv": bpv,
        # policy_fc split per NCHW channel block (torch flatten index = c*64+s)
        "wp0": p["pfc_w"][:, :HW].T, "wp1": p["pfc_w"][:, HW:].T, "bp": p["pfc_b"],
        "wv1": p["vfc1_w"].T, "bv1": p["vfc1_b"],
        "wv2": p["vfc2_w"].reshape(1, -1), "bv2": p["vfc2_b"].reshape(1, 1),
    }


# --------------------------- wrapper-side helpers --------------------------- #

def _im2col_conv1(x_nchw):
    """(B,3,8,8) -> (B*64, 27) conv1 patches (zero padding folded in);
    column order = (ky*3 + kx)*3 + c, matching conv_w()."""
    x = jnp.transpose(x_nchw, (0, 2, 3, 1))                    # (B,8,8,3)
    xp = jnp.pad(x, ((0, 0), (1, 1), (1, 1), (0, 0)))
    taps = [xp[:, ky:ky + ROWS, kx:kx + COLS, :]
            for ky in range(3) for kx in range(3)]
    return jnp.concatenate(taps, axis=-1).reshape(-1, 27)


def _conv_masks(m):
    """(m, 9) 0/1 validity masks per shifted tap (row r = board*64 + h*8 + w)."""
    r = jnp.arange(m, dtype=jnp.int32).reshape(m, 1)
    h = (r % HW) // COLS
    w = r % COLS
    cols = []
    for dy, dx in _TAPS:
        cols.append((h + dy >= 0) & (h + dy < ROWS)
                    & (w + dx >= 0) & (w + dx < COLS))
    return jnp.concatenate(cols, axis=1).astype(jnp.float32)


def _board_sel(bpt, m):
    """(bpt, m) one-hot board-selection matrix: sel[b, r] = [r // 64 == b]."""
    b = jnp.arange(bpt, dtype=jnp.int32).reshape(bpt, 1)
    r = jnp.arange(m, dtype=jnp.int32).reshape(1, m)
    return ((r // HW) == b).astype(jnp.bfloat16)


# ------------------------------ forward wrapper ----------------------------- #

@jax.jit
def alpha_zero_forward(board_tensor, prep):
    """Mirrors AlphaZeroNet.forward: returns (log_policy (B, 64), value (B, 1))."""
    f32 = jnp.float32
    x = board_tensor.reshape(-1, 3, ROWS, COLS).astype(f32)
    b = x.shape[0]

    patches = _im2col_conv1(x)                                  # (b*64, 27)

    # Boards per tile: >=2 tiles for small batches (feeds both TCs / megacore).
    bpt = max(1, min(MAX_BOARDS_PER_TILE, (b + 1) // 2))
    pad_boards = (-b) % bpt
    if pad_boards:
        patches = jnp.pad(patches, ((0, pad_boards * HW), (0, 0)))
    b_pad = b + pad_boards
    n_tiles = b_pad // bpt
    m_tile = bpt * HW
    x3 = patches.astype(jnp.bfloat16).reshape(n_tiles, m_tile, 27)

    # Hoisted per-row constants and board-tiled head weights (built once per
    # compiled shape; tiny).
    mask = _conv_masks(m_tile)
    sel = _board_sel(bpt, m_tile)
    z64 = jnp.zeros((HW, HW), f32)
    wp0t = jnp.tile(jnp.concatenate([prep["wp0"], z64], axis=1), (bpt, 1))
    wp1t = jnp.tile(jnp.concatenate([prep["wp1"], z64], axis=1), (bpt, 1))
    wv1t = jnp.tile(jnp.concatenate([z64, prep["wv1"]], axis=1), (bpt, 1))
    bhead = jnp.concatenate([prep["bp"], prep["bv1"]]).reshape(1, 2 * HW)

    aux = (mask, sel,
           prep["w1"], prep["b1"], prep["w2"], prep["b2"], prep["w3"], prep["b3"],
           prep["wpv"], prep["bpv"],
           wp0t, wp1t, wv1t, bhead, prep["wv2"], prep["bv2"])

    def full(arr):  # whole-array block, constant index map
        return pl.BlockSpec(arr.shape, lambda i, _nd=arr.ndim: (0,) * _nd)

    out = pl.pallas_call(
        _alphazero_kernel,
        out_shape=jax.ShapeDtypeStruct((n_tiles, bpt, 2 * HW), jnp.float32),
        grid=(n_tiles,),
        in_specs=[pl.BlockSpec((1, m_tile, 27), lambda i: (i, 0, 0))]
                 + [full(a) for a in aux],
        out_specs=pl.BlockSpec((1, bpt, 2 * HW), lambda i: (i, 0, 0)),
        scratch_shapes=[pltpu.VMEM((m_tile + 2 * _PAD, 128), jnp.float32),
                        pltpu.VMEM((m_tile, 9 * 128), jnp.bfloat16)],
        compiler_params=pltpu.CompilerParams(
            dimension_semantics=("parallel",)),
    )(x3, *aux)

    out = out.reshape(b_pad, 2 * HW)
    return out[:b, 0:HW], out[:b, HW:HW + 1]


# ------------------------- pure-JAX reference (check) ----------------------- #

@jax.jit
def reference_forward(board_tensor, p):
    """Pure-JAX/XLA re-implementation of AlphaZeroNet.forward (f32, HIGHEST)."""
    x = board_tensor.reshape(-1, 3, ROWS, COLS).astype(jnp.float32)

    def conv(inp, wt, bias, pad):
        y = jax.lax.conv_general_dilated(
            inp, wt, window_strides=(1, 1), padding=[(pad, pad), (pad, pad)],
            dimension_numbers=("NCHW", "OIHW", "NCHW"), precision=_HIGH)
        return y + bias.reshape(1, -1, 1, 1)

    x = jax.nn.relu(conv(x, p["conv1_w"], p["conv1_b"], 1))
    x = jax.nn.relu(conv(x, p["conv2_w"], p["conv2_b"], 1))
    x = jax.nn.relu(conv(x, p["conv3_w"], p["conv3_b"], 1))

    pm = jax.nn.relu(conv(x, p["pconv_w"], p["pconv_b"], 0))
    pflat = pm.reshape(pm.shape[0], -1)
    logits = jnp.dot(pflat, p["pfc_w"].T, precision=_HIGH) + p["pfc_b"]
    logp = jax.nn.log_softmax(logits, axis=1)

    vm = jax.nn.relu(conv(x, p["vconv_w"], p["vconv_b"], 0))
    vflat = vm.reshape(vm.shape[0], -1)
    hdn = jax.nn.relu(jnp.dot(vflat, p["vfc1_w"].T, precision=_HIGH) + p["vfc1_b"])
    val = jnp.tanh(jnp.dot(hdn, p["vfc2_w"].T, precision=_HIGH) + p["vfc2_b"])
    return logp, val


# ---------------------------------- main ------------------------------------ #

if __name__ == "__main__":
    key = jax.random.PRNGKey(0)
    k_params, k_input = jax.random.split(key)

    raw_params = init_params(k_params)
    prep = prepare_params(raw_params)          # one-time weight re-layout / bf16 cast

    # Board tensor: batch=2, 3 planes, 8x8 board (the module hardcodes 8x8).
    board_tensor = jax.random.normal(k_input, (2, 3, ROWS, COLS), dtype=jnp.float32)

    log_policy, value = alpha_zero_forward(board_tensor, prep)
    log_policy, value = jax.block_until_ready((log_policy, value))

    # Structural checks.
    assert log_policy.shape == (2, HW) and value.shape == (2, 1)
    assert bool(jnp.all(jnp.isfinite(log_policy))) and bool(jnp.all(jnp.isfinite(value)))
    prob_sums = jnp.sum(jnp.exp(log_policy), axis=-1)
    assert bool(jnp.all(jnp.abs(prob_sums - 1.0) < 1e-3))
    assert bool(jnp.all(jnp.abs(value) <= 1.0))

    # Numerical cross-check against the f32 reference.  The kernel now uses
    # bf16 MXU operands (per the perf review), so the tolerance covers the
    # expected ~1e-2 scale bf16 rounding of the logits, not just summation order.
    ref_logp, ref_val = reference_forward(board_tensor, raw_params)
    assert bool(jnp.allclose(log_policy, ref_logp, atol=1e-1, rtol=1e-1)), (
        float(jnp.max(jnp.abs(log_policy - ref_logp))))
    assert bool(jnp.allclose(value, ref_val, atol=1e-1, rtol=1e-1)), (
        float(jnp.max(jnp.abs(value - ref_val))))

    print("KERNEL_OK")
</pallas_src>

<mosaic_0001>
module attributes {stable_mosaic.version = 11 : i64} {
  func.func @_alphazero_kernel(%arg0: i32, %arg1: memref<1x64x27xbf16, #tpu.memory_space<vmem>>, %arg2: memref<64x9xf32, #tpu.memory_space<vmem>>, %arg3: memref<1x64xbf16, #tpu.memory_space<vmem>>, %arg4: memref<27x64xbf16, #tpu.memory_space<vmem>>, %arg5: memref<1x64xf32, #tpu.memory_space<vmem>>, %arg6: memref<576x128xbf16, #tpu.memory_space<vmem>>, %arg7: memref<1x128xf32, #tpu.memory_space<vmem>>, %arg8: memref<1152x128xbf16, #tpu.memory_space<vmem>>, %arg9: memref<1x128xf32, #tpu.memory_space<vmem>>, %arg10: memref<128x3xbf16, #tpu.memory_space<vmem>>, %arg11: memref<1x3xf32, #tpu.memory_space<vmem>>, %arg12: memref<64x128xf32, #tpu.memory_space<vmem>>, %arg13: memref<64x128xf32, #tpu.memory_space<vmem>>, %arg14: memref<64x128xf32, #tpu.memory_space<vmem>>, %arg15: memref<1x128xf32, #tpu.memory_space<vmem>>, %arg16: memref<1x64xf32, #tpu.memory_space<vmem>>, %arg17: memref<1x1xf32, #tpu.memory_space<vmem>>, %arg18: memref<1x1x128xf32, #tpu.memory_space<vmem>>, %arg19: memref<96x128xf32, #tpu.memory_space<vmem>>, %arg20: memref<64x1152xbf16, #tpu.memory_space<vmem>>) attributes {dimension_semantics = [#tpu.dimension_semantics<parallel>], iteration_bounds = array<i64: 2>, scalar_prefetch = 0 : i64, scratch_operands = 2 : i64, tpu.core_type = #tpu.core_type<tc>, window_params = [{transform_indices = @transform_0, window_bounds = array<i64: 1, 64, 27>}, {pipeline_mode = #tpu.pipeline_mode<synchronous>, transform_indices = @transform_1, window_bounds = array<i64: 64, 9>}, {pipeline_mode = #tpu.pipeline_mode<synchronous>, transform_indices = @transform_2, window_bounds = array<i64: 1, 64>}, {pipeline_mode = #tpu.pipeline_mode<synchronous>, transform_indices = @transform_3, window_bounds = array<i64: 27, 64>}, {pipeline_mode = #tpu.pipeline_mode<synchronous>, transform_indices = @transform_4, window_bounds = array<i64: 1, 64>}, {pipeline_mode = #tpu.pipeline_mode<synchronous>, transform_indices = @transform_5, window_bounds = array<i64: 576, 128>}, {pipeline_mode = #tpu.pipeline_mode<synchronous>, transform_indices = @transform_6, window_bounds = array<i64: 1, 128>}, {pipeline_mode = #tpu.pipeline_mode<synchronous>, transform_indices = @transform_7, window_bounds = array<i64: 1152, 128>}, {pipeline_mode = #tpu.pipeline_mode<synchronous>, transform_indices = @transform_8, window_bounds = array<i64: 1, 128>}, {pipeline_mode = #tpu.pipeline_mode<synchronous>, transform_indices = @transform_9, window_bounds = array<i64: 128, 3>}, {pipeline_mode = #tpu.pipeline_mode<synchronous>, transform_indices = @transform_10, window_bounds = array<i64: 1, 3>}, {pipeline_mode = #tpu.pipeline_mode<synchronous>, transform_indices = @transform_11, window_bounds = array<i64: 64, 128>}, {pipeline_mode = #tpu.pipeline_mode<synchronous>, transform_indices = @transform_12, window_bounds = array<i64: 64, 128>}, {pipeline_mode = #tpu.pipeline_mode<synchronous>, transform_indices = @transform_13, window_bounds = array<i64: 64, 128>}, {pipeline_mode = #tpu.pipeline_mode<synchronous>, transform_indices = @transform_14, window_bounds = array<i64: 1, 128>}, {pipeline_mode = #tpu.pipeline_mode<synchronous>, transform_indices = @transform_15, window_bounds = array<i64: 1, 64>}, {pipeline_mode = #tpu.pipeline_mode<synchronous>, transform_indices = @transform_16, window_bounds = array<i64: 1, 1>}, {transform_indices = @transform_17, window_bounds = array<i64: 1, 1, 128>}]} {
    %cst = arith.constant 0.000000e+00 : f32
    %0 = vector.broadcast %cst : f32 to vector<16x128xf32>
    %c0 = arith.constant 0 : index
    %c0_0 = arith.constant 0 : index
    %1 = vector.load %arg19[%c0, %c0_0] : memref<96x128xf32, #tpu.memory_space<vmem>>, vector<16x128xf32>
    tpu.vector_store %arg19[%c0, %c0_0], %0 {strides = array<i32>} : memref<96x128xf32, #tpu.memory_space<vmem>>, vector<16x128xf32>,
    %cst_1 = arith.constant 0.000000e+00 : f32
    %2 = vector.broadcast %cst_1 : f32 to vector<16x128xf32>
    %c80 = arith.constant 80 : index
    %c0_2 = arith.constant 0 : index
    %3 = vector.load %arg19[%c80, %c0_2] : memref<96x128xf32, #tpu.memory_space<vmem>>, vector<16x128xf32>
    tpu.vector_store %arg19[%c80, %c0_2], %2 {strides = array<i32>} : memref<96x128xf32, #tpu.memory_space<vmem>>, vector<16x128xf32>,
    %c0_3 = arith.constant 0 : index
    %c0_4 = arith.constant 0 : index
    %c0_5 = arith.constant 0 : index
    %4 = vector.load %arg1[%c0_3, %c0_4, %c0_5] : memref<1x64x27xbf16, #tpu.memory_space<vmem>>, vector<1x64x27xbf16>
    %5 = vector.shape_cast %4 : vector<1x64x27xbf16> to vector<64x27xbf16>
    %c0_6 = arith.constant 0 : index
    %c0_7 = arith.constant 0 : index
    %6 = vector.load %arg4[%c0_6, %c0_7] : memref<27x64xbf16, #tpu.memory_space<vmem>>, vector<27x64xbf16>
    %cst_8 = arith.constant dense<0.000000e+00> : vector<64x64xf32>
    %7 = tpu.matmul %5, %6, %cst_8 {dimension_numbers = #tpu.dot_dimension_numbers<[1], [0], [0], [1], [0, 0, 1, 1], [], []>} : vector<64x27xbf16>, vector<27x64xbf16>, vector<64x64xf32> -> vector<64x64xf32>
    %c0_9 = arith.constant 0 : index
    %c0_10 = arith.constant 0 : index
    %8 = vector.load %arg5[%c0_9, %c0_10] : memref<1x64xf32, #tpu.memory_space<vmem>>, vector<1x64xf32>
    %9 = vector.broadcast %8 : vector<1x64xf32> to vector<64x64xf32>
    %10 = arith.addf %7, %9 : vector<64x64xf32>
    %cst_11 = arith.constant 0.000000e+00 : f32
    %11 = vector.broadcast %cst_11 : f32 to vector<64x64xf32>
    %12 = arith.maximumf %10, %11 : vector<64x64xf32>
    %c16 = arith.constant 16 : index
    %c0_12 = arith.constant 0 : index
    %13 = vector.load %arg19[%c16, %c0_12] : memref<96x128xf32, #tpu.memory_space<vmem>>, vector<64x64xf32>
    tpu.vector_store %arg19[%c16, %c0_12], %12 {strides = array<i32>} : memref<96x128xf32, #tpu.memory_space<vmem>>, vector<64x64xf32>,
    %c7 = arith.constant 7 : index
    %c0_13 = arith.constant 0 : index
    %14 = vector.load %arg19[%c7, %c0_13] : memref<96x128xf32, #tpu.memory_space<vmem>>, vector<64x64xf32>
    %c0_14 = arith.constant 0 : index
    %c0_15 = arith.constant 0 : index
    %15 = vector.load %arg2[%c0_14, %c0_15] : memref<64x9xf32, #tpu.memory_space<vmem>>, vector<64x1xf32>
    %16 = vector.broadcast %15 : vector<64x1xf32> to vector<64x64xf32>
    %17 = arith.mulf %14, %16 : vector<64x64xf32>
    %18 = arith.truncf %17 : vector<64x64xf32> to vector<64x64xbf16>
    %c0_16 = arith.constant 0 : index
    %c0_17 = arith.constant 0 : index
    %19 = vector.load %arg20[%c0_16, %c0_17] : memref<64x1152xbf16, #tpu.memory_space<vmem>>, vector<64x64xbf16>
    tpu.vector_store %arg20[%c0_16, %c0_17], %18 {strides = array<i32>} : memref<64x1152xbf16, #tpu.memory_space<vmem>>, vector<64x64xbf16>,
    %c8 = arith.constant 8 : index
    %c0_18 = arith.constant 0 : index
    %20 = vector.load %arg19[%c8, %c0_18] : memref<96x128xf32, #tpu.memory_space<vmem>>, vector<64x64xf32>
    %c0_19 = arith.constant 0 : index
    %c1 = arith.constant 1 : index
    %21 = vector.load %arg2[%c0_19, %c1] : memref<64x9xf32, #tpu.memory_space<vmem>>, vector<64x1xf32>
    %22 = vector.broadcast %21 : vector<64x1xf32> to vector<64x64xf32>
    %23 = arith.mulf %20, %22 : vector<64x64xf32>
    %24 = arith.truncf %23 : vector<64x64xf32> to vector<64x64xbf16>
    %c0_20 = arith.constant 0 : index
    %c64 = arith.constant 64 : index
    %25 = vector.load %arg20[%c0_20, %c64] : memref<64x1152xbf16, #tpu.memory_space<vmem>>, vector<64x64xbf16>
    tpu.vector_store %arg20[%c0_20, %c64], %24 {strides = array<i32>} : memref<64x1152xbf16, #tpu.memory_space<vmem>>, vector<64x64xbf16>,
    %c9 = arith.constant 9 : index
    %c0_21 = arith.constant 0 : index
    %26 = vector.load %arg19[%c9, %c0_21] : memref<96x128xf32, #tpu.memory_space<vmem>>, vector<64x64xf32>
    %c0_22 = arith.constant 0 : index
    %c2 = arith.constant 2 : index
    %27 = vector.load %arg2[%c0_22, %c2] : memref<64x9xf32, #tpu.memory_space<vmem>>, vector<64x1xf32>
    %28 = vector.broadcast %27 : vector<64x1xf32> to vector<64x64xf32>
    %29 = arith.mulf %26, %28 : vector<64x64xf32>
    %30 = arith.truncf %29 : vector<64x64xf32> to vector<64x64xbf16>
    %c0_23 = arith.constant 0 : index
    %c128 = arith.constant 128 : index
    %31 = vector.load %arg20[%c0_23, %c128] : memref<64x1152xbf16, #tpu.memory_space<vmem>>, vector<64x64xbf16>
    tpu.vector_store %arg20[%c0_23, %c128], %30 {strides = array<i32>} : memref<64x1152xbf16, #tpu.memory_space<vmem>>, vector<64x64xbf16>,
    %c15 = arith.constant 15 : index
    %c0_24 = arith.constant 0 : index
    %32 = vector.load %arg19[%c15, %c0_24] : memref<96x128xf32, #tpu.memory_space<vmem>>, vector<64x64xf32>
    %c0_25 = arith.constant 0 : index
    %c3 = arith.constant 3 : index
    %33 = vector.load %arg2[%c0_25, %c3] : memref<64x9xf32, #tpu.memory_space<vmem>>, vector<64x1xf32>
    %34 = vector.broadcast %33 : vector<64x1xf32> to vector<64x64xf32>
    %35 = arith.mulf %32, %34 : vector<64x64xf32>
    %36 = arith.truncf %35 : vector<64x64xf32> to vector<64x64xbf16>
    %c0_26 = arith.constant 0 : index
    %c192 = arith.constant 192 : index
    %37 = vector.load %arg20[%c0_26, %c192] : memref<64x1152xbf16, #tpu.memory_space<vmem>>, vector<64x64xbf16>
    tpu.vector_store %arg20[%c0_26, %c192], %36 {strides = array<i32>} : memref<64x1152xbf16, #tpu.memory_space<vmem>>, vector<64x64xbf16>,
    %c16_27 = arith.constant 16 : index
    %c0_28 = arith.constant 0 : index
    %38 = vector.load %arg19[%c16_27, %c0_28] : memref<96x128xf32, #tpu.memory_space<vmem>>, vector<64x64xf32>
    %39 = arith.truncf %38 : vector<64x64xf32> to vector<64x64xbf16>
    %c0_29 = arith.constant 0 : index
    %c256 = arith.constant 256 : index
    %40 = vector.load %arg20[%c0_29, %c256] : memref<64x1152xbf16, #tpu.memory_space<vmem>>, vector<64x64xbf16>
    tpu.vector_store %arg20[%c0_29, %c256], %39 {strides = array<i32>} : memref<64x1152xbf16, #tpu.memory_space<vmem>>, vector<64x64xbf16>,
    %c17 = arith.constant 17 : index
    %c0_30 = arith.constant 0 : index
    %41 = vector.load %arg19[%c17, %c0_30] : memref<96x128xf32, #tpu.memory_space<vmem>>, vector<64x64xf32>
    %c0_31 = arith.constant 0 : index
    %c5 = arith.constant 5 : index
    %42 = vector.load %arg2[%c0_31, %c5] : memref<64x9xf32, #tpu.memory_space<vmem>>, vector<64x1xf32>
    %43 = vector.broadcast %42 : vector<64x1xf32> to vector<64x64xf32>
    %44 = arith.mulf %41, %43 : vector<64x64xf32>
    %45 = arith.truncf %44 : vector<64x64xf32> to vector<64x64xbf16>
    %c0_32 = arith.constant 0 : index
    %c320 = arith.constant 320 : index
    %46 = vector.load %arg20[%c0_32, %c320] : memref<64x1152xbf16, #tpu.memory_space<vmem>>, vector<64x64xbf16>
    tpu.vector_store %arg20[%c0_32, %c320], %45 {strides = array<i32>} : memref<64x1152xbf16, #tpu.memory_space<vmem>>, vector<64x64xbf16>,
    %c23 = arith.constant 23 : index
    %c0_33 = arith.constant 0 : index
    %47 = vector.load %arg19[%c23, %c0_33] : memref<96x128xf32, #tpu.memory_space<vmem>>, vector<64x64xf32>
    %c0_34 = arith.constant 0 : index
    %c6 = arith.constant 6 : index
    %48 = vector.load %arg2[%c0_34, %c6] : memref<64x9xf32, #tpu.memory_space<vmem>>, vector<64x1xf32>
    %49 = vector.broadcast %48 : vector<64x1xf32> to vector<64x64xf32>
    %50 = arith.mulf %47, %49 : vector<64x64xf32>
    %51 = arith.truncf %50 : vector<64x64xf32> to vector<64x64xbf16>
    %c0_35 = arith.constant 0 : index
    %c384 = arith.constant 384 : index
    %52 = vector.load %arg20[%c0_35, %c384] : memref<64x1152xbf16, #tpu.memory_space<vmem>>, vector<64x64xbf16>
    tpu.vector_store %arg20[%c0_35, %c384], %51 {strides = array<i32>} : memref<64x1152xbf16, #tpu.memory_space<vmem>>, vector<64x64xbf16>,
    %c24 = arith.constant 24 : index
    %c0_36 = arith.constant 0 : index
    %53 = vector.load %arg19[%c24, %c0_36] : memref<96x128xf32, #tpu.memory_space<vmem>>, vector<64x64xf32>
    %c0_37 = arith.constant 0 : index
    %c7_38 = arith.constant 7 : index
    %54 = vector.load %arg2[%c0_37, %c7_38] : memref<64x9xf32, #tpu.memory_space<vmem>>, vector<64x1xf32>
    %55 = vector.broadcast %54 : vector<64x1xf32> to vector<64x64xf32>
    %56 = arith.mulf %53, %55 : vector<64x64xf32>
    %57 = arith.truncf %56 : vector<64x64xf32> to vector<64x64xbf16>
    %c0_39 = arith.constant 0 : index
    %c448 = arith.constant 448 : index
    %58 = vector.load %arg20[%c0_39, %c448] : memref<64x1152xbf16, #tpu.memory_space<vmem>>, vector<64x64xbf16>
    tpu.vector_store %arg20[%c0_39, %c448], %57 {strides = array<i32>} : memref<64x1152xbf16, #tpu.memory_space<vmem>>, vector<64x64xbf16>,
    %c25 = arith.constant 25 : index
    %c0_40 = arith.constant 0 : index
    %59 = vector.load %arg19[%c25, %c0_40] : memref<96x128xf32, #tpu.memory_space<vmem>>, vector<64x64xf32>
    %c0_41 = arith.constant 0 : index
    %c8_42 = arith.constant 8 : index
    %60 = vector.load %arg2[%c0_41, %c8_42] : memref<64x9xf32, #tpu.memory_space<vmem>>, vector<64x1xf32>
    %61 = vector.broadcast %60 : vector<64x1xf32> to vector<64x64xf32>
    %62 = arith.mulf %59, %61 : vector<64x64xf32>
    %63 = arith.truncf %62 : vector<64x64xf32> to vector<64x64xbf16>
    %c0_43 = arith.constant 0 : index
    %c512 = arith.constant 512 : index
    %64 = vector.load %arg20[%c0_43, %c512] : memref<64x1152xbf16, #tpu.memory_space<vmem>>, vector<64x64xbf16>
    tpu.vector_store %arg20[%c0_43, %c512], %63 {strides = array<i32>} : memref<64x1152xbf16, #tpu.memory_space<vmem>>, vector<64x64xbf16>,
    %c0_44 = arith.constant 0 : index
    %c0_45 = arith.constant 0 : index
    %65 = vector.load %arg20[%c0_44, %c0_45] : memref<64x1152xbf16, #tpu.memory_space<vmem>>, vector<64x576xbf16>
    %c0_46 = arith.constant 0 : index
    %c0_47 = arith.constant 0 : index
    %66 = vector.load %arg6[%c0_46, %c0_47] : memref<576x128xbf16, #tpu.memory_space<vmem>>, vector<576x128xbf16>
    %cst_48 = arith.constant dense<0.000000e+00> : vector<64x128xf32>
    %67 = tpu.matmul %65, %66, %cst_48 {dimension_numbers = #tpu.dot_dimension_numbers<[1], [0], [0], [1], [0, 0, 1, 1], [], []>} : vector<64x576xbf16>, vector<576x128xbf16>, vector<64x128xf32> -> vector<64x128xf32>
    %c0_49 = arith.constant 0 : index
    %c0_50 = arith.constant 0 : index
    %68 = vector.load %arg7[%c0_49, %c0_50] : memref<1x128xf32, #tpu.memory_space<vmem>>, vector<1x128xf32>
    %69 = vector.broadcast %68 : vector<1x128xf32> to vector<64x128xf32>
    %70 = arith.addf %67, %69 : vector<64x128xf32>
    %cst_51 = arith.constant 0.000000e+00 : f32
    %71 = vector.broadcast %cst_51 : f32 to vector<64x128xf32>
    %72 = arith.maximumf %70, %71 : vector<64x128xf32>
    %c16_52 = arith.constant 16 : index
    %c0_53 = arith.constant 0 : index
    %73 = vector.load %arg19[%c16_52, %c0_53] : memref<96x128xf32, #tpu.memory_space<vmem>>, vector<64x128xf32>
    tpu.vector_store %arg19[%c16_52, %c0_53], %72 {strides = array<i32>} : memref<96x128xf32, #tpu.memory_space<vmem>>, vector<64x128xf32>,
    %c7_54 = arith.constant 7 : index
    %c0_55 = arith.constant 0 : index
    %74 = vector.load %arg19[%c7_54, %c0_55] : memref<96x128xf32, #tpu.memory_space<vmem>>, vector<64x128xf32>
    %c0_56 = arith.constant 0 : index
    %c0_57 = arith.constant 0 : index
    %75 = vector.load %arg2[%c0_56, %c0_57] : memref<64x9xf32, #tpu.memory_space<vmem>>, vector<64x1xf32>
    %76 = vector.broadcast %75 : vector<64x1xf32> to vector<64x128xf32>
    %77 = arith.mulf %74, %76 : vector<64x128xf32>
    %78 = arith.truncf %77 : vector<64x128xf32> to vector<64x128xbf16>
    %c0_58 = arith.constant 0 : index
    %c0_59 = arith.constant 0 : index
    %79 = vector.load %arg20[%c0_58, %c0_59] : memref<64x1152xbf16, #tpu.memory_space<vmem>>, vector<64x128xbf16>
    tpu.vector_store %arg20[%c0_58, %c0_59], %78 {strides = array<i32>} : memref<64x1152xbf16, #tpu.memory_space<vmem>>, vector<64x128xbf16>,
    %c8_60 = arith.constant 8 : index
    %c0_61 = arith.constant 0 : index
    %80 = vector.load %arg19[%c8_60, %c0_61] : memref<96x128xf32, #tpu.memory_space<vmem>>, vector<64x128xf32>
    %c0_62 = arith.constant 0 : index
    %c1_63 = arith.constant 1 : index
    %81 = vector.load %arg2[%c0_62, %c1_63] : memref<64x9xf32, #tpu.memory_space<vmem>>, vector<64x1xf32>
    %82 = vector.broadcast %81 : vector<64x1xf32> to vector<64x128xf32>
    %83 = arith.mulf %80, %82 : vector<64x128xf32>
    %84 = arith.truncf %83 : vector<64x128xf32> to vector<64x128xbf16>
    %c0_64 = arith.constant 0 : index
    %c128_65 = arith.constant 128 : index
    %85 = vector.load %arg20[%c0_64, %c128_65] : memref<64x1152xbf16, #tpu.memory_space<vmem>>, vector<64x128xbf16>
    tpu.vector_store %arg20[%c0_64, %c128_65], %84 {strides = array<i32>} : memref<64x1152xbf16, #tpu.memory_space<vmem>>, vector<64x128xbf16>,
    %c9_66 = arith.constant 9 : index
    %c0_67 = arith.constant 0 : index
    %86 = vector.load %arg19[%c9_66, %c0_67] : memref<96x128xf32, #tpu.memory_space<vmem>>, vector<64x128xf32>
    %c0_68 = arith.constant 0 : index
    %c2_69 = arith.constant 2 : index
    %87 = vector.load %arg2[%c0_68, %c2_69] : memref<64x9xf32, #tpu.memory_space<vmem>>, vector<64x1xf32>
    %88 = vector.broadcast %87 : vector<64x1xf32> to vector<64x128xf32>
    %89 = arith.mulf %86, %88 : vector<64x128xf32>
    %90 = arith.truncf %89 : vector<64x128xf32> to vector<64x128xbf16>
    %c0_70 = arith.constant 0 : index
    %c256_71 = arith.constant 256 : index
    %91 = vector.load %arg20[%c0_70, %c256_71] : memref<64x1152xbf16, #tpu.memory_space<vmem>>, vector<64x128xbf16>
    tpu.vector_store %arg20[%c0_70, %c256_71], %90 {strides = array<i32>} : memref<64x1152xbf16, #tpu.memory_space<vmem>>, vector<64x128xbf16>,
    %c15_72 = arith.constant 15 : index
    %c0_73 = arith.constant 0 : index
    %92 = vector.load %arg19[%c15_72, %c0_73] : memref<96x128xf32, #tpu.memory_space<vmem>>, vector<64x128xf32>
    %c0_74 = arith.constant 0 : index
    %c3_75 = arith.constant 3 : index
    %93 = vector.load %arg2[%c0_74, %c3_75] : memref<64x9xf32, #tpu.memory_space<vmem>>, vector<64x1xf32>
    %94 = vector.broadcast %93 : vector<64x1xf32> to vector<64x128xf32>
    %95 = arith.mulf %92, %94 : vector<64x128xf32>
    %96 = arith.truncf %95 : vector<64x128xf32> to vector<64x128xbf16>
    %c0_76 = arith.constant 0 : index
    %c384_77 = arith.constant 384 : index
    %97 = vector.load %arg20[%c0_76, %c384_77] : memref<64x1152xbf16, #tpu.memory_space<vmem>>, vector<64x128xbf16>
    tpu.vector_store %arg20[%c0_76, %c384_77], %96 {strides = array<i32>} : memref<64x1152xbf16, #tpu.memory_space<vmem>>, vector<64x128xbf16>,
    %c16_78 = arith.constant 16 : index
    %c0_79 = arith.constant 0 : index
    %98 = vector.load %arg19[%c16_78, %c0_79] : memref<96x128xf32, #tpu.memory_space<vmem>>, vector<64x128xf32>
    %99 = arith.truncf %98 : vector<64x128xf32> to vector<64x128xbf16>
    %c0_80 = arith.constant 0 : index
    %c512_81 = arith.constant 512 : index
    %100 = vector.load %arg20[%c0_80, %c512_81] : memref<64x1152xbf16, #tpu.memory_space<vmem>>, vector<64x128xbf16>
    tpu.vector_store %arg20[%c0_80, %c512_81], %99 {strides = array<i32>} : memref<64x1152xbf16, #tpu.memory_space<vmem>>, vector<64x128xbf16>,
    %c17_82 = arith.constant 17 : index
    %c0_83 = arith.constant 0 : index
    %101 = vector.load %arg19[%c17_82, %c0_83] : memref<96x128xf32, #tpu.memory_space<vmem>>, vector<64x128xf32>
    %c0_84 = arith.constant 0 : index
    %c5_85 = arith.constant 5 : index
    %102 = vector.load %arg2[%c0_84, %c5_85] : memref<64x9xf32, #tpu.memory_space<vmem>>, vector<64x1xf32>
    %103 = vector.broadcast %102 : vector<64x1xf32> to vector<64x128xf32>
    %104 = arith.mulf %101, %103 : vector<64x128xf32>
    %105 = arith.truncf %104 : vector<64x128xf32> to vector<64x128xbf16>
    %c0_86 = arith.constant 0 : index
    %c640 = arith.constant 640 : index
    %106 = vector.load %arg20[%c0_86, %c640] : memref<64x1152xbf16, #tpu.memory_space<vmem>>, vector<64x128xbf16>
    tpu.vector_store %arg20[%c0_86, %c640], %105 {strides = array<i32>} : memref<64x1152xbf16, #tpu.memory_space<vmem>>, vector<64x128xbf16>,
    %c23_87 = arith.constant 23 : index
    %c0_88 = arith.constant 0 : index
    %107 = vector.load %arg19[%c23_87, %c0_88] : memref<96x128xf32, #tpu.memory_space<vmem>>, vector<64x128xf32>
    %c0_89 = arith.constant 0 : index
    %c6_90 = arith.constant 6 : index
    %108 = vector.load %arg2[%c0_89, %c6_90] : memref<64x9xf32, #tpu.memory_space<vmem>>, vector<64x1xf32>
    %109 = vector.broadcast %108 : vector<64x1xf32> to vector<64x128xf32>
    %110 = arith.mulf %107, %109 : vector<64x128xf32>
    %111 = arith.truncf %110 : vector<64x128xf32> to vector<64x128xbf16>
    %c0_91 = arith.constant 0 : index
    %c768 = arith.constant 768 : index
    %112 = vector.load %arg20[%c0_91, %c768] : memref<64x1152xbf16, #tpu.memory_space<vmem>>, vector<64x128xbf16>
    tpu.vector_store %arg20[%c0_91, %c768], %111 {strides = array<i32>} : memref<64x1152xbf16, #tpu.memory_space<vmem>>, vector<64x128xbf16>,
    %c24_92 = arith.constant 24 : index
    %c0_93 = arith.constant 0 : index
    %113 = vector.load %arg19[%c24_92, %c0_93] : memref<96x128xf32, #tpu.memory_space<vmem>>, vector<64x128xf32>
    %c0_94 = arith.constant 0 : index
    %c7_95 = arith.constant 7 : index
    %114 = vector.load %arg2[%c0_94, %c7_95] : memref<64x9xf32, #tpu.memory_space<vmem>>, vector<64x1xf32>
    %115 = vector.broadcast %114 : vector<64x1xf32> to vector<64x128xf32>
    %116 = arith.mulf %113, %115 : vector<64x128xf32>
    %117 = arith.truncf %116 : vector<64x128xf32> to vector<64x128xbf16>
    %c0_96 = arith.constant 0 : index
    %c896 = arith.constant 896 : index
    %118 = vector.load %arg20[%c0_96, %c896] : memref<64x1152xbf16, #tpu.memory_space<vmem>>, vector<64x128xbf16>
    tpu.vector_store %arg20[%c0_96, %c896], %117 {strides = array<i32>} : memref<64x1152xbf16, #tpu.memory_space<vmem>>, vector<64x128xbf16>,
    %c25_97 = arith.constant 25 : index
    %c0_98 = arith.constant 0 : index
    %119 = vector.load %arg19[%c25_97, %c0_98] : memref<96x128xf32, #tpu.memory_space<vmem>>, vector<64x128xf32>
    %c0_99 = arith.constant 0 : index
    %c8_100 = arith.constant 8 : index
    %120 = vector.load %arg2[%c0_99, %c8_100] : memref<64x9xf32, #tpu.memory_space<vmem>>, vector<64x1xf32>
    %121 = vector.broadcast %120 : vector<64x1xf32> to vector<64x128xf32>
    %122 = arith.mulf %119, %121 : vector<64x128xf32>
    %123 = arith.truncf %122 : vector<64x128xf32> to vector<64x128xbf16>
    %c0_101 = arith.constant 0 : index
    %c1024 = arith.constant 1024 : index
    %124 = vector.load %arg20[%c0_101, %c1024] : memref<64x1152xbf16, #tpu.memory_space<vmem>>, vector<64x128xbf16>
    tpu.vector_store %arg20[%c0_101, %c1024], %123 {strides = array<i32>} : memref<64x1152xbf16, #tpu.memory_space<vmem>>, vector<64x128xbf16>,
    %c0_102 = arith.constant 0 : index
    %c0_103 = arith.constant 0 : index
    %125 = vector.load %arg20[%c0_102, %c0_103] : memref<64x1152xbf16, #tpu.memory_space<vmem>>, vector<64x1152xbf16>
    %c0_104 = arith.constant 0 : index
    %c0_105 = arith.constant 0 : index
    %126 = vector.load %arg8[%c0_104, %c0_105] : memref<1152x128xbf16, #tpu.memory_space<vmem>>, vector<1152x128xbf16>
    %cst_106 = arith.constant dense<0.000000e+00> : vector<64x128xf32>
    %127 = tpu.matmul %125, %126, %cst_106 {dimension_numbers = #tpu.dot_dimension_numbers<[1], [0], [0], [1], [0, 0, 1, 1], [], []>} : vector<64x1152xbf16>, vector<1152x128xbf16>, vector<64x128xf32> -> vector<64x128xf32>
    %c0_107 = arith.constant 0 : index
    %c0_108 = arith.constant 0 : index
    %128 = vector.load %arg9[%c0_107, %c0_108] : memref<1x128xf32, #tpu.memory_space<vmem>>, vector<1x128xf32>
    %129 = vector.broadcast %128 : vector<1x128xf32> to vector<64x128xf32>
    %130 = arith.addf %127, %129 : vector<64x128xf32>
    %cst_109 = arith.constant 0.000000e+00 : f32
    %131 = vector.broadcast %cst_109 : f32 to vector<64x128xf32>
    %132 = arith.maximumf %130, %131 : vector<64x128xf32>
    %133 = arith.truncf %132 : vector<64x128xf32> to vector<64x128xbf16>
    %c0_110 = arith.constant 0 : index
    %c0_111 = arith.constant 0 : index
    %134 = vector.load %arg10[%c0_110, %c0_111] : memref<128x3xbf16, #tpu.memory_space<vmem>>, vector<128x3xbf16>
    %cst_112 = arith.constant dense<0.000000e+00> : vector<64x3xf32>
    %135 = tpu.matmul %133, %134, %cst_112 {dimension_numbers = #tpu.dot_dimension_numbers<[1], [0], [0], [1], [0, 0, 1, 1], [], []>} : vector<64x128xbf16>, vector<128x3xbf16>, vector<64x3xf32> -> vector<64x3xf32>
    %c0_113 = arith.constant 0 : index
    %c0_114 = arith.constant 0 : index
    %136 = vector.load %arg11[%c0_113, %c0_114] : memref<1x3xf32, #tpu.memory_space<vmem>>, vector<1x3xf32>
    %137 = vector.broadcast %136 : vector<1x3xf32> to vector<64x3xf32>
    %138 = arith.addf %135, %137 : vector<64x3xf32>
    %cst_115 = arith.constant 0.000000e+00 : f32
    %139 = vector.broadcast %cst_115 : f32 to vector<64x3xf32>
    %140 = arith.maximumf %138, %139 : vector<64x3xf32>
    %141 = vector.extract_strided_slice %140 {offsets = [0, 0], sizes = [64, 1], strides = [1, 1]} : vector<64x3xf32> to vector<64x1xf32>
    %c0_116 = arith.constant 0 : index
    %c0_117 = arith.constant 0 : index
    %142 = vector.load %arg12[%c0_116, %c0_117] : memref<64x128xf32, #tpu.memory_space<vmem>>, vector<64x128xf32>
    %143 = vector.broadcast %141 : vector<64x1xf32> to vector<64x128xf32>
    %144 = arith.mulf %143, %142 : vector<64x128xf32>
    %145 = vector.extract_strided_slice %140 {offsets = [0, 1], sizes = [64, 1], strides = [1, 1]} : vector<64x3xf32> to vector<64x1xf32>
    %c0_118 = arith.constant 0 : index
    %c0_119 = arith.constant 0 : index
    %146 = vector.load %arg13[%c0_118, %c0_119] : memref<64x128xf32, #tpu.memory_space<vmem>>, vector<64x128xf32>
    %147 = vector.broadcast %145 : vector<64x1xf32> to vector<64x128xf32>
    %148 = arith.mulf %147, %146 : vector<64x128xf32>
    %149 = arith.addf %144, %148 : vector<64x128xf32>
    %150 = vector.extract_strided_slice %140 {offsets = [0, 2], sizes = [64, 1], strides = [1, 1]} : vector<64x3xf32> to vector<64x1xf32>
    %c0_120 = arith.constant 0 : index
    %c0_121 = arith.constant 0 : index
    %151 = vector.load %arg14[%c0_120, %c0_121] : memref<64x128xf32, #tpu.memory_space<vmem>>, vector<64x128xf32>
    %152 = vector.broadcast %150 : vector<64x1xf32> to vector<64x128xf32>
    %153 = arith.mulf %152, %151 : vector<64x128xf32>
    %154 = arith.addf %149, %153 : vector<64x128xf32>
    %c0_122 = arith.constant 0 : index
    %c0_123 = arith.constant 0 : index
    %155 = vector.load %arg3[%c0_122, %c0_123] : memref<1x64xbf16, #tpu.memory_space<vmem>>, vector<1x64xbf16>
    %156 = arith.truncf %154 : vector<64x128xf32> to vector<64x128xbf16>
    %cst_124 = arith.constant dense<0.000000e+00> : vector<1x128xf32>
    %157 = tpu.matmul %155, %156, %cst_124 {dimension_numbers = #tpu.dot_dimension_numbers<[1], [0], [0], [1], [0, 0, 1, 1], [], []>} : vector<1x64xbf16>, vector<64x128xbf16>, vector<1x128xf32> -> vector<1x128xf32>
    %c0_125 = arith.constant 0 : index
    %c0_126 = arith.constant 0 : index
    %158 = vector.load %arg15[%c0_125, %c0_126] : memref<1x128xf32, #tpu.memory_space<vmem>>, vector<1x128xf32>
    %159 = arith.addf %157, %158 : vector<1x128xf32>
    %160 = vector.extract_strided_slice %159 {offsets = [0, 0], sizes = [1, 64], strides = [1, 1]} : vector<1x128xf32> to vector<1x64xf32>
    %cst_127 = arith.constant dense<0xFF800000> : vector<1xf32>
    %161 = vector.multi_reduction <maximumf>, %160, %cst_127 [1] : vector<1x64xf32> to vector<1xf32>
    %162 = vector.shape_cast %161 : vector<1xf32> to vector<1x1xf32>
    %163 = vector.broadcast %162 : vector<1x1xf32> to vector<1x64xf32>
    %164 = arith.subf %160, %163 : vector<1x64xf32>
    %165 = math.exp %164 : vector<1x64xf32>
    %cst_128 = arith.constant dense<0.000000e+00> : vector<1xf32>
    %166 = vector.multi_reduction <add>, %165, %cst_128 [1] : vector<1x64xf32> to vector<1xf32>
    %167 = vector.shape_cast %166 : vector<1xf32> to vector<1x1xf32>
    %168 = math.log %167 : vector<1x1xf32>
    %169 = vector.broadcast %168 : vector<1x1xf32> to vector<1x64xf32>
    %170 = arith.subf %164, %169 : vector<1x64xf32>
    %171 = vector.extract_strided_slice %159 {offsets = [0, 64], sizes = [1, 64], strides = [1, 1]} : vector<1x128xf32> to vector<1x64xf32>
    %cst_129 = arith.constant 0.000000e+00 : f32
    %172 = vector.broadcast %cst_129 : f32 to vector<1x64xf32>
    %173 = arith.maximumf %171, %172 : vector<1x64xf32>
    %c0_130 = arith.constant 0 : index
    %c0_131 = arith.constant 0 : index
    %174 = vector.load %arg16[%c0_130, %c0_131] : memref<1x64xf32, #tpu.memory_space<vmem>>, vector<1x64xf32>
    %175 = arith.mulf %173, %174 : vector<1x64xf32>
    %cst_132 = arith.constant dense<0.000000e+00> : vector<1xf32>
    %176 = vector.multi_reduction <add>, %175, %cst_132 [1] : vector<1x64xf32> to vector<1xf32>
    %177 = vector.shape_cast %176 : vector<1xf32> to vector<1x1xf32>
    %c0_133 = arith.constant 0 : index
    %c0_134 = arith.constant 0 : index
    %178 = vector.load %arg17[%c0_133, %c0_134] : memref<1x1xf32, #tpu.memory_space<vmem>>, vector<1x1xf32>
    %179 = arith.addf %177, %178 : vector<1x1xf32>
    %180 = math.tanh %179 : vector<1x1xf32>
    %cst_135 = arith.constant 0.000000e+00 : f32
    %181 = vector.broadcast %cst_135 : f32 to vector<1x63xf32>
    %182 = tpu.concatenate %170, %180, %181 in 1 : vector<1x64xf32>, vector<1x1xf32>, vector<1x63xf32> -> vector<1x128xf32>
    %c0_136 = arith.constant 0 : index
    %c0_137 = arith.constant 0 : index
    %c0_138 = arith.constant 0 : index
    %183 = vector.load %arg18[%c0_136, %c0_137, %c0_138] : memref<1x1x128xf32, #tpu.memory_space<vmem>>, vector<1x1x128xf32>
    %184 = vector.shape_cast %183 : vector<1x1x128xf32> to vector<1x128xf32>
    %185 = vector.shape_cast %182 : vector<1x128xf32> to vector<1x1x128xf32>
    tpu.vector_store %arg18[%c0_136, %c0_137, %c0_138], %185 {strides = array<i32>} : memref<1x1x128xf32, #tpu.memory_space<vmem>>, vector<1x1x128xf32>,
    return
  }
  func.func @transform_0(%arg0: i32) -> (i32, i32, i32) {
    %c0_i32 = arith.constant 0 : i32
    %c0_i32_0 = arith.constant 0 : i32
    %c0_i32_1 = arith.constant 0 : i32
    return %arg0, %c0_i32, %c0_i32_0 : i32, i32, i32
  }
  func.func @transform_1(%arg0: i32) -> (i32, i32) {
    %c0_i32 = arith.constant 0 : i32
    %c0_i32_0 = arith.constant 0 : i32
    %c0_i32_1 = arith.constant 0 : i32
    return %c0_i32, %c0_i32_0 : i32, i32
  }
  func.func @transform_2(%arg0: i32) -> (i32, i32) {
    %c0_i32 = arith.constant 0 : i32
    %c0_i32_0 = arith.constant 0 : i32
    %c0_i32_1 = arith.constant 0 : i32
    return %c0_i32, %c0_i32_0 : i32, i32
  }
  func.func @transform_3(%arg0: i32) -> (i32, i32) {
    %c0_i32 = arith.constant 0 : i32
    %c0_i32_0 = arith.constant 0 : i32
    %c0_i32_1 = arith.constant 0 : i32
    return %c0_i32, %c0_i32_0 : i32, i32
  }
  func.func @transform_4(%arg0: i32) -> (i32, i32) {
    %c0_i32 = arith.constant 0 : i32
    %c0_i32_0 = arith.constant 0 : i32
    %c0_i32_1 = arith.constant 0 : i32
    return %c0_i32, %c0_i32_0 : i32, i32
  }
  func.func @transform_5(%arg0: i32) -> (i32, i32) {
    %c0_i32 = arith.constant 0 : i32
    %c0_i32_0 = arith.constant 0 : i32
    %c0_i32_1 = arith.constant 0 : i32
    return %c0_i32, %c0_i32_0 : i32, i32
  }
  func.func @transform_6(%arg0: i32) -> (i32, i32) {
    %c0_i32 = arith.constant 0 : i32
    %c0_i32_0 = arith.constant 0 : i32
    %c0_i32_1 = arith.constant 0 : i32
    return %c0_i32, %c0_i32_0 : i32, i32
  }
  func.func @transform_7(%arg0: i32) -> (i32, i32) {
    %c0_i32 = arith.constant 0 : i32
    %c0_i32_0 = arith.constant 0 : i32
    %c0_i32_1 = arith.constant 0 : i32
    return %c0_i32, %c0_i32_0 : i32, i32
  }
  func.func @transform_8(%arg0: i32) -> (i32, i32) {
    %c0_i32 = arith.constant 0 : i32
    %c0_i32_0 = arith.constant 0 : i32
    %c0_i32_1 = arith.constant 0 : i32
    return %c0_i32, %c0_i32_0 : i32, i32
  }
  func.func @transform_9(%arg0: i32) -> (i32, i32) {
    %c0_i32 = arith.constant 0 : i32
    %c0_i32_0 = arith.constant 0 : i32
    %c0_i32_1 = arith.constant 0 : i32
    return %c0_i32, %c0_i32_0 : i32, i32
  }
  func.func @transform_10(%arg0: i32) -> (i32, i32) {
    %c0_i32 = arith.constant 0 : i32
    %c0_i32_0 = arith.constant 0 : i32
    %c0_i32_1 = arith.constant 0 : i32
    return %c0_i32, %c0_i32_0 : i32, i32
  }
  func.func @transform_11(%arg0: i32) -> (i32, i32) {
    %c0_i32 = arith.constant 0 : i32
    %c0_i32_0 = arith.constant 0 : i32
    %c0_i32_1 = arith.constant 0 : i32
    return %c0_i32, %c0_i32_0 : i32, i32
  }
  func.func @transform_12(%arg0: i32) -> (i32, i32) {
    %c0_i32 = arith.constant 0 : i32
    %c0_i32_0 = arith.constant 0 : i32
    %c0_i32_1 = arith.constant 0 : i32
    return %c0_i32, %c0_i32_0 : i32, i32
  }
  func.func @transform_13(%arg0: i32) -> (i32, i32) {
    %c0_i32 = arith.constant 0 : i32
    %c0_i32_0 = arith.constant 0 : i32
    %c0_i32_1 = arith.constant 0 : i32
    return %c0_i32, %c0_i32_0 : i32, i32
  }
  func.func @transform_14(%arg0: i32) -> (i32, i32) {
    %c0_i32 = arith.constant 0 : i32
    %c0_i32_0 = arith.constant 0 : i32
    %c0_i32_1 = arith.constant 0 : i32
    return %c0_i32, %c0_i32_0 : i32, i32
  }
  func.func @transform_15(%arg0: i32) -> (i32, i32) {
    %c0_i32 = arith.constant 0 : i32
    %c0_i32_0 = arith.constant 0 : i32
    %c0_i32_1 = arith.constant 0 : i32
    return %c0_i32, %c0_i32_0 : i32, i32
  }
  func.func @transform_16(%arg0: i32) -> (i32, i32) {
    %c0_i32 = arith.constant 0 : i32
    %c0_i32_0 = arith.constant 0 : i32
    %c0_i32_1 = arith.constant 0 : i32
    return %c0_i32, %c0_i32_0 : i32, i32
  }
  func.func @transform_17(%arg0: i32) -> (i32, i32, i32) {
    %c0_i32 = arith.constant 0 : i32
    %c0_i32_0 = arith.constant 0 : i32
    %c0_i32_1 = arith.constant 0 : i32
    return %arg0, %c0_i32, %c0_i32_0 : i32, i32, i32
  }
}

</mosaic_0001>

<llo_original>
// kernel: alpha_zero_forward.1
$region0: #{alpha_zero_forward.1}
  #allocation0 [shape = 'u32[]', space=smem, size = 0x4, offset = 0x4, fixed_abs, tag = 'smem constant byte address 0x4 - core index']
  #allocation1 [shape = 'u32[144,128]{1,0:T(1,128)}', space=vmem, size = 0x12000, scoped, tag = 'internal scratch']
  #allocation2 [shape = 'f32[96,128]{1,0:T(8,128)}', space=vmem, size = 0xc000, scoped, tag = 'scratch operand']
  #allocation3 [shape = 'bf16[64,1152]{1,0:T(16,128)(2,1)}', space=vmem, size = 0x24000, scoped, tag = 'scratch operand']
  #allocation4 [shape = 'f32[1,1]{1,0:T(1,128)S(1)}', space=vmem, size = 0x200, scoped, tag = 'scoped memory for alpha_zero_forward.1']
  %s0 = inlined_call_operand.vmem [shape: bf16[2,64,27], index: 0, kind: input, shape index: {}]
  %s1 = inlined_call_operand.vmem [shape: f32[64,9], index: 1, kind: input, shape index: {}]
  %s2 = inlined_call_operand.vmem [shape: bf16[1,64], index: 2, kind: input, shape index: {}]
  %s3 = inlined_call_operand.vmem [shape: bf16[27,64], index: 3, kind: input, shape index: {}]
  %s4 = inlined_call_operand.vmem [shape: f32[1,64], index: 4, kind: input, shape index: {}]
  %s5 = inlined_call_operand.vmem [shape: bf16[576,128], index: 5, kind: input, shape index: {}]
  %s6 = inlined_call_operand.vmem [shape: f32[1,128], index: 6, kind: input, shape index: {}]
  %s7 = inlined_call_operand.vmem [shape: bf16[1152,128], index: 7, kind: input, shape index: {}]
  %s8 = inlined_call_operand.vmem [shape: f32[1,128], index: 8, kind: input, shape index: {}]
  %s9 = inlined_call_operand.vmem [shape: bf16[128,3], index: 9, kind: input, shape index: {}]
  %s10 = inlined_call_operand.vmem [shape: f32[1,3], index: 10, kind: input, shape index: {}]
  %s11 = inlined_call_operand.vmem [shape: f32[64,128], index: 11, kind: input, shape index: {}]
  %s12 = inlined_call_operand.vmem [shape: f32[64,128], index: 12, kind: input, shape index: {}]
  %s13 = inlined_call_operand.vmem [shape: f32[64,128], index: 13, kind: input, shape index: {}]
  %s14 = inlined_call_operand.vmem [shape: f32[1,128], index: 14, kind: input, shape index: {}]
  %s15 = inlined_call_operand.vmem [shape: f32[1,64], index: 15, kind: input, shape index: {}]
  %s16 = inlined_call_operand.<no memory space> [shape: f32[1,1], index: 16, kind: input, shape index: {}]
  %s17 = inlined_call_operand.vmem [shape: f32[2,1,128], index: 17, kind: output, shape index: {}]
  %s18 = sld [smem:[#allocation0]]
  $region101: #{alpha_zero_forward.1} parent=0
    _
  %s20 = ssub.s32 1, %s18
  %s21 = scalar_select 0, %s20, %s18
  %v22 = vstv %s16
  %23 = vst [vmem:[#allocation4] sm:$0x1] %v22
  loop: start=0, step=1, limit=4
  $region2: #{alpha_zero_forward.1} parent=0 // loop_pre_header
    _
  $region3: #{alpha_zero_forward.1} parent=0 // loop_header
    %s25 = sphi 0, %s29
    %p26 = scmp.ge.s32.totalorder %s25, 4
    %s35 = sphi 0, %s37
    %s38 = sphi 0, %s35
    %s39 = sphi 0, %s38
    %s55 = sphi 0, %s39
    %s59 = sphi 0, %s59
    %s61 = sphi 0, %s59
    %s62 = sphi 0, %s61
    %s76 = sphi 0, %s62
    %s80 = sphi 0, %s80
    %s82 = sphi 0, %s80
    %s83 = sphi 0, %s82
    %s97 = sphi 0, %s83
    %s101 = sphi 0, %s101
    %s103 = sphi 0, %s101
    %s104 = sphi 0, %s103
    %s118 = sphi 0, %s104
    %s122 = sphi 0, %s122
    %s124 = sphi 0, %s122
    %s125 = sphi 0, %s124
    %s139 = sphi 0, %s125
    %s143 = sphi 0, %s143
    %s145 = sphi 0, %s143
    %s146 = sphi 0, %s145
    %s160 = sphi 0, %s146
    %s164 = sphi 0, %s164
    %s166 = sphi 0, %s164
    %s167 = sphi 0, %s166
    %s181 = sphi 0, %s167
    %s185 = sphi 0, %s185
    %s187 = sphi 0, %s185
    %s188 = sphi 0, %s187
    %s202 = sphi 0, %s188
    %s206 = sphi 0, %s206
    %s208 = sphi 0, %s206
    %s209 = sphi 0, %s208
    %s223 = sphi 0, %s209
    %s227 = sphi 0, %s227
    %s229 = sphi 0, %s227
    %s230 = sphi 0, %s229
    %s244 = sphi 0, %s230
    %s248 = sphi 0, %s248
    %s250 = sphi 0, %s248
    %s251 = sphi 0, %s250
    %s265 = sphi 0, %s251
    %s269 = sphi 0, %s269
    %s271 = sphi 0, %s269
    %s272 = sphi 0, %s271
    %s286 = sphi 0, %s272
    %s290 = sphi 0, %s290
    %s292 = sphi 0, %s290
    %s293 = sphi 0, %s292
    %s307 = sphi 0, %s293
    %s311 = sphi 0, %s311
    %s313 = sphi 0, %s311
    %s314 = sphi 0, %s313
    %s328 = sphi 0, %s314
    %s332 = sphi 0, %s332
    %s334 = sphi 0, %s332
    %s335 = sphi 0, %s334
    %s349 = sphi 0, %s335
    %s353 = sphi 0, %s353
    %s355 = sphi 0, %s353
    %s356 = sphi 0, %s355
    %s370 = sphi 0, %s356
    %s374 = sphi 0, %s374
    %s376 = sphi 0, %s374
    %s377 = sphi 0, %s376
    %s391 = sphi 0, %s377
    %s397 = sphi 0, %s399
    %s400 = sphi 0, %s397
    %s401 = sphi 0, %s400
    %s417 = sphi 0, %s401
  $region4: #{alpha_zero_forward.1} parent=0 // loop_header_branch
    %28 = sbr.rel (%p26) target = $region8
  $region5: #{alpha_zero_forward.1} parent=0 // loop_body
    %s30 = ssub.s32 %s25, 1
    %s31 = ssub.s32 %s25, 2
    %s32 = sadd.s32 %s25, 1
    %s33 = ssub.s32 %s25, %s32
    %p34 = scmp.eq.s32.totalorder %s33, 0
    %s36 = sadd.s32 %s35, 1
    %s37 = scalar_select %p34, %s35, %s36
    %p40 = pneg %p34
    %p41 = scmp.eq.s32.totalorder %s25, 1
    %p42 = por %p40, %p41
    %p43 = scmp.ne.s32.totalorder %s35, %s38
    %p44 = scmp.eq.s32.totalorder %s25, 0
    %p45 = por %p43, %p44
    %p46 = scmp.ne.s32.totalorder %s35, %s38
    %p47 = scmp.eq.s32.totalorder %s30, 1
    %p48 = por %p46, %p47
    %p49 = scmp.ne.s32.totalorder %s38, %s39
    %p50 = scmp.eq.s32.totalorder %s30, 0
    %p51 = por %p49, %p50
    %p52 = scmp.ne.s32.totalorder %s38, %s39
    %p53 = scmp.eq.s32.totalorder %s31, 1
    %p54 = por %p52, %p53
    %p56 = scmp.ne.s32.totalorder %s39, %s55
    %p57 = scmp.eq.s32.totalorder %s31, 0
    %p58 = por %p56, %p57
    %s60 = sadd.s32 %s59, 1
    %p63 = scmp.eq.s32.totalorder %s25, 1
    %p64 = scmp.ne.s32.totalorder %s59, %s61
    %p65 = scmp.eq.s32.totalorder %s25, 0
    %p66 = por %p64, %p65
    %p67 = scmp.ne.s32.totalorder %s59, %s61
    %p68 = scmp.eq.s32.totalorder %s30, 1
    %p69 = por %p67, %p68
    %p70 = scmp.ne.s32.totalorder %s61, %s62
    %p71 = scmp.eq.s32.totalorder %s30, 0
    %p72 = por %p70, %p71
    %p73 = scmp.ne.s32.totalorder %s61, %s62
    %p74 = scmp.eq.s32.totalorder %s31, 1
    %p75 = por %p73, %p74
    %p77 = scmp.ne.s32.totalorder %s62, %s76
    %p78 = scmp.eq.s32.totalorder %s31, 0
    %p79 = por %p77, %p78
    %s81 = sadd.s32 %s80, 1
    %p84 = scmp.eq.s32.totalorder %s25, 1
    %p85 = scmp.ne.s32.totalorder %s80, %s82
    %p86 = scmp.eq.s32.totalorder %s25, 0
    %p87 = por %p85, %p86
    %p88 = scmp.ne.s32.totalorder %s80, %s82
    %p89 = scmp.eq.s32.totalorder %s30, 1
    %p90 = por %p88, %p89
    %p91 = scmp.ne.s32.totalorder %s82, %s83
    %p92 = scmp.eq.s32.totalorder %s30, 0
    %p93 = por %p91, %p92
    %p94 = scmp.ne.s32.totalorder %s82, %s83
    %p95 = scmp.eq.s32.totalorder %s31, 1
    %p96 = por %p94, %p95
    %p98 = scmp.ne.s32.totalorder %s83, %s97
    %p99 = scmp.eq.s32.totalorder %s31, 0
    %p100 = por %p98, %p99
    %s102 = sadd.s32 %s101, 1
    %p105 = scmp.eq.s32.totalorder %s25, 1
    %p106 = scmp.ne.s32.totalorder %s101, %s103
    %p107 = scmp.eq.s32.totalorder %s25, 0
    %p108 = por %p106, %p107
    %p109 = scmp.ne.s32.totalorder %s101, %s103
    %p110 = scmp.eq.s32.totalorder %s30, 1
    %p111 = por %p109, %p110
    %p112 = scmp.ne.s32.totalorder %s103, %s104
    %p113 = scmp.eq.s32.totalorder %s30, 0
    %p114 = por %p112, %p113
    %p115 = scmp.ne.s32.totalorder %s103, %s104
    %p116 = scmp.eq.s32.totalorder %s31, 1
    %p117 = por %p115, %p116
    %p119 = scmp.ne.s32.totalorder %s104, %s118
    %p120 = scmp.eq.s32.totalorder %s31, 0
    %p121 = por %p119, %p120
    %s123 = sadd.s32 %s122, 1
    %p126 = scmp.eq.s32.totalorder %s25, 1
    %p127 = scmp.ne.s32.totalorder %s122, %s124
    %p128 = scmp.eq.s32.totalorder %s25, 0
    %p129 = por %p127, %p128
    %p130 = scmp.ne.s32.totalorder %s122, %s124
    %p131 = scmp.eq.s32.totalorder %s30, 1
    %p132 = por %p130, %p131
    %p133 = scmp.ne.s32.totalorder %s124, %s125
    %p134 = scmp.eq.s32.totalorder %s30, 0
    %p135 = por %p133, %p134
    %p136 = scmp.ne.s32.totalorder %s124, %s125
    %p137 = scmp.eq.s32.totalorder %s31, 1
    %p138 = por %p136, %p137
    %p140 = scmp.ne.s32.totalorder %s125, %s139
    %p141 = scmp.eq.s32.totalorder %s31, 0
    %p142 = por %p140, %p141
    %s144 = sadd.s32 %s143, 1
    %p147 = scmp.eq.s32.totalorder %s25, 1
    %p148 = scmp.ne.s32.totalorder %s143, %s145
    %p149 = scmp.eq.s32.totalorder %s25, 0
    %p150 = por %p148, %p149
    %p151 = scmp.ne.s32.totalorder %s143, %s145
    %p152 = scmp.eq.s32.totalorder %s30, 1
    %p153 = por %p151, %p152
    %p154 = scmp.ne.s32.totalorder %s145, %s146
    %p155 = scmp.eq.s32.totalorder %s30, 0
    %p156 = por %p154, %p155
    %p157 = scmp.ne.s32.totalorder %s145, %s146
    %p158 = scmp.eq.s32.totalorder %s31, 1
    %p159 = por %p157, %p158
    %p161 = scmp.ne.s32.totalorder %s146, %s160
    %p162 = scmp.eq.s32.totalorder %s31, 0
    %p163 = por %p161, %p162
    %s165 = sadd.s32 %s164, 1
    %p168 = scmp.eq.s32.totalorder %s25, 1
    %p169 = scmp.ne.s32.totalorder %s164, %s166
    %p170 = scmp.eq.s32.totalorder %s25, 0
    %p171 = por %p169, %p170
    %p172 = scmp.ne.s32.totalorder %s164, %s166
    %p173 = scmp.eq.s32.totalorder %s30, 1
    %p174 = por %p172, %p173
    %p175 = scmp.ne.s32.totalorder %s166, %s167
    %p176 = scmp.eq.s32.totalorder %s30, 0
    %p177 = por %p175, %p176
    %p178 = scmp.ne.s32.totalorder %s166, %s167
    %p179 = scmp.eq.s32.totalorder %s31, 1
    %p180 = por %p178, %p179
    %p182 = scmp.ne.s32.totalorder %s167, %s181
    %p183 = scmp.eq.s32.totalorder %s31, 0
    %p184 = por %p182, %p183
    %s186 = sadd.s32 %s185, 1
    %p189 = scmp.eq.s32.totalorder %s25, 1
    %p190 = scmp.ne.s32.totalorder %s185, %s187
    %p191 = scmp.eq.s32.totalorder %s25, 0
    %p192 = por %p190, %p191
    %p193 = scmp.ne.s32.totalorder %s185, %s187
    %p194 = scmp.eq.s32.totalorder %s30, 1
    %p195 = por %p193, %p194
    %p196 = scmp.ne.s32.totalorder %s187, %s188
    %p197 = scmp.eq.s32.totalorder %s30, 0
    %p198 = por %p196, %p197
    %p199 = scmp.ne.s32.totalorder %s187, %s188
    %p200 = scmp.eq.s32.totalorder %s31, 1
    %p201 = por %p199, %p200
    %p203 = scmp.ne.s32.totalorder %s188, %s202
    %p204 = scmp.eq.s32.totalorder %s31, 0
    %p205 = por %p203, %p204
    %s207 = sadd.s32 %s206, 1
    %p210 = scmp.eq.s32.totalorder %s25, 1
    %p211 = scmp.ne.s32.totalorder %s206, %s208
    %p212 = scmp.eq.s32.totalorder %s25, 0
    %p213 = por %p211, %p212
    %p214 = scmp.ne.s32.totalorder %s206, %s208
    %p215 = scmp.eq.s32.totalorder %s30, 1
    %p216 = por %p214, %p215
    %p217 = scmp.ne.s32.totalorder %s208, %s209
    %p218 = scmp.eq.s32.totalorder %s30, 0
    %p219 = por %p217, %p218
    %p220 = scmp.ne.s32.totalorder %s208, %s209
    %p221 = scmp.eq.s32.totalorder %s31, 1
    %p222 = por %p220, %p221
    %p224 = scmp.ne.s32.totalorder %s209, %s223
    %p225 = scmp.eq.s32.totalorder %s31, 0
    %p226 = por %p224, %p225
    %s228 = sadd.s32 %s227, 1
    %p231 = scmp.eq.s32.totalorder %s25, 1
    %p232 = scmp.ne.s32.totalorder %s227, %s229
    %p233 = scmp.eq.s32.totalorder %s25, 0
    %p234 = por %p232, %p233
    %p235 = scmp.ne.s32.totalorder %s227, %s229
    %p236 = scmp.eq.s32.totalorder %s30, 1
    %p237 = por %p235, %p236
    %p238 = scmp.ne.s32.totalorder %s229, %s230
    %p239 = scmp.eq.s32.totalorder %s30, 0
    %p240 = por %p238, %p239
    %p241 = scmp.ne.s32.totalorder %s229, %s230
    %p242 = scmp.eq.s32.totalorder %s31, 1
    %p243 = por %p241, %p242
    %p245 = scmp.ne.s32.totalorder %s230, %s244
    %p246 = scmp.eq.s32.totalorder %s31, 0
    %p247 = por %p245, %p246
    %s249 = sadd.s32 %s248, 1
    %p252 = scmp.eq.s32.totalorder %s25, 1
    %p253 = scmp.ne.s32.totalorder %s248, %s250
    %p254 = scmp.eq.s32.totalorder %s25, 0
    %p255 = por %p253, %p254
    %p256 = scmp.ne.s32.totalorder %s248, %s250
    %p257 = scmp.eq.s32.totalorder %s30, 1
    %p258 = por %p256, %p257
    %p259 = scmp.ne.s32.totalorder %s250, %s251
    %p260 = scmp.eq.s32.totalorder %s30, 0
    %p261 = por %p259, %p260
    %p262 = scmp.ne.s32.totalorder %s250, %s251
    %p263 = scmp.eq.s32.totalorder %s31, 1
    %p264 = por %p262, %p263
    %p266 = scmp.ne.s32.totalorder %s251, %s265
    %p267 = scmp.eq.s32.totalorder %s31, 0
    %p268 = por %p266, %p267
    %s270 = sadd.s32 %s269, 1
    %p273 = scmp.eq.s32.totalorder %s25, 1
    %p274 = scmp.ne.s32.totalorder %s269, %s271
    %p275 = scmp.eq.s32.totalorder %s25, 0
    %p276 = por %p274, %p275
    %p277 = scmp.ne.s32.totalorder %s269, %s271
    %p278 = scmp.eq.s32.totalorder %s30, 1
    %p279 = por %p277, %p278
    %p280 = scmp.ne.s32.totalorder %s271, %s272
    %p281 = scmp.eq.s32.totalorder %s30, 0
    %p282 = por %p280, %p281
    %p283 = scmp.ne.s32.totalorder %s271, %s272
    %p284 = scmp.eq.s32.totalorder %s31, 1
    %p285 = por %p283, %p284
    %p287 = scmp.ne.s32.totalorder %s272, %s286
    %p288 = scmp.eq.s32.totalorder %s31, 0
    %p289 = por %p287, %p288
    %s291 = sadd.s32 %s290, 1
    %p294 = scmp.eq.s32.totalorder %s25, 1
    %p295 = scmp.ne.s32.totalorder %s290, %s292
    %p296 = scmp.eq.s32.totalorder %s25, 0
    %p297 = por %p295, %p296
    %p298 = scmp.ne.s32.totalorder %s290, %s292
    %p299 = scmp.eq.s32.totalorder %s30, 1
    %p300 = por %p298, %p299
    %p301 = scmp.ne.s32.totalorder %s292, %s293
    %p302 = scmp.eq.s32.totalorder %s30, 0
    %p303 = por %p301, %p302
    %p304 = scmp.ne.s32.totalorder %s292, %s293
    %p305 = scmp.eq.s32.totalorder %s31, 1
    %p306 = por %p304, %p305
    %p308 = scmp.ne.s32.totalorder %s293, %s307
    %p309 = scmp.eq.s32.totalorder %s31, 0
    %p310 = por %p308, %p309
    %s312 = sadd.s32 %s311, 1
    %p315 = scmp.eq.s32.totalorder %s25, 1
    %p316 = scmp.ne.s32.totalorder %s311, %s313
    %p317 = scmp.eq.s32.totalorder %s25, 0
    %p318 = por %p316, %p317
    %p319 = scmp.ne.s32.totalorder %s311, %s313
    %p320 = scmp.eq.s32.totalorder %s30, 1
    %p321 = por %p319, %p320
    %p322 = scmp.ne.s32.totalorder %s313, %s314
    %p323 = scmp.eq.s32.totalorder %s30, 0
    %p324 = por %p322, %p323
    %p325 = scmp.ne.s32.totalorder %s313, %s314
    %p326 = scmp.eq.s32.totalorder %s31, 1
    %p327 = por %p325, %p326
    %p329 = scmp.ne.s32.totalorder %s314, %s328
    %p330 = scmp.eq.s32.totalorder %s31, 0
    %p331 = por %p329, %p330
    %s333 = sadd.s32 %s332, 1
    %p336 = scmp.eq.s32.totalorder %s25, 1
    %p337 = scmp.ne.s32.totalorder %s332, %s334
    %p338 = scmp.eq.s32.totalorder %s25, 0
    %p339 = por %p337, %p338
    %p340 = scmp.ne.s32.totalorder %s332, %s334
    %p341 = scmp.eq.s32.totalorder %s30, 1
    %p342 = por %p340, %p341
    %p343 = scmp.ne.s32.totalorder %s334, %s335
    %p344 = scmp.eq.s32.totalorder %s30, 0
    %p345 = por %p343, %p344
    %p346 = scmp.ne.s32.totalorder %s334, %s335
    %p347 = scmp.eq.s32.totalorder %s31, 1
    %p348 = por %p346, %p347
    %p350 = scmp.ne.s32.totalorder %s335, %s349
    %p351 = scmp.eq.s32.totalorder %s31, 0
    %p352 = por %p350, %p351
    %s354 = sadd.s32 %s353, 1
    %p357 = scmp.eq.s32.totalorder %s25, 1
    %p358 = scmp.ne.s32.totalorder %s353, %s355
    %p359 = scmp.eq.s32.totalorder %s25, 0
    %p360 = por %p358, %p359
    %p361 = scmp.ne.s32.totalorder %s353, %s355
    %p362 = scmp.eq.s32.totalorder %s30, 1
    %p363 = por %p361, %p362
    %p364 = scmp.ne.s32.totalorder %s355, %s356
    %p365 = scmp.eq.s32.totalorder %s30, 0
    %p366 = por %p364, %p365
    %p367 = scmp.ne.s32.totalorder %s355, %s356
    %p368 = scmp.eq.s32.totalorder %s31, 1
    %p369 = por %p367, %p368
    %p371 = scmp.ne.s32.totalorder %s356, %s370
    %p372 = scmp.eq.s32.totalorder %s31, 0
    %p373 = por %p371, %p372
    %s375 = sadd.s32 %s374, 1
    %p378 = scmp.eq.s32.totalorder %s25, 1
    %p379 = scmp.ne.s32.totalorder %s374, %s376
    %p380 = scmp.eq.s32.totalorder %s25, 0
    %p381 = por %p379, %p380
    %p382 = scmp.ne.s32.totalorder %s374, %s376
    %p383 = scmp.eq.s32.totalorder %s30, 1
    %p384 = por %p382, %p383
    %p385 = scmp.ne.s32.totalorder %s376, %s377
    %p386 = scmp.eq.s32.totalorder %s30, 0
    %p387 = por %p385, %p386
    %p388 = scmp.ne.s32.totalorder %s376, %s377
    %p389 = scmp.eq.s32.totalorder %s31, 1
    %p390 = por %p388, %p389
    %p392 = scmp.ne.s32.totalorder %s377, %s391
    %p393 = scmp.eq.s32.totalorder %s31, 0
    %p394 = por %p392, %p393
    %s395 = ssub.s32 %s25, %s32
    %p396 = scmp.eq.s32.totalorder %s395, 0
    %s398 = sadd.s32 %s397, 1
    %s399 = scalar_select %p396, %s397, %s398
    %p402 = pneg %p396
    %p403 = scmp.eq.s32.totalorder %s25, 1
    %p404 = por %p402, %p403
    %p405 = scmp.ne.s32.totalorder %s397, %s400
    %p406 = scmp.eq.s32.totalorder %s25, 0
    %p407 = por %p405, %p406
    %p408 = scmp.ne.s32.totalorder %s397, %s400
    %p409 = scmp.eq.s32.totalorder %s30, 1
    %p410 = por %p408, %p409
    %p411 = scmp.ne.s32.totalorder %s400, %s401
    %p412 = scmp.eq.s32.totalorder %s30, 0
    %p413 = por %p411, %p412
    %p414 = scmp.ne.s32.totalorder %s400, %s401
    %p415 = scmp.eq.s32.totalorder %s31, 1
    %p416 = por %p414, %p415
    %p418 = scmp.ne.s32.totalorder %s401, %s417
    %p419 = scmp.eq.s32.totalorder %s31, 0
    %p420 = por %p418, %p419
    %p421 = scmp.le.s32.totalorder 1, %s25
    %p422 = scmp.lt.s32.totalorder %s25, 3
    %p423 = pnand %p421, %p422
    %p424 = pneg %p423
    // Predicated region
    $region9: #{alpha_zero_forward.1} parent=5 // pred_check
      _
    $region10: #{alpha_zero_forward.1} parent=5 // pred_check_branch
      %426 = sbr.rel (%p423) target = $region12
    $region11: #{alpha_zero_forward.1} parent=5 // pred_region
      %s427 = ssub.s32 %s25, 1
      // Predicated region
      $region13: #{alpha_zero_forward.1} parent=11 // pred_check
        %p428 = pneg %p72
      $region14: #{alpha_zero_forward.1} parent=11 // pred_check_branch
        %430 = sbr.rel (%p428) target = $region16
      $region15: #{alpha_zero_forward.1} parent=11 // pred_region
        _
      $region16: #{alpha_zero_forward.1} parent=11 // pred_fallthru
        _
      // Predicated region
      $region17: #{alpha_zero_forward.1} parent=11 // pred_check
        %p431 = pneg %p93
      $region18: #{alpha_zero_forward.1} parent=11 // pred_check_branch
        %433 = sbr.rel (%p431) target = $region20
      $region19: #{alpha_zero_forward.1} parent=11 // pred_region
        _
      $region20: #{alpha_zero_forward.1} parent=11 // pred_fallthru
        _
      // Predicated region
      $region21: #{alpha_zero_forward.1} parent=11 // pred_check
        %p434 = pneg %p114
      $region22: #{alpha_zero_forward.1} parent=11 // pred_check_branch
        %436 = sbr.rel (%p434) target = $region24
      $region23: #{alpha_zero_forward.1} parent=11 // pred_region
        _
      $region24: #{alpha_zero_forward.1} parent=11 // pred_fallthru
        _
      // Predicated region
      $region25: #{alpha_zero_forward.1} parent=11 // pred_check
        %p437 = pneg %p135
      $region26: #{alpha_zero_forward.1} parent=11 // pred_check_branch
        %439 = sbr.rel (%p437) target = $region28
      $region27: #{alpha_zero_forward.1} parent=11 // pred_region
        _
      $region28: #{alpha_zero_forward.1} parent=11 // pred_fallthru
        _
      // Predicated region
      $region29: #{alpha_zero_forward.1} parent=11 // pred_check
        %p440 = pneg %p156
      $region30: #{alpha_zero_forward.1} parent=11 // pred_check_branch
        %442 = sbr.rel (%p440) target = $region32
      $region31: #{alpha_zero_forward.1} parent=11 // pred_region
        _
      $region32: #{alpha_zero_forward.1} parent=11 // pred_fallthru
        _
      // Predicated region
      $region33: #{alpha_zero_forward.1} parent=11 // pred_check
        %p443 = pneg %p177
      $region34: #{alpha_zero_forward.1} parent=11 // pred_check_branch
        %445 = sbr.rel (%p443) target = $region36
      $region35: #{alpha_zero_forward.1} parent=11 // pred_region
        _
      $region36: #{alpha_zero_forward.1} parent=11 // pred_fallthru
        _
      // Predicated region
      $region37: #{alpha_zero_forward.1} parent=11 // pred_check
        %p446 = pneg %p198
      $region38: #{alpha_zero_forward.1} parent=11 // pred_check_branch
        %448 = sbr.rel (%p446) target = $region40
      $region39: #{alpha_zero_forward.1} parent=11 // pred_region
        _
      $region40: #{alpha_zero_forward.1} parent=11 // pred_fallthru
        _
      // Predicated region
      $region41: #{alpha_zero_forward.1} parent=11 // pred_check
        %p449 = pneg %p219
      $region42: #{alpha_zero_forward.1} parent=11 // pred_check_branch
        %451 = sbr.rel (%p449) target = $region44
      $region43: #{alpha_zero_forward.1} parent=11 // pred_region
        _
      $region44: #{alpha_zero_forward.1} parent=11 // pred_fallthru
        _
      // Predicated region
      $region45: #{alpha_zero_forward.1} parent=11 // pred_check
        %p452 = pneg %p240
      $region46: #{alpha_zero_forward.1} parent=11 // pred_check_branch
        %454 = sbr.rel (%p452) target = $region48
      $region47: #{alpha_zero_forward.1} parent=11 // pred_region
        _
      $region48: #{alpha_zero_forward.1} parent=11 // pred_fallthru
        _
      // Predicated region
      $region49: #{alpha_zero_forward.1} parent=11 // pred_check
        %p455 = pneg %p261
      $region50: #{alpha_zero_forward.1} parent=11 // pred_check_branch
        %457 = sbr.rel (%p455) target = $region52
      $region51: #{alpha_zero_forward.1} parent=11 // pred_region
        _
      $region52: #{alpha_zero_forward.1} parent=11 // pred_fallthru
        _
      // Predicated region
      $region53: #{alpha_zero_forward.1} parent=11 // pred_check
        %p458 = pneg %p282
      $region54: #{alpha_zero_forward.1} parent=11 // pred_check_branch
        %460 = sbr.rel (%p458) target = $region56
      $region55: #{alpha_zero_forward.1} parent=11 // pred_region
        _
      $region56: #{alpha_zero_forward.1} parent=11 // pred_fallthru
        _
      // Predicated region
      $region57: #{alpha_zero_forward.1} parent=11 // pred_check
        %p461 = pneg %p303
      $region58: #{alpha_zero_forward.1} parent=11 // pred_check_branch
        %463 = sbr.rel (%p461) target = $region60
      $region59: #{alpha_zero_forward.1} parent=11 // pred_region
        _
      $region60: #{alpha_zero_forward.1} parent=11 // pred_fallthru
        _
      // Predicated region
      $region61: #{alpha_zero_forward.1} parent=11 // pred_check
        %p464 = pneg %p324
      $region62: #{alpha_zero_forward.1} parent=11 // pred_check_branch
        %466 = sbr.rel (%p464) target = $region64
      $region63: #{alpha_zero_forward.1} parent=11 // pred_region
        _
      $region64: #{alpha_zero_forward.1} parent=11 // pred_fallthru
        _
      // Predicated region
      $region65: #{alpha_zero_forward.1} parent=11 // pred_check
        %p467 = pneg %p345
      $region66: #{alpha_zero_forward.1} parent=11 // pred_check_branch
        %469 = sbr.rel (%p467) target = $region68
      $region67: #{alpha_zero_forward.1} parent=11 // pred_region
        _
      $region68: #{alpha_zero_forward.1} parent=11 // pred_fallthru
        _
      // Predicated region
      $region69: #{alpha_zero_forward.1} parent=11 // pred_check
        %p470 = pneg %p366
      $region70: #{alpha_zero_forward.1} parent=11 // pred_check_branch
        %472 = sbr.rel (%p470) target = $region72
      $region71: #{alpha_zero_forward.1} parent=11 // pred_region
        _
      $region72: #{alpha_zero_forward.1} parent=11 // pred_fallthru
        _
      // Predicated region
      $region73: #{alpha_zero_forward.1} parent=11 // pred_check
        %p473 = pneg %p387
      $region74: #{alpha_zero_forward.1} parent=11 // pred_check_branch
        %475 = sbr.rel (%p473) target = $region76
      $region75: #{alpha_zero_forward.1} parent=11 // pred_region
        _
      $region76: #{alpha_zero_forward.1} parent=11 // pred_fallthru
        _
    $region12: #{alpha_zero_forward.1} parent=5 // pred_fallthru
      _
    %p476 = scmp.lt.s32.totalorder %s25, 2
    // Predicated region
    $region77: #{alpha_zero_forward.1} parent=5 // pred_check
      %p477 = pneg %p476
    $region78: #{alpha_zero_forward.1} parent=5 // pred_check_branch
      %479 = sbr.rel (%p477) target = $region80
    $region79: #{alpha_zero_forward.1} parent=5 // pred_region
      // Predicated region
      $region81: #{alpha_zero_forward.1} parent=79 // pred_check
        %p480 = pneg %p45
      $region82: #{alpha_zero_forward.1} parent=79 // pred_check_branch
        %482 = sbr.rel (%p480) target = $region84
      $region83: #{alpha_zero_forward.1} parent=79 // pred_region
        %p483 = scmp.lt.s32.totalorder %s25, 1
        %s484 = scalar_select %p483, %s25, 1
        %s485 = smul.addr %s484, 8
        %s486 = smul.addr %s485, 4
        %s487 = scalar_lea.vmem %s0, %s486
      $region84: #{alpha_zero_forward.1} parent=79 // pred_fallthru
        _
    $region80: #{alpha_zero_forward.1} parent=5 // pred_fallthru
      _
    %p488 = scmp.le.s32.totalorder 1, %s25
    %p489 = scmp.lt.s32.totalorder %s25, 3
    %p490 = pnand %p488, %p489
    %p491 = pneg %p490
    // Predicated region
    $region85: #{alpha_zero_forward.1} parent=5 // pred_check
      _
    $region86: #{alpha_zero_forward.1} parent=5 // pred_check_branch
      %493 = sbr.rel (%p490) target = $region88
    $region87: #{alpha_zero_forward.1} parent=5 // pred_region
      %s494 = ssub.s32 %s25, 1
      %p495 = scmp.lt.s32.totalorder %s30, 1
      %s496 = scalar_select %p495, %s30, 1
      %s497 = smul.addr %s496, 8
      %s498 = smul.addr %s497, 4
      %s499 = scalar_lea.vmem %s0, %s498
      %p500 = pneg %p51
      %p501 = pneg %p48
      %p502 = pneg %p72
      %p503 = pneg %p69
      %p504 = pneg %p93
      %p505 = pneg %p90
      %p506 = pneg %p114
      %p507 = pneg %p111
      %p508 = pneg %p135
      %p509 = pneg %p132
      %p510 = pneg %p156
      %p511 = pneg %p153
      %p512 = pneg %p177
      %p513 = pneg %p174
      %p514 = pneg %p198
      %p515 = pneg %p195
      %p516 = pneg %p219
      %p517 = pneg %p216
      %p518 = pneg %p240
      %p519 = pneg %p237
      %p520 = pneg %p261
      %p521 = pneg %p258
      %p522 = pneg %p282
      %p523 = pneg %p279
      %p524 = pneg %p303
      %p525 = pneg %p300
      %p526 = pneg %p324
      %p527 = pneg %p321
      %p528 = pneg %p345
      %p529 = pneg %p342
      %p530 = pneg %p366
      %p531 = pneg %p363
      %p532 = pneg %p387
      %p533 = pneg %p384
      %p534 = pneg %p413
      %p535 = pneg %p410
      %p536 = scmp.lt.s32.totalorder %s30, 1
      %s537 = scalar_select %p536, %s30, 1
      %s538 = scalar_lea.vmem %s17, %s537
      %p539 = scmp.lt.s32.totalorder %s30, 1
      %s540 = scalar_select %p539, %s30, 1
      %s541 = smul.addr %s540, 8
      %s542 = smul.addr %s541, 4
      %s543 = scalar_lea.vmem %s0, %s542
      %p544 = scmp.lt.s32.totalorder %s30, 1
      %s545 = scalar_select %p544, %s30, 1
      %s546 = scalar_lea.vmem %s17, %s545
      %548 = vst [vmem:[#allocation2] sm:$0xff] 0.0
      %549 = vst [vmem:[#allocation2 + $0x8] sm:$0xff] 0.0
      %550 = vst [vmem:[#allocation2 + $0x50] sm:$0xff] 0.0
      %551 = vst [vmem:[#allocation2 + $0x58] sm:$0xff] 0.0
      %v552 = vld [vmem:[%s543] sm:$0xf]
      %v553 = vld [vmem:[%s543 + $0x4] sm:$0xf]
      %v554 = vld [vmem:[%s543 + $0x8] sm:$0xf]
      %v555 = vld [vmem:[%s543 + $0xc] sm:$0xf]
      %v556 = vld [vmem:[%s543 + $0x10] sm:$0xf]
      %v557 = vld [vmem:[%s543 + $0x14] sm:$0xf]
      %v558 = vld [vmem:[%s543 + $0x18] sm:$0xf]
      %v559 = vld [vmem:[%s543 + $0x1c] sm:$0xf]
      %v560 = vld [vmem:[%s3] sm:$0xf]
      %v561 = vld [vmem:[%s3 + $0x4] sm:$0xf]
      %v562 = vld [vmem:[%s3 + $0x8] sm:$0xf]
      %v563 = vld [vmem:[%s3 + $0xc] sm:$0x3]
      %v564 = vld [vmem:[%s4] sm:$0x1]
      %v566 = vlaneseq
      %v567 = vshrl.u32 %v566, 7
      %v568 = vsub.s32 0, %v567
      %v569 = vrot.slane %v564, %v568
      %v579 = vunpack.c.l.b16 %v552
      %v580 = vunpack.c.l.b16 %v553
      %v581 = vunpack.c.l.b16 %v554
      %v582 = vunpack.c.l.b16 %v555
      %v583 = vunpack.c.l.b16 %v556
      %v584 = vunpack.c.l.b16 %v557
      %v585 = vunpack.c.l.b16 %v558
      %v586 = vunpack.c.l.b16 %v559
      %v587 = vpack.c.b16 %v580, %v579
      %v588 = vpack.c.b16 %v582, %v581
      %v589 = vpack.c.b16 %v584, %v583
      %v590 = vpack.c.b16 %v586, %v585
      %v595 = vunpack.c.l.b16 %v560
      %v596 = vunpack.c.l.b16 %v561
      %v597 = vunpack.c.l.b16 %v562
      %v598 = vunpack.c.l.b16 %v563
      %v599 = vpack.c.b16 %v596, %v595
      %v600 = vpack.c.b16 %v598, %v597
      %vm602 = vcmask 220160
      %v604 = vsel %vm602, %v587, 0
      %v607 = vsel %vm602, %v588, 0
      %v610 = vsel %vm602, %v589, 0
      %v613 = vsel %vm602, %v590, 0
      %vm615 = vcmask 1044480
      %vm616 = vcmask 1045504
      %v617 = vsel %vm615, 4294967295, 65535
      %v618 = vsel %vm616, %v617, 0
      %v620 = vand.u32 %v600, %v618
      %622 = vmatprep.subr.bf16.mxu0 0
      %623 = vmatpush1.bf16.msra.mxu0 %v599
      %624 = vmatprep.subr.bf16.mxu0 0
      %625 = vmatpush1.bf16.msra.mxu0 %v620
      %626 = vmatprep.subr.bf16.mxu0 0
      %627 = vmatpush1.bf16.msra.mxu0 0
      %628 = vmatprep.subr.bf16.mxu0 0
      %629 = vmatpush1.bf16.msra.mxu0 0
      %630 = vmatprep.subr.bf16.mxu0 0
      %631 = vmatpush1.bf16.msra.mxu0 0
      %632 = vmatprep.subr.bf16.mxu0 0
      %633 = vmatpush1.bf16.msra.mxu0 0
      %634 = vmatprep.subr.bf16.mxu0 0
      %635 = vmatpush1.bf16.msra.mxu0 0
      %636 = vmatprep.subr.bf16.mxu0 0
      %637 = vmatpush1.bf16.msra.mxu0 0
      %638 = vmatprep.subr.bf16.mxu0 0
      %639 = vmatpush1.bf16.msra.mxu0 0
      %640 = vmatprep.subr.bf16.mxu0 0
      %641 = vmatpush1.bf16.msra.mxu0 0
      %642 = vmatprep.subr.bf16.mxu0 0
      %643 = vmatpush1.bf16.msra.mxu0 0
      %644 = vmatprep.subr.bf16.mxu0 0
      %645 = vmatpush1.bf16.msra.mxu0 0
      %646 = vmatprep.subr.bf16.mxu0 0
      %647 = vmatpush1.bf16.msra.mxu0 0
      %648 = vmatprep.subr.bf16.mxu0 0
      %649 = vmatpush1.bf16.msra.mxu0 0
      %650 = vmatprep.subr.bf16.mxu0 0
      %651 = vmatpush1.bf16.msra.mxu0 0
      %652 = vmatprep.subr.bf16.mxu0 0
      %653 = vmatpush1.bf16.msra.mxu0 0
      %654 = vmatprep.mubr.bf16.mxu0 0
      %655 = vmatmul.mubr.bf16.gmra.mrb[0].mxu0 %v604
      %v656 = vpop.f32.mrb[0].mxu0
      %v657 = vadd.f32 %v569, %v656
      %v658 = vpop.f32.mrb[0].mxu0
      %v659 = vpop.f32.mrb[0].mxu0
      %v660 = vadd.f32 %v569, %v659
      %v661 = vpop.f32.mrb[0].mxu0
      %662 = vmatprep.mubr.bf16.mxu0 0
      %663 = vmatmul.mubr.bf16.gmra.mrb[0].mxu0 %v607
      %v664 = vpop.f32.mrb[0].mxu0
      %v665 = vadd.f32 %v569, %v664
      %v666 = vpop.f32.mrb[0].mxu0
      %v667 = vpop.f32.mrb[0].mxu0
      %v668 = vadd.f32 %v569, %v667
      %v669 = vpop.f32.mrb[0].mxu0
      %670 = vmatprep.mubr.bf16.mxu0 0
      %671 = vmatmul.mubr.bf16.gmra.mrb[0].mxu0 %v610
      %v672 = vpop.f32.mrb[0].mxu0
      %v673 = vadd.f32 %v569, %v672
      %v674 = vpop.f32.mrb[0].mxu0
      %v675 = vpop.f32.mrb[0].mxu0
      %v676 = vadd.f32 %v569, %v675
      %v677 = vpop.f32.mrb[0].mxu0
      %678 = vmatprep.mubr.bf16.mxu0 0
      %679 = vmatmul.mubr.bf16.gmra.mrb[0].mxu0 %v613
      %v680 = vpop.f32.mrb[0].mxu0
      %v681 = vadd.f32 %v569, %v680
      %v682 = vpop.f32.mrb[0].mxu0
      %v683 = vpop.f32.mrb[0].mxu0
      %v684 = vadd.f32 %v569, %v683
      %v685 = vpop.f32.mrb[0].mxu0
      %686 = vdwg.mxu0
      %v687 = vmax.f32 %v657, 0.0
      %v688 = vmax.f32 %v660, 0.0
      %v689 = vmax.f32 %v665, 0.0
      %v690 = vmax.f32 %v668, 0.0
      %v691 = vmax.f32 %v673, 0.0
      %v692 = vmax.f32 %v676, 0.0
      %v693 = vmax.f32 %v681, 0.0
      %v694 = vmax.f32 %v684, 0.0
      %vm695 = vcmask 523264
      %696 = vst.msk [vmem:[#allocation2 + $0x10] sm:$0xff] %vm695, %v687
      %697 = vst.msk [vmem:[#allocation2 + $0x18] sm:$0xff] %vm695, %v688
      %698 = vst.msk [vmem:[#allocation2 + $0x20] sm:$0xff] %vm695, %v689
      %699 = vst.msk [vmem:[#allocation2 + $0x28] sm:$0xff] %vm695, %v690
      %700 = vst.msk [vmem:[#allocation2 + $0x30] sm:$0xff] %vm695, %v691
      %701 = vst.msk [vmem:[#allocation2 + $0x38] sm:$0xff] %vm695, %v692
      %702 = vst.msk [vmem:[#allocation2 + $0x40] sm:$0xff] %vm695, %v693
      %703 = vst.msk [vmem:[#allocation2 + $0x48] sm:$0xff] %vm695, %v694
      %v704 = vld [vmem:[#allocation2 + $0x7] sm:$0xff]
      %v705 = vld [vmem:[#allocation2 + $0xf] sm:$0xff]
      %v706 = vld [vmem:[#allocation2 + $0x17] sm:$0xff]
      %v707 = vld [vmem:[#allocation2 + $0x1f] sm:$0xff]
      %v708 = vld [vmem:[#allocation2 + $0x27] sm:$0xff]
      %v709 = vld [vmem:[#allocation2 + $0x2f] sm:$0xff]
      %v710 = vld [vmem:[#allocation2 + $0x37] sm:$0xff]
      %v711 = vld [vmem:[#allocation2 + $0x3f] sm:$0xff]
      %v712 = vld [vmem:[%s1] sm:$0xff]
      %v713 = vld [vmem:[%s1 + $0x8] sm:$0xff]
      %v714 = vld [vmem:[%s1 + $0x10] sm:$0xff]
      %v715 = vld [vmem:[%s1 + $0x18] sm:$0xff]
      %v716 = vld [vmem:[%s1 + $0x20] sm:$0xff]
      %v717 = vld [vmem:[%s1 + $0x28] sm:$0xff]
      %v718 = vld [vmem:[%s1 + $0x30] sm:$0xff]
      %v719 = vld [vmem:[%s1 + $0x38] sm:$0xff]
      %721 = vset.pattern.permute.xlu0 0
      %722 = vperm.xlu0 %721, %v712
      %v723 = vpop.permute.xlu0 %722
      %726 = vset.pattern.permute.xlu0 0
      %727 = vperm.xlu0 %726, %v713
      %v728 = vpop.permute.xlu0 %727
      %731 = vset.pattern.permute.xlu0 0
      %732 = vperm.xlu0 %731, %v714
      %v733 = vpop.permute.xlu0 %732
      %736 = vset.pattern.permute.xlu0 0
      %737 = vperm.xlu0 %736, %v715
      %v738 = vpop.permute.xlu0 %737
      %741 = vset.pattern.permute.xlu0 0
      %742 = vperm.xlu0 %741, %v716
      %v743 = vpop.permute.xlu0 %742
      %746 = vset.pattern.permute.xlu0 0
      %747 = vperm.xlu0 %746, %v717
      %v748 = vpop.permute.xlu0 %747
      %751 = vset.pattern.permute.xlu0 0
      %752 = vperm.xlu0 %751, %v718
      %v753 = vpop.permute.xlu0 %752
      %756 = vset.pattern.permute.xlu0 0
      %757 = vperm.xlu0 %756, %v719
      %v758 = vpop.permute.xlu0 %757
      %v760 = vmul.f32 %v704, %v723
      %v761 = vmul.f32 %v705, %v728
      %v762 = vmul.f32 %v706, %v733
      %v763 = vmul.f32 %v707, %v738
      %v764 = vmul.f32 %v708, %v743
      %v765 = vmul.f32 %v709, %v748
      %v766 = vmul.f32 %v710, %v753
      %v767 = vmul.f32 %v711, %v758
      %v768 = vpack.c.bf16 %v761, %v760
      %v769 = vpack.c.bf16 %v763, %v762
      %v770 = vpack.c.bf16 %v765, %v764
      %v771 = vpack.c.bf16 %v767, %v766
      %772 = vst.msk [vmem:[#allocation3] sm:$0xff] %vm695, %v768
      %773 = vst.msk [vmem:[#allocation3 + $0x48] sm:$0xff] %vm695, %v769
      %774 = vst.msk [vmem:[#allocation3 + $0x90] sm:$0xff] %vm695, %v770
      %775 = vst.msk [vmem:[#allocation3 + $0xd8] sm:$0xff] %vm695, %v771
      %v776 = vld [vmem:[#allocation2 + $0x8] sm:$0xff]
      %v777 = vld [vmem:[#allocation2 + $0x10] sm:$0xff]
      %v778 = vld [vmem:[#allocation2 + $0x18] sm:$0xff]
      %v779 = vld [vmem:[#allocation2 + $0x20] sm:$0xff]
      %v780 = vld [vmem:[#allocation2 + $0x28] sm:$0xff]
      %v781 = vld [vmem:[#allocation2 + $0x30] sm:$0xff]
      %v782 = vld [vmem:[#allocation2 + $0x38] sm:$0xff]
      %v783 = vld [vmem:[#allocation2 + $0x40] sm:$0xff]
      %v784 = vld [vmem:[%s1] sm:$0xff]
      %v785 = vld [vmem:[%s1 + $0x8] sm:$0xff]
      %v786 = vld [vmem:[%s1 + $0x10] sm:$0xff]
      %v787 = vld [vmem:[%s1 + $0x18] sm:$0xff]
      %v788 = vld [vmem:[%s1 + $0x20] sm:$0xff]
      %v789 = vld [vmem:[%s1 + $0x28] sm:$0xff]
      %v790 = vld [vmem:[%s1 + $0x30] sm:$0xff]
      %v791 = vld [vmem:[%s1 + $0x38] sm:$0xff]
      %793 = vset.pattern.permute.xlu0 1
      %794 = vperm.xlu0 %793, %v784
      %v795 = vpop.permute.xlu0 %794
      %798 = vset.pattern.permute.xlu0 1
      %799 = vperm.xlu0 %798, %v785
      %v800 = vpop.permute.xlu0 %799
      %803 = vset.pattern.permute.xlu0 1
      %804 = vperm.xlu0 %803, %v786
      %v805 = vpop.permute.xlu0 %804
      %808 = vset.pattern.permute.xlu0 1
      %809 = vperm.xlu0 %808, %v787
      %v810 = vpop.permute.xlu0 %809
      %813 = vset.pattern.permute.xlu0 1
      %814 = vperm.xlu0 %813, %v788
      %v815 = vpop.permute.xlu0 %814
      %818 = vset.pattern.permute.xlu0 1
      %819 = vperm.xlu0 %818, %v789
      %v820 = vpop.permute.xlu0 %819
      %823 = vset.pattern.permute.xlu0 1
      %824 = vperm.xlu0 %823, %v790
      %v825 = vpop.permute.xlu0 %824
      %828 = vset.pattern.permute.xlu0 1
      %829 = vperm.xlu0 %828, %v791
      %v830 = vpop.permute.xlu0 %829
      %v832 = vmul.f32 %v776, %v795
      %v833 = vmul.f32 %v777, %v800
      %v834 = vmul.f32 %v778, %v805
      %v835 = vmul.f32 %v779, %v810
      %v836 = vmul.f32 %v780, %v815
      %v837 = vmul.f32 %v781, %v820
      %v838 = vmul.f32 %v782, %v825
      %v839 = vmul.f32 %v783, %v830
      %v840 = vpack.c.bf16 %v833, %v832
      %v841 = vpack.c.bf16 %v835, %v834
      %v842 = vpack.c.bf16 %v837, %v836
      %v843 = vpack.c.bf16 %v839, %v838
      %848 = vrot.lane.b32.xlu0 %v840, 64
      %v849 = vpop.permute.xlu0 %848
      %850 = vrot.lane.b32.xlu0 %v841, 64
      %v851 = vpop.permute.xlu0 %850
      %852 = vrot.lane.b32.xlu0 %v842, 64
      %v853 = vpop.permute.xlu0 %852
      %854 = vrot.lane.b32.xlu0 %v843, 64
      %v855 = vpop.permute.xlu0 %854
      %vm860 = vcmask 1048064
      %861 = vst.msk [vmem:[#allocation3] sm:$0xff] %vm860, %v849
      %862 = vst.msk [vmem:[#allocation3 + $0x48] sm:$0xff] %vm860, %v851
      %863 = vst.msk [vmem:[#allocation3 + $0x90] sm:$0xff] %vm860, %v853
      %864 = vst.msk [vmem:[#allocation3 + $0xd8] sm:$0xff] %vm860, %v855
      %v865 = vld [vmem:[#allocation2 + $0x9] sm:$0xff]
      %v866 = vld [vmem:[#allocation2 + $0x11] sm:$0xff]
      %v867 = vld [vmem:[#allocation2 + $0x19] sm:$0xff]
      %v868 = vld [vmem:[#allocation2 + $0x21] sm:$0xff]
      %v869 = vld [vmem:[#allocation2 + $0x29] sm:$0xff]
      %v870 = vld [vmem:[#allocation2 + $0x31] sm:$0xff]
      %v871 = vld [vmem:[#allocation2 + $0x39] sm:$0xff]
      %v872 = vld [vmem:[#allocation2 + $0x41] sm:$0xff]
      %v873 = vld [vmem:[%s1] sm:$0xff]
      %v874 = vld [vmem:[%s1 + $0x8] sm:$0xff]
      %v875 = vld [vmem:[%s1 + $0x10] sm:$0xff]
      %v876 = vld [vmem:[%s1 + $0x18] sm:$0xff]
      %v877 = vld [vmem:[%s1 + $0x20] sm:$0xff]
      %v878 = vld [vmem:[%s1 + $0x28] sm:$0xff]
      %v879 = vld [vmem:[%s1 + $0x30] sm:$0xff]
      %v880 = vld [vmem:[%s1 + $0x38] sm:$0xff]
      %882 = vset.pattern.permute.xlu0 2
      %883 = vperm.xlu0 %882, %v873
      %v884 = vpop.permute.xlu0 %883
      %887 = vset.pattern.permute.xlu0 2
      %888 = vperm.xlu0 %887, %v874
      %v889 = vpop.permute.xlu0 %888
      %892 = vset.pattern.permute.xlu0 2
      %893 = vperm.xlu0 %892, %v875
      %v894 = vpop.permute.xlu0 %893
      %897 = vset.pattern.permute.xlu0 2
      %898 = vperm.xlu0 %897, %v876
      %v899 = vpop.permute.xlu0 %898
      %902 = vset.pattern.permute.xlu0 2
      %903 = vperm.xlu0 %902, %v877
      %v904 = vpop.permute.xlu0 %903
      %907 = vset.pattern.permute.xlu0 2
      %908 = vperm.xlu0 %907, %v878
      %v909 = vpop.permute.xlu0 %908
      %912 = vset.pattern.permute.xlu0 2
      %913 = vperm.xlu0 %912, %v879
      %v914 = vpop.permute.xlu0 %913
      %917 = vset.pattern.permute.xlu0 2
      %918 = vperm.xlu0 %917, %v880
      %v919 = vpop.permute.xlu0 %918
      %v921 = vmul.f32 %v865, %v884
      %v922 = vmul.f32 %v866, %v889
      %v923 = vmul.f32 %v867, %v894
      %v924 = vmul.f32 %v868, %v899
      %v925 = vmul.f32 %v869, %v904
      %v926 = vmul.f32 %v870, %v909
      %v927 = vmul.f32 %v871, %v914
      %v928 = vmul.f32 %v872, %v919
      %v929 = vpack.c.bf16 %v922, %v921
      %v930 = vpack.c.bf16 %v924, %v923
      %v931 = vpack.c.bf16 %v926, %v925
      %v932 = vpack.c.bf16 %v928, %v927
      %933 = vst.msk [vmem:[#allocation3 + $0x8] sm:$0xff] %vm695, %v929
      %934 = vst.msk [vmem:[#allocation3 + $0x50] sm:$0xff] %vm695, %v930
      %935 = vst.msk [vmem:[#allocation3 + $0x98] sm:$0xff] %vm695, %v931
      %936 = vst.msk [vmem:[#allocation3 + $0xe0] sm:$0xff] %vm695, %v932
      %v937 = vld [vmem:[#allocation2 + $0xf] sm:$0xff]
      %v938 = vld [vmem:[#allocation2 + $0x17] sm:$0xff]
      %v939 = vld [vmem:[#allocation2 + $0x1f] sm:$0xff]
      %v940 = vld [vmem:[#allocation2 + $0x27] sm:$0xff]
      %v941 = vld [vmem:[#allocation2 + $0x2f] sm:$0xff]
      %v942 = vld [vmem:[#allocation2 + $0x37] sm:$0xff]
      %v943 = vld [vmem:[#allocation2 + $0x3f] sm:$0xff]
      %v944 = vld [vmem:[#allocation2 + $0x47] sm:$0xff]
      %v945 = vld [vmem:[%s1] sm:$0xff]
      %v946 = vld [vmem:[%s1 + $0x8] sm:$0xff]
      %v947 = vld [vmem:[%s1 + $0x10] sm:$0xff]
      %v948 = vld [vmem:[%s1 + $0x18] sm:$0xff]
      %v949 = vld [vmem:[%s1 + $0x20] sm:$0xff]
      %v950 = vld [vmem:[%s1 + $0x28] sm:$0xff]
      %v951 = vld [vmem:[%s1 + $0x30] sm:$0xff]
      %v952 = vld [vmem:[%s1 + $0x38] sm:$0xff]
      %954 = vset.pattern.permute.xlu0 3
      %955 = vperm.xlu0 %954, %v945
      %v956 = vpop.permute.xlu0 %955
      %959 = vset.pattern.permute.xlu0 3
      %960 = vperm.xlu0 %959, %v946
      %v961 = vpop.permute.xlu0 %960
      %964 = vset.pattern.permute.xlu0 3
      %965 = vperm.xlu0 %964, %v947
      %v966 = vpop.permute.xlu0 %965
      %969 = vset.pattern.permute.xlu0 3
      %970 = vperm.xlu0 %969, %v948
      %v971 = vpop.permute.xlu0 %970
      %974 = vset.pattern.permute.xlu0 3
      %975 = vperm.xlu0 %974, %v949
      %v976 = vpop.permute.xlu0 %975
      %979 = vset.pattern.permute.xlu0 3
      %980 = vperm.xlu0 %979, %v950
      %v981 = vpop.permute.xlu0 %980
      %984 = vset.pattern.permute.xlu0 3
      %985 = vperm.xlu0 %984, %v951
      %v986 = vpop.permute.xlu0 %985
      %989 = vset.pattern.permute.xlu0 3
      %990 = vperm.xlu0 %989, %v952
      %v991 = vpop.permute.xlu0 %990
      %v993 = vmul.f32 %v937, %v956
      %v994 = vmul.f32 %v938, %v961
      %v995 = vmul.f32 %v939, %v966
      %v996 = vmul.f32 %v940, %v971
      %v997 = vmul.f32 %v941, %v976
      %v998 = vmul.f32 %v942, %v981
      %v999 = vmul.f32 %v943, %v986
      %v1000 = vmul.f32 %v944, %v991
      %v1001 = vpack.c.bf16 %v994, %v993
      %v1002 = vpack.c.bf16 %v996, %v995
      %v1003 = vpack.c.bf16 %v998, %v997
      %v1004 = vpack.c.bf16 %v1000, %v999
      %1009 = vrot.lane.b32.xlu0 %v1001, 64
      %v1010 = vpop.permute.xlu0 %1009
      %1011 = vrot.lane.b32.xlu0 %v1002, 64
      %v1012 = vpop.permute.xlu0 %1011
      %1013 = vrot.lane.b32.xlu0 %v1003, 64
      %v1014 = vpop.permute.xlu0 %1013
      %1015 = vrot.lane.b32.xlu0 %v1004, 64
      %v1016 = vpop.permute.xlu0 %1015
      %1021 = vst.msk [vmem:[#allocation3 + $0x8] sm:$0xff] %vm860, %v1010
      %1022 = vst.msk [vmem:[#allocation3 + $0x50] sm:$0xff] %vm860, %v1012
      %1023 = vst.msk [vmem:[#allocation3 + $0x98] sm:$0xff] %vm860, %v1014
      %1024 = vst.msk [vmem:[#allocation3 + $0xe0] sm:$0xff] %vm860, %v1016
      %v1025 = vld [vmem:[#allocation2 + $0x10] sm:$0xff]
      %v1026 = vld [vmem:[#allocation2 + $0x18] sm:$0xff]
      %v1027 = vld [vmem:[#allocation2 + $0x20] sm:$0xff]
      %v1028 = vld [vmem:[#allocation2 + $0x28] sm:$0xff]
      %v1029 = vld [vmem:[#allocation2 + $0x30] sm:$0xff]
      %v1030 = vld [vmem:[#allocation2 + $0x38] sm:$0xff]
      %v1031 = vld [vmem:[#allocation2 + $0x40] sm:$0xff]
      %v1032 = vld [vmem:[#allocation2 + $0x48] sm:$0xff]
      %v1033 = vpack.c.bf16 %v1026, %v1025
      %v1034 = vpack.c.bf16 %v1028, %v1027
      %v1035 = vpack.c.bf16 %v1030, %v1029
      %v1036 = vpack.c.bf16 %v1032, %v1031
      %1037 = vst.msk [vmem:[#allocation3 + $0x10] sm:$0xff] %vm695, %v1033
      %1038 = vst.msk [vmem:[#allocation3 + $0x58] sm:$0xff] %vm695, %v1034
      %1039 = vst.msk [vmem:[#allocation3 + $0xa0] sm:$0xff] %vm695, %v1035
      %1040 = vst.msk [vmem:[#allocation3 + $0xe8] sm:$0xff] %vm695, %v1036
      %v1041 = vld [vmem:[#allocation2 + $0x11] sm:$0xff]
      %v1042 = vld [vmem:[#allocation2 + $0x19] sm:$0xff]
      %v1043 = vld [vmem:[#allocation2 + $0x21] sm:$0xff]
      %v1044 = vld [vmem:[#allocation2 + $0x29] sm:$0xff]
      %v1045 = vld [vmem:[#allocation2 + $0x31] sm:$0xff]
      %v1046 = vld [vmem:[#allocation2 + $0x39] sm:$0xff]
      %v1047 = vld [vmem:[#allocation2 + $0x41] sm:$0xff]
      %v1048 = vld [vmem:[#allocation2 + $0x49] sm:$0xff]
      %v1049 = vld [vmem:[%s1] sm:$0xff]
      %v1050 = vld [vmem:[%s1 + $0x8] sm:$0xff]
      %v1051 = vld [vmem:[%s1 + $0x10] sm:$0xff]
      %v1052 = vld [vmem:[%s1 + $0x18] sm:$0xff]
      %v1053 = vld [vmem:[%s1 + $0x20] sm:$0xff]
      %v1054 = vld [vmem:[%s1 + $0x28] sm:$0xff]
      %v1055 = vld [vmem:[%s1 + $0x30] sm:$0xff]
      %v1056 = vld [vmem:[%s1 + $0x38] sm:$0xff]
      %1058 = vset.pattern.permute.xlu0 5
      %1059 = vperm.xlu0 %1058, %v1049
      %v1060 = vpop.permute.xlu0 %1059
      %1063 = vset.pattern.permute.xlu0 5
      %1064 = vperm.xlu0 %1063, %v1050
      %v1065 = vpop.permute.xlu0 %1064
      %1068 = vset.pattern.permute.xlu0 5
      %1069 = vperm.xlu0 %1068, %v1051
      %v1070 = vpop.permute.xlu0 %1069
      %1073 = vset.pattern.permute.xlu0 5
      %1074 = vperm.xlu0 %1073, %v1052
      %v1075 = vpop.permute.xlu0 %1074
      %1078 = vset.pattern.permute.xlu0 5
      %1079 = vperm.xlu0 %1078, %v1053
      %v1080 = vpop.permute.xlu0 %1079
      %1083 = vset.pattern.permute.xlu0 5
      %1084 = vperm.xlu0 %1083, %v1054
      %v1085 = vpop.permute.xlu0 %1084
      %1088 = vset.pattern.permute.xlu0 5
      %1089 = vperm.xlu0 %1088, %v1055
      %v1090 = vpop.permute.xlu0 %1089
      %1093 = vset.pattern.permute.xlu0 5
      %1094 = vperm.xlu0 %1093, %v1056
      %v1095 = vpop.permute.xlu0 %1094
      %v1097 = vmul.f32 %v1041, %v1060
      %v1098 = vmul.f32 %v1042, %v1065
      %v1099 = vmul.f32 %v1043, %v1070
      %v1100 = vmul.f32 %v1044, %v1075
      %v1101 = vmul.f32 %v1045, %v1080
      %v1102 = vmul.f32 %v1046, %v1085
      %v1103 = vmul.f32 %v1047, %v1090
      %v1104 = vmul.f32 %v1048, %v1095
      %v1105 = vpack.c.bf16 %v1098, %v1097
      %v1106 = vpack.c.bf16 %v1100, %v1099
      %v1107 = vpack.c.bf16 %v1102, %v1101
      %v1108 = vpack.c.bf16 %v1104, %v1103
      %1113 = vrot.lane.b32.xlu0 %v1105, 64
      %v1114 = vpop.permute.xlu0 %1113
      %1115 = vrot.lane.b32.xlu0 %v1106, 64
      %v1116 = vpop.permute.xlu0 %1115
      %1117 = vrot.lane.b32.xlu0 %v1107, 64
      %v1118 = vpop.permute.xlu0 %1117
      %1119 = vrot.lane.b32.xlu0 %v1108, 64
      %v1120 = vpop.permute.xlu0 %1119
      %1125 = vst.msk [vmem:[#allocation3 + $0x10] sm:$0xff] %vm860, %v1114
      %1126 = vst.msk [vmem:[#allocation3 + $0x58] sm:$0xff] %vm860, %v1116
      %1127 = vst.msk [vmem:[#allocation3 + $0xa0] sm:$0xff] %vm860, %v1118
      %1128 = vst.msk [vmem:[#allocation3 + $0xe8] sm:$0xff] %vm860, %v1120
      %v1129 = vld [vmem:[#allocation2 + $0x17] sm:$0xff]
      %v1130 = vld [vmem:[#allocation2 + $0x1f] sm:$0xff]
      %v1131 = vld [vmem:[#allocation2 + $0x27] sm:$0xff]
      %v1132 = vld [vmem:[#allocation2 + $0x2f] sm:$0xff]
      %v1133 = vld [vmem:[#allocation2 + $0x37] sm:$0xff]
      %v1134 = vld [vmem:[#allocation2 + $0x3f] sm:$0xff]
      %v1135 = vld [vmem:[#allocation2 + $0x47] sm:$0xff]
      %v1136 = vld [vmem:[#allocation2 + $0x4f] sm:$0xff]
      %v1137 = vld [vmem:[%s1] sm:$0xff]
      %v1138 = vld [vmem:[%s1 + $0x8] sm:$0xff]
      %v1139 = vld [vmem:[%s1 + $0x10] sm:$0xff]
      %v1140 = vld [vmem:[%s1 + $0x18] sm:$0xff]
      %v1141 = vld [vmem:[%s1 + $0x20] sm:$0xff]
      %v1142 = vld [vmem:[%s1 + $0x28] sm:$0xff]
      %v1143 = vld [vmem:[%s1 + $0x30] sm:$0xff]
      %v1144 = vld [vmem:[%s1 + $0x38] sm:$0xff]
      %1146 = vset.pattern.permute.xlu0 6
      %1147 = vperm.xlu0 %1146, %v1137
      %v1148 = vpop.permute.xlu0 %1147
      %1151 = vset.pattern.permute.xlu0 6
      %1152 = vperm.xlu0 %1151, %v1138
      %v1153 = vpop.permute.xlu0 %1152
      %1156 = vset.pattern.permute.xlu0 6
      %1157 = vperm.xlu0 %1156, %v1139
      %v1158 = vpop.permute.xlu0 %1157
      %1161 = vset.pattern.permute.xlu0 6
      %1162 = vperm.xlu0 %1161, %v1140
      %v1163 = vpop.permute.xlu0 %1162
      %1166 = vset.pattern.permute.xlu0 6
      %1167 = vperm.xlu0 %1166, %v1141
      %v1168 = vpop.permute.xlu0 %1167
      %1171 = vset.pattern.permute.xlu0 6
      %1172 = vperm.xlu0 %1171, %v1142
      %v1173 = vpop.permute.xlu0 %1172
      %1176 = vset.pattern.permute.xlu0 6
      %1177 = vperm.xlu0 %1176, %v1143
      %v1178 = vpop.permute.xlu0 %1177
      %1181 = vset.pattern.permute.xlu0 6
      %1182 = vperm.xlu0 %1181, %v1144
      %v1183 = vpop.permute.xlu0 %1182
      %v1185 = vmul.f32 %v1129, %v1148
      %v1186 = vmul.f32 %v1130, %v1153
      %v1187 = vmul.f32 %v1131, %v1158
      %v1188 = vmul.f32 %v1132, %v1163
      %v1189 = vmul.f32 %v1133, %v1168
      %v1190 = vmul.f32 %v1134, %v1173
      %v1191 = vmul.f32 %v1135, %v1178
      %v1192 = vmul.f32 %v1136, %v1183
      %v1193 = vpack.c.bf16 %v1186, %v1185
      %v1194 = vpack.c.bf16 %v1188, %v1187
      %v1195 = vpack.c.bf16 %v1190, %v1189
      %v1196 = vpack.c.bf16 %v1192, %v1191
      %1197 = vst.msk [vmem:[#allocation3 + $0x18] sm:$0xff] %vm695, %v1193
      %1198 = vst.msk [vmem:[#allocation3 + $0x60] sm:$0xff] %vm695, %v1194
      %1199 = vst.msk [vmem:[#allocation3 + $0xa8] sm:$0xff] %vm695, %v1195
      %1200 = vst.msk [vmem:[#allocation3 + $0xf0] sm:$0xff] %vm695, %v1196
      %v1201 = vld [vmem:[#allocation2 + $0x18] sm:$0xff]
      %v1202 = vld [vmem:[#allocation2 + $0x20] sm:$0xff]
      %v1203 = vld [vmem:[#allocation2 + $0x28] sm:$0xff]
      %v1204 = vld [vmem:[#allocation2 + $0x30] sm:$0xff]
      %v1205 = vld [vmem:[#allocation2 + $0x38] sm:$0xff]
      %v1206 = vld [vmem:[#allocation2 + $0x40] sm:$0xff]
      %v1207 = vld [vmem:[#allocation2 + $0x48] sm:$0xff]
      %v1208 = vld [vmem:[#allocation2 + $0x50] sm:$0xff]
      %v1209 = vld [vmem:[%s1] sm:$0xff]
      %v1210 = vld [vmem:[%s1 + $0x8] sm:$0xff]
      %v1211 = vld [vmem:[%s1 + $0x10] sm:$0xff]
      %v1212 = vld [vmem:[%s1 + $0x18] sm:$0xff]
      %v1213 = vld [vmem:[%s1 + $0x20] sm:$0xff]
      %v1214 = vld [vmem:[%s1 + $0x28] sm:$0xff]
      %v1215 = vld [vmem:[%s1 + $0x30] sm:$0xff]
      %v1216 = vld [vmem:[%s1 + $0x38] sm:$0xff]
      %1218 = vset.pattern.permute.xlu0 7
      %1219 = vperm.xlu0 %1218, %v1209
      %v1220 = vpop.permute.xlu0 %1219
      %1223 = vset.pattern.permute.xlu0 7
      %1224 = vperm.xlu0 %1223, %v1210
      %v1225 = vpop.permute.xlu0 %1224
      %1228 = vset.pattern.permute.xlu0 7
      %1229 = vperm.xlu0 %1228, %v1211
      %v1230 = vpop.permute.xlu0 %1229
      %1233 = vset.pattern.permute.xlu0 7
      %1234 = vperm.xlu0 %1233, %v1212
      %v1235 = vpop.permute.xlu0 %1234
      %1238 = vset.pattern.permute.xlu0 7
      %1239 = vperm.xlu0 %1238, %v1213
      %v1240 = vpop.permute.xlu0 %1239
      %1243 = vset.pattern.permute.xlu0 7
      %1244 = vperm.xlu0 %1243, %v1214
      %v1245 = vpop.permute.xlu0 %1244
      %1248 = vset.pattern.permute.xlu0 7
      %1249 = vperm.xlu0 %1248, %v1215
      %v1250 = vpop.permute.xlu0 %1249
      %1253 = vset.pattern.permute.xlu0 7
      %1254 = vperm.xlu0 %1253, %v1216
      %v1255 = vpop.permute.xlu0 %1254
      %v1257 = vmul.f32 %v1201, %v1220
      %v1258 = vmul.f32 %v1202, %v1225
      %v1259 = vmul.f32 %v1203, %v1230
      %v1260 = vmul.f32 %v1204, %v1235
      %v1261 = vmul.f32 %v1205, %v1240
      %v1262 = vmul.f32 %v1206, %v1245
      %v1263 = vmul.f32 %v1207, %v1250
      %v1264 = vmul.f32 %v1208, %v1255
      %v1265 = vpack.c.bf16 %v1258, %v1257
      %v1266 = vpack.c.bf16 %v1260, %v1259
      %v1267 = vpack.c.bf16 %v1262, %v1261
      %v1268 = vpack.c.bf16 %v1264, %v1263
      %1273 = vrot.lane.b32.xlu0 %v1265, 64
      %v1274 = vpop.permute.xlu0 %1273
      %1275 = vrot.lane.b32.xlu0 %v1266, 64
      %v1276 = vpop.permute.xlu0 %1275
      %1277 = vrot.lane.b32.xlu0 %v1267, 64
      %v1278 = vpop.permute.xlu0 %1277
      %1279 = vrot.lane.b32.xlu0 %v1268, 64
      %v1280 = vpop.permute.xlu0 %1279
      %1285 = vst.msk [vmem:[#allocation3 + $0x18] sm:$0xff] %vm860, %v1274
      %1286 = vst.msk [vmem:[#allocation3 + $0x60] sm:$0xff] %vm860, %v1276
      %1287 = vst.msk [vmem:[#allocation3 + $0xa8] sm:$0xff] %vm860, %v1278
      %1288 = vst.msk [vmem:[#allocation3 + $0xf0] sm:$0xff] %vm860, %v1280
      %v1289 = vld [vmem:[#allocation2 + $0x19] sm:$0xff]
      %v1290 = vld [vmem:[#allocation2 + $0x21] sm:$0xff]
      %v1291 = vld [vmem:[#allocation2 + $0x29] sm:$0xff]
      %v1292 = vld [vmem:[#allocation2 + $0x31] sm:$0xff]
      %v1293 = vld [vmem:[#allocation2 + $0x39] sm:$0xff]
      %v1294 = vld [vmem:[#allocation2 + $0x41] sm:$0xff]
      %v1295 = vld [vmem:[#allocation2 + $0x49] sm:$0xff]
      %v1296 = vld [vmem:[#allocation2 + $0x51] sm:$0xff]
      %v1297 = vld [vmem:[%s1] sm:$0xff]
      %v1298 = vld [vmem:[%s1 + $0x8] sm:$0xff]
      %v1299 = vld [vmem:[%s1 + $0x10] sm:$0xff]
      %v1300 = vld [vmem:[%s1 + $0x18] sm:$0xff]
      %v1301 = vld [vmem:[%s1 + $0x20] sm:$0xff]
      %v1302 = vld [vmem:[%s1 + $0x28] sm:$0xff]
      %v1303 = vld [vmem:[%s1 + $0x30] sm:$0xff]
      %v1304 = vld [vmem:[%s1 + $0x38] sm:$0xff]
      %1306 = vset.pattern.permute.xlu0 8
      %1307 = vperm.xlu0 %1306, %v1297
      %v1308 = vpop.permute.xlu0 %1307
      %1311 = vset.pattern.permute.xlu0 8
      %1312 = vperm.xlu0 %1311, %v1298
      %v1313 = vpop.permute.xlu0 %1312
      %1316 = vset.pattern.permute.xlu0 8
      %1317 = vperm.xlu0 %1316, %v1299
      %v1318 = vpop.permute.xlu0 %1317
      %1321 = vset.pattern.permute.xlu0 8
      %1322 = vperm.xlu0 %1321, %v1300
      %v1323 = vpop.permute.xlu0 %1322
      %1326 = vset.pattern.permute.xlu0 8
      %1327 = vperm.xlu0 %1326, %v1301
      %v1328 = vpop.permute.xlu0 %1327
      %1331 = vset.pattern.permute.xlu0 8
      %1332 = vperm.xlu0 %1331, %v1302
      %v1333 = vpop.permute.xlu0 %1332
      %1336 = vset.pattern.permute.xlu0 8
      %1337 = vperm.xlu0 %1336, %v1303
      %v1338 = vpop.permute.xlu0 %1337
      %1341 = vset.pattern.permute.xlu0 8
      %1342 = vperm.xlu0 %1341, %v1304
      %v1343 = vpop.permute.xlu0 %1342
      %v1345 = vmul.f32 %v1289, %v1308
      %v1346 = vmul.f32 %v1290, %v1313
      %v1347 = vmul.f32 %v1291, %v1318
      %v1348 = vmul.f32 %v1292, %v1323
      %v1349 = vmul.f32 %v1293, %v1328
      %v1350 = vmul.f32 %v1294, %v1333
      %v1351 = vmul.f32 %v1295, %v1338
      %v1352 = vmul.f32 %v1296, %v1343
      %v1353 = vpack.c.bf16 %v1346, %v1345
      %v1354 = vpack.c.bf16 %v1348, %v1347
      %v1355 = vpack.c.bf16 %v1350, %v1349
      %v1356 = vpack.c.bf16 %v1352, %v1351
      %1357 = vst.msk [vmem:[#allocation3 + $0x20] sm:$0xff] %vm695, %v1353
      %1358 = vst.msk [vmem:[#allocation3 + $0x68] sm:$0xff] %vm695, %v1354
      %1359 = vst.msk [vmem:[#allocation3 + $0xb0] sm:$0xff] %vm695, %v1355
      %1360 = vst.msk [vmem:[#allocation3 + $0xf8] sm:$0xff] %vm695, %v1356
      %v1361 = vld [vmem:[#allocation3] sm:$0xff]
      %v1362 = vld [vmem:[#allocation3 + $0x8] sm:$0xff]
      %v1363 = vld [vmem:[#allocation3 + $0x10] sm:$0xff]
      %v1364 = vld [vmem:[#allocation3 + $0x18] sm:$0xff]
      %v1365 = vld [vmem:[#allocation3 + $0x20] sm:$0xff]
      %v1366 = vld [vmem:[#allocation3 + $0x48] sm:$0xff]
      %v1367 = vld [vmem:[#allocation3 + $0x50] sm:$0xff]
      %v1368 = vld [vmem:[#allocation3 + $0x58] sm:$0xff]
      %v1369 = vld [vmem:[#allocation3 + $0x60] sm:$0xff]
      %v1370 = vld [vmem:[#allocation3 + $0x68] sm:$0xff]
      %v1371 = vld [vmem:[#allocation3 + $0x90] sm:$0xff]
      %v1372 = vld [vmem:[#allocation3 + $0x98] sm:$0xff]
      %v1373 = vld [vmem:[#allocation3 + $0xa0] sm:$0xff]
      %v1374 = vld [vmem:[#allocation3 + $0xa8] sm:$0xff]
      %v1375 = vld [vmem:[#allocation3 + $0xb0] sm:$0xff]
      %v1376 = vld [vmem:[#allocation3 + $0xd8] sm:$0xff]
      %v1377 = vld [vmem:[#allocation3 + $0xe0] sm:$0xff]
      %v1378 = vld [vmem:[#allocation3 + $0xe8] sm:$0xff]
      %v1379 = vld [vmem:[#allocation3 + $0xf0] sm:$0xff]
      %v1380 = vld [vmem:[#allocation3 + $0xf8] sm:$0xff]
      %v1381 = vld [vmem:[%s5] sm:$0xf]
      %v1382 = vld [vmem:[%s5 + $0x4] sm:$0xf]
      %v1383 = vld [vmem:[%s5 + $0x8] sm:$0xf]
      %v1384 = vld [vmem:[%s5 + $0xc] sm:$0xf]
      %v1385 = vld [vmem:[%s5 + $0x10] sm:$0xf]
      %v1386 = vld [vmem:[%s5 + $0x14] sm:$0xf]
      %v1387 = vld [vmem:[%s5 + $0x18] sm:$0xf]
      %v1388 = vld [vmem:[%s5 + $0x1c] sm:$0xf]
      %v1389 = vld [vmem:[%s5 + $0x20] sm:$0xf]
      %v1390 = vld [vmem:[%s5 + $0x24] sm:$0xf]
      %v1391 = vld [vmem:[%s5 + $0x28] sm:$0xf]
      %v1392 = vld [vmem:[%s5 + $0x2c] sm:$0xf]
      %v1393 = vld [vmem:[%s5 + $0x30] sm:$0xf]
      %v1394 = vld [vmem:[%s5 + $0x34] sm:$0xf]
      %v1395 = vld [vmem:[%s5 + $0x38] sm:$0xf]
      %v1396 = vld [vmem:[%s5 + $0x3c] sm:$0xf]
      %v1397 = vld [vmem:[%s5 + $0x40] sm:$0xf]
      %v1398 = vld [vmem:[%s5 + $0x44] sm:$0xf]
      %v1399 = vld [vmem:[%s5 + $0x48] sm:$0xf]
      %v1400 = vld [vmem:[%s5 + $0x4c] sm:$0xf]
      %v1401 = vld [vmem:[%s5 + $0x50] sm:$0xf]
      %v1402 = vld [vmem:[%s5 + $0x54] sm:$0xf]
      %v1403 = vld [vmem:[%s5 + $0x58] sm:$0xf]
      %v1404 = vld [vmem:[%s5 + $0x5c] sm:$0xf]
      %v1405 = vld [vmem:[%s5 + $0x60] sm:$0xf]
      %v1406 = vld [vmem:[%s5 + $0x64] sm:$0xf]
      %v1407 = vld [vmem:[%s5 + $0x68] sm:$0xf]
      %v1408 = vld [vmem:[%s5 + $0x6c] sm:$0xf]
      %v1409 = vld [vmem:[%s5 + $0x70] sm:$0xf]
      %v1410 = vld [vmem:[%s5 + $0x74] sm:$0xf]
      %v1411 = vld [vmem:[%s5 + $0x78] sm:$0xf]
      %v1412 = vld [vmem:[%s5 + $0x7c] sm:$0xf]
      %v1413 = vld [vmem:[%s5 + $0x80] sm:$0xf]
      %v1414 = vld [vmem:[%s5 + $0x84] sm:$0xf]
      %v1415 = vld [vmem:[%s5 + $0x88] sm:$0xf]
      %v1416 = vld [vmem:[%s5 + $0x8c] sm:$0xf]
      %v1417 = vld [vmem:[%s5 + $0x90] sm:$0xf]
      %v1418 = vld [vmem:[%s5 + $0x94] sm:$0xf]
      %v1419 = vld [vmem:[%s5 + $0x98] sm:$0xf]
      %v1420 = vld [vmem:[%s5 + $0x9c] sm:$0xf]
      %v1421 = vld [vmem:[%s5 + $0xa0] sm:$0xf]
      %v1422 = vld [vmem:[%s5 + $0xa4] sm:$0xf]
      %v1423 = vld [vmem:[%s5 + $0xa8] sm:$0xf]
      %v1424 = vld [vmem:[%s5 + $0xac] sm:$0xf]
      %v1425 = vld [vmem:[%s5 + $0xb0] sm:$0xf]
      %v1426 = vld [vmem:[%s5 + $0xb4] sm:$0xf]
      %v1427 = vld [vmem:[%s5 + $0xb8] sm:$0xf]
      %v1428 = vld [vmem:[%s5 + $0xbc] sm:$0xf]
      %v1429 = vld [vmem:[%s5 + $0xc0] sm:$0xf]
      %v1430 = vld [vmem:[%s5 + $0xc4] sm:$0xf]
      %v1431 = vld [vmem:[%s5 + $0xc8] sm:$0xf]
      %v1432 = vld [vmem:[%s5 + $0xcc] sm:$0xf]
      %v1433 = vld [vmem:[%s5 + $0xd0] sm:$0xf]
      %v1434 = vld [vmem:[%s5 + $0xd4] sm:$0xf]
      %v1435 = vld [vmem:[%s5 + $0xd8] sm:$0xf]
      %v1436 = vld [vmem:[%s5 + $0xdc] sm:$0xf]
      %v1437 = vld [vmem:[%s5 + $0xe0] sm:$0xf]
      %v1438 = vld [vmem:[%s5 + $0xe4] sm:$0xf]
      %v1439 = vld [vmem:[%s5 + $0xe8] sm:$0xf]
      %v1440 = vld [vmem:[%s5 + $0xec] sm:$0xf]
      %v1441 = vld [vmem:[%s5 + $0xf0] sm:$0xf]
      %v1442 = vld [vmem:[%s5 + $0xf4] sm:$0xf]
      %v1443 = vld [vmem:[%s5 + $0xf8] sm:$0xf]
      %v1444 = vld [vmem:[%s5 + $0xfc] sm:$0xf]
      %v1445 = vld [vmem:[%s5 + $0x100] sm:$0xf]
      %v1446 = vld [vmem:[%s5 + $0x104] sm:$0xf]
      %v1447 = vld [vmem:[%s5 + $0x108] sm:$0xf]
      %v1448 = vld [vmem:[%s5 + $0x10c] sm:$0xf]
      %v1449 = vld [vmem:[%s5 + $0x110] sm:$0xf]
      %v1450 = vld [vmem:[%s5 + $0x114] sm:$0xf]
      %v1451 = vld [vmem:[%s5 + $0x118] sm:$0xf]
      %v1452 = vld [vmem:[%s5 + $0x11c] sm:$0xf]
      %v1453 = vld [vmem:[%s6] sm:$0x1]
      %v1455 = vlaneseq
      %v1456 = vshrl.u32 %v1455, 7
      %v1457 = vsub.s32 0, %v1456
      %v1458 = vrot.slane %v1453, %v1457
      %v1532 = vunpack.c.l.b16 %v1381
      %v1533 = vunpack.c.l.b16 %v1382
      %v1534 = vunpack.c.l.b16 %v1383
      %v1535 = vunpack.c.l.b16 %v1384
      %v1536 = vunpack.c.l.b16 %v1385
      %v1537 = vunpack.c.l.b16 %v1386
      %v1538 = vunpack.c.l.b16 %v1387
      %v1539 = vunpack.c.l.b16 %v1388
      %v1540 = vunpack.c.l.b16 %v1389
      %v1541 = vunpack.c.l.b16 %v1390
      %v1542 = vunpack.c.l.b16 %v1391
      %v1543 = vunpack.c.l.b16 %v1392
      %v1544 = vunpack.c.l.b16 %v1393
      %v1545 = vunpack.c.l.b16 %v1394
      %v1546 = vunpack.c.l.b16 %v1395
      %v1547 = vunpack.c.l.b16 %v1396
      %v1548 = vunpack.c.l.b16 %v1397
      %v1549 = vunpack.c.l.b16 %v1398
      %v1550 = vunpack.c.l.b16 %v1399
      %v1551 = vunpack.c.l.b16 %v1400
      %v1552 = vunpack.c.l.b16 %v1401
      %v1553 = vunpack.c.l.b16 %v1402
      %v1554 = vunpack.c.l.b16 %v1403
      %v1555 = vunpack.c.l.b16 %v1404
      %v1556 = vunpack.c.l.b16 %v1405
      %v1557 = vunpack.c.l.b16 %v1406
      %v1558 = vunpack.c.l.b16 %v1407
      %v1559 = vunpack.c.l.b16 %v1408
      %v1560 = vunpack.c.l.b16 %v1409
      %v1561 = vunpack.c.l.b16 %v1410
      %v1562 = vunpack.c.l.b16 %v1411
      %v1563 = vunpack.c.l.b16 %v1412
      %v1564 = vunpack.c.l.b16 %v1413
      %v1565 = vunpack.c.l.b16 %v1414
      %v1566 = vunpack.c.l.b16 %v1415
      %v1567 = vunpack.c.l.b16 %v1416
      %v1568 = vunpack.c.l.b16 %v1417
      %v1569 = vunpack.c.l.b16 %v1418
      %v1570 = vunpack.c.l.b16 %v1419
      %v1571 = vunpack.c.l.b16 %v1420
      %v1572 = vunpack.c.l.b16 %v1421
      %v1573 = vunpack.c.l.b16 %v1422
      %v1574 = vunpack.c.l.b16 %v1423
      %v1575 = vunpack.c.l.b16 %v1424
      %v1576 = vunpack.c.l.b16 %v1425
      %v1577 = vunpack.c.l.b16 %v1426
      %v1578 = vunpack.c.l.b16 %v1427
      %v1579 = vunpack.c.l.b16 %v1428
      %v1580 = vunpack.c.l.b16 %v1429
      %v1581 = vunpack.c.l.b16 %v1430
      %v1582 = vunpack.c.l.b16 %v1431
      %v1583 = vunpack.c.l.b16 %v1432
      %v1584 = vunpack.c.l.b16 %v1433
      %v1585 = vunpack.c.l.b16 %v1434
      %v1586 = vunpack.c.l.b16 %v1435
      %v1587 = vunpack.c.l.b16 %v1436
      %v1588 = vunpack.c.l.b16 %v1437
      %v1589 = vunpack.c.l.b16 %v1438
      %v1590 = vunpack.c.l.b16 %v1439
      %v1591 = vunpack.c.l.b16 %v1440
      %v1592 = vunpack.c.l.b16 %v1441
      %v1593 = vunpack.c.l.b16 %v1442
      %v1594 = vunpack.c.l.b16 %v1443
      %v1595 = vunpack.c.l.b16 %v1444
      %v1596 = vunpack.c.l.b16 %v1445
      %v1597 = vunpack.c.l.b16 %v1446
      %v1598 = vunpack.c.l.b16 %v1447
      %v1599 = vunpack.c.l.b16 %v1448
      %v1600 = vunpack.c.l.b16 %v1449
      %v1601 = vunpack.c.l.b16 %v1450
      %v1602 = vunpack.c.l.b16 %v1451
      %v1603 = vunpack.c.l.b16 %v1452
      %v1604 = vpack.c.b16 %v1533, %v1532
      %v1605 = vpack.c.b16 %v1535, %v1534
      %v1606 = vpack.c.b16 %v1537, %v1536
      %v1607 = vpack.c.b16 %v1539, %v1538
      %v1608 = vpack.c.b16 %v1541, %v1540
      %v1609 = vpack.c.b16 %v1543, %v1542
      %v1610 = vpack.c.b16 %v1545, %v1544
      %v1611 = vpack.c.b16 %v1547, %v1546
      %v1612 = vpack.c.b16 %v1549, %v1548
      %v1613 = vpack.c.b16 %v1551, %v1550
      %v1614 = vpack.c.b16 %v1553, %v1552
      %v1615 = vpack.c.b16 %v1555, %v1554
      %v1616 = vpack.c.b16 %v1557, %v1556
      %v1617 = vpack.c.b16 %v1559, %v1558
      %v1618 = vpack.c.b16 %v1561, %v1560
      %v1619 = vpack.c.b16 %v1563, %v1562
      %v1620 = vpack.c.b16 %v1565, %v1564
      %v1621 = vpack.c.b16 %v1567, %v1566
      %v1622 = vpack.c.b16 %v1569, %v1568
      %v1623 = vpack.c.b16 %v1571, %v1570
      %v1624 = vpack.c.b16 %v1573, %v1572
      %v1625 = vpack.c.b16 %v1575, %v1574
      %v1626 = vpack.c.b16 %v1577, %v1576
      %v1627 = vpack.c.b16 %v1579, %v1578
      %v1628 = vpack.c.b16 %v1581, %v1580
      %v1629 = vpack.c.b16 %v1583, %v1582
      %v1630 = vpack.c.b16 %v1585, %v1584
      %v1631 = vpack.c.b16 %v1587, %v1586
      %v1632 = vpack.c.b16 %v1589, %v1588
      %v1633 = vpack.c.b16 %v1591, %v1590
      %v1634 = vpack.c.b16 %v1593, %v1592
      %v1635 = vpack.c.b16 %v1595, %v1594
      %v1636 = vpack.c.b16 %v1597, %v1596
      %v1637 = vpack.c.b16 %v1599, %v1598
      %v1638 = vpack.c.b16 %v1601, %v1600
      %v1639 = vpack.c.b16 %v1603, %v1602
      %v1677 = vsel %vm695, %v1365, 0
      %v1680 = vsel %vm695, %v1370, 0
      %v1683 = vsel %vm695, %v1375, 0
      %v1686 = vsel %vm695, %v1380, 0
      %1688 = vmatprep.subr.bf16.mxu0 0
      %1689 = vmatpush1.bf16.msra.mxu0 %v1604
      %1690 = vmatprep.subr.bf16.mxu0 0
      %1691 = vmatpush1.bf16.msra.mxu0 %v1605
      %1692 = vmatprep.subr.bf16.mxu0 0
      %1693 = vmatpush1.bf16.msra.mxu0 %v1606
      %1694 = vmatprep.subr.bf16.mxu0 0
      %1695 = vmatpush1.bf16.msra.mxu0 %v1607
      %1696 = vmatprep.subr.bf16.mxu0 0
      %1697 = vmatpush1.bf16.msra.mxu0 %v1608
      %1698 = vmatprep.subr.bf16.mxu0 0
      %1699 = vmatpush1.bf16.msra.mxu0 %v1609
      %1700 = vmatprep.subr.bf16.mxu0 0
      %1701 = vmatpush1.bf16.msra.mxu0 %v1610
      %1702 = vmatprep.subr.bf16.mxu0 0
      %1703 = vmatpush1.bf16.msra.mxu0 %v1611
      %1704 = vmatprep.subr.bf16.mxu0 0
      %1705 = vmatpush1.bf16.msra.mxu0 %v1612
      %1706 = vmatprep.subr.bf16.mxu0 0
      %1707 = vmatpush1.bf16.msra.mxu0 %v1613
      %1708 = vmatprep.subr.bf16.mxu0 0
      %1709 = vmatpush1.bf16.msra.mxu0 %v1614
      %1710 = vmatprep.subr.bf16.mxu0 0
      %1711 = vmatpush1.bf16.msra.mxu0 %v1615
      %1712 = vmatprep.subr.bf16.mxu0 0
      %1713 = vmatpush1.bf16.msra.mxu0 %v1616
      %1714 = vmatprep.subr.bf16.mxu0 0
      %1715 = vmatpush1.bf16.msra.mxu0 %v1617
      %1716 = vmatprep.subr.bf16.mxu0 0
      %1717 = vmatpush1.bf16.msra.mxu0 %v1618
      %1718 = vmatprep.subr.bf16.mxu0 0
      %1719 = vmatpush1.bf16.msra.mxu0 %v1619
      %1720 = vmatprep.mubr.bf16.mxu0 %v1362
      %1721 = vmatmul.mubr.bf16.gmra.mrb[0].mxu0 %v1361
      %v1722 = vpop.f32.mrb[0].mxu0
      %v1723 = vadd.f32 %v1458, %v1722
      %v1724 = vpop.f32.mrb[0].mxu0
      %v1725 = vpop.f32.mrb[0].mxu0
      %v1726 = vadd.f32 %v1458, %v1725
      %v1727 = vpop.f32.mrb[0].mxu0
      %1728 = vmatprep.mubr.bf16.mxu0 %v1367
      %1729 = vmatmul.mubr.bf16.gmra.mrb[0].mxu0 %v1366
      %v1730 = vpop.f32.mrb[0].mxu0
      %v1731 = vadd.f32 %v1458, %v1730
      %v1732 = vpop.f32.mrb[0].mxu0
      %v1733 = vpop.f32.mrb[0].mxu0
      %v1734 = vadd.f32 %v1458, %v1733
      %v1735 = vpop.f32.mrb[0].mxu0
      %1736 = vmatprep.mubr.bf16.mxu0 %v1372
      %1737 = vmatmul.mubr.bf16.gmra.mrb[0].mxu0 %v1371
      %v1738 = vpop.f32.mrb[0].mxu0
      %v1739 = vadd.f32 %v1458, %v1738
      %v1740 = vpop.f32.mrb[0].mxu0
      %v1741 = vpop.f32.mrb[0].mxu0
      %v1742 = vadd.f32 %v1458, %v1741
      %v1743 = vpop.f32.mrb[0].mxu0
      %1744 = vmatprep.mubr.bf16.mxu0 %v1377
      %1745 = vmatmul.mubr.bf16.gmra.mrb[0].mxu0 %v1376
      %v1746 = vpop.f32.mrb[0].mxu0
      %v1747 = vadd.f32 %v1458, %v1746
      %v1748 = vpop.f32.mrb[0].mxu0
      %v1749 = vpop.f32.mrb[0].mxu0
      %v1750 = vadd.f32 %v1458, %v1749
      %v1751 = vpop.f32.mrb[0].mxu0
      %1752 = vdwg.mxu0
      %1753 = vmatprep.subr.bf16.mxu0 0
      %1754 = vmatpush1.bf16.msra.mxu0 %v1620
      %1755 = vmatprep.subr.bf16.mxu0 0
      %1756 = vmatpush1.bf16.msra.mxu0 %v1621
      %1757 = vmatprep.subr.bf16.mxu0 0
      %1758 = vmatpush1.bf16.msra.mxu0 %v1622
      %1759 = vmatprep.subr.bf16.mxu0 0
      %1760 = vmatpush1.bf16.msra.mxu0 %v1623
      %1761 = vmatprep.subr.bf16.mxu0 0
      %1762 = vmatpush1.bf16.msra.mxu0 %v1624
      %1763 = vmatprep.subr.bf16.mxu0 0
      %1764 = vmatpush1.bf16.msra.mxu0 %v1625
      %1765 = vmatprep.subr.bf16.mxu0 0
      %1766 = vmatpush1.bf16.msra.mxu0 %v1626
      %1767 = vmatprep.subr.bf16.mxu0 0
      %1768 = vmatpush1.bf16.msra.mxu0 %v1627
      %1769 = vmatprep.subr.bf16.mxu0 0
      %1770 = vmatpush1.bf16.msra.mxu0 %v1628
      %1771 = vmatprep.subr.bf16.mxu0 0
      %1772 = vmatpush1.bf16.msra.mxu0 %v1629
      %1773 = vmatprep.subr.bf16.mxu0 0
      %1774 = vmatpush1.bf16.msra.mxu0 %v1630
      %1775 = vmatprep.subr.bf16.mxu0 0
      %1776 = vmatpush1.bf16.msra.mxu0 %v1631
      %1777 = vmatprep.subr.bf16.mxu0 0
      %1778 = vmatpush1.bf16.msra.mxu0 %v1632
      %1779 = vmatprep.subr.bf16.mxu0 0
      %1780 = vmatpush1.bf16.msra.mxu0 %v1633
      %1781 = vmatprep.subr.bf16.mxu0 0
      %1782 = vmatpush1.bf16.msra.mxu0 %v1634
      %1783 = vmatprep.subr.bf16.mxu0 0
      %1784 = vmatpush1.bf16.msra.mxu0 %v1635
      %1785 = vmatprep.mubr.bf16.mxu0 %v1364
      %1786 = vmatmul.mubr.bf16.gmra.mrb[0].mxu0 %v1363
      %v1787 = vpop.f32.mrb[0].mxu0
      %v1788 = vadd.f32 %v1723, %v1787
      %v1789 = vpop.f32.mrb[0].mxu0
      %v1790 = vpop.f32.mrb[0].mxu0
      %v1791 = vadd.f32 %v1726, %v1790
      %v1792 = vpop.f32.mrb[0].mxu0
      %1793 = vmatprep.mubr.bf16.mxu0 %v1369
      %1794 = vmatmul.mubr.bf16.gmra.mrb[0].mxu0 %v1368
      %v1795 = vpop.f32.mrb[0].mxu0
      %v1796 = vadd.f32 %v1731, %v1795
      %v1797 = vpop.f32.mrb[0].mxu0
      %v1798 = vpop.f32.mrb[0].mxu0
      %v1799 = vadd.f32 %v1734, %v1798
      %v1800 = vpop.f32.mrb[0].mxu0
      %1801 = vmatprep.mubr.bf16.mxu0 %v1374
      %1802 = vmatmul.mubr.bf16.gmra.mrb[0].mxu0 %v1373
      %v1803 = vpop.f32.mrb[0].mxu0
      %v1804 = vadd.f32 %v1739, %v1803
      %v1805 = vpop.f32.mrb[0].mxu0
      %v1806 = vpop.f32.mrb[0].mxu0
      %v1807 = vadd.f32 %v1742, %v1806
      %v1808 = vpop.f32.mrb[0].mxu0
      %1809 = vmatprep.mubr.bf16.mxu0 %v1379
      %1810 = vmatmul.mubr.bf16.gmra.mrb[0].mxu0 %v1378
      %v1811 = vpop.f32.mrb[0].mxu0
      %v1812 = vadd.f32 %v1747, %v1811
      %v1813 = vpop.f32.mrb[0].mxu0
      %v1814 = vpop.f32.mrb[0].mxu0
      %v1815 = vadd.f32 %v1750, %v1814
      %v1816 = vpop.f32.mrb[0].mxu0
      %1817 = vdwg.mxu0
      %1818 = vmatprep.subr.bf16.mxu0 0
      %1819 = vmatpush1.bf16.msra.mxu0 %v1636
      %1820 = vmatprep.subr.bf16.mxu0 0
      %1821 = vmatpush1.bf16.msra.mxu0 %v1637
      %1822 = vmatprep.subr.bf16.mxu0 0
      %1823 = vmatpush1.bf16.msra.mxu0 %v1638
      %1824 = vmatprep.subr.bf16.mxu0 0
      %1825 = vmatpush1.bf16.msra.mxu0 %v1639
      %1826 = vmatprep.subr.bf16.mxu0 0
      %1827 = vmatpush1.bf16.msra.mxu0 0
      %1828 = vmatprep.subr.bf16.mxu0 0
      %1829 = vmatpush1.bf16.msra.mxu0 0
      %1830 = vmatprep.subr.bf16.mxu0 0
      %1831 = vmatpush1.bf16.msra.mxu0 0
      %1832 = vmatprep.subr.bf16.mxu0 0
      %1833 = vmatpush1.bf16.msra.mxu0 0
      %1834 = vmatprep.subr.bf16.mxu0 0
      %1835 = vmatpush1.bf16.msra.mxu0 0
      %1836 = vmatprep.subr.bf16.mxu0 0
      %1837 = vmatpush1.bf16.msra.mxu0 0
      %1838 = vmatprep.subr.bf16.mxu0 0
      %1839 = vmatpush1.bf16.msra.mxu0 0
      %1840 = vmatprep.subr.bf16.mxu0 0
      %1841 = vmatpush1.bf16.msra.mxu0 0
      %1842 = vmatprep.subr.bf16.mxu0 0
      %1843 = vmatpush1.bf16.msra.mxu0 0
      %1844 = vmatprep.subr.bf16.mxu0 0
      %1845 = vmatpush1.bf16.msra.mxu0 0
      %1846 = vmatprep.subr.bf16.mxu0 0
      %1847 = vmatpush1.bf16.msra.mxu0 0
      %1848 = vmatprep.subr.bf16.mxu0 0
      %1849 = vmatpush1.bf16.msra.mxu0 0
      %1850 = vmatprep.mubr.bf16.mxu0 0
      %1851 = vmatmul.mubr.bf16.gmra.mrb[0].mxu0 %v1677
      %v1852 = vpop.f32.mrb[0].mxu0
      %v1853 = vadd.f32 %v1788, %v1852
      %v1854 = vpop.f32.mrb[0].mxu0
      %v1855 = vpop.f32.mrb[0].mxu0
      %v1856 = vadd.f32 %v1791, %v1855
      %v1857 = vpop.f32.mrb[0].mxu0
      %1858 = vmatprep.mubr.bf16.mxu0 0
      %1859 = vmatmul.mubr.bf16.gmra.mrb[0].mxu0 %v1680
      %v1860 = vpop.f32.mrb[0].mxu0
      %v1861 = vadd.f32 %v1796, %v1860
      %v1862 = vpop.f32.mrb[0].mxu0
      %v1863 = vpop.f32.mrb[0].mxu0
      %v1864 = vadd.f32 %v1799, %v1863
      %v1865 = vpop.f32.mrb[0].mxu0
      %1866 = vmatprep.mubr.bf16.mxu0 0
      %1867 = vmatmul.mubr.bf16.gmra.mrb[0].mxu0 %v1683
      %v1868 = vpop.f32.mrb[0].mxu0
      %v1869 = vadd.f32 %v1804, %v1868
      %v1870 = vpop.f32.mrb[0].mxu0
      %v1871 = vpop.f32.mrb[0].mxu0
      %v1872 = vadd.f32 %v1807, %v1871
      %v1873 = vpop.f32.mrb[0].mxu0
      %1874 = vmatprep.mubr.bf16.mxu0 0
      %1875 = vmatmul.mubr.bf16.gmra.mrb[0].mxu0 %v1686
      %v1876 = vpop.f32.mrb[0].mxu0
      %v1877 = vadd.f32 %v1812, %v1876
      %v1878 = vpop.f32.mrb[0].mxu0
      %v1879 = vpop.f32.mrb[0].mxu0
      %v1880 = vadd.f32 %v1815, %v1879
      %v1881 = vpop.f32.mrb[0].mxu0
      %1882 = vdwg.mxu0
      %v1883 = vmax.f32 %v1853, 0.0
      %v1884 = vmax.f32 %v1856, 0.0
      %v1885 = vmax.f32 %v1861, 0.0
      %v1886 = vmax.f32 %v1864, 0.0
      %v1887 = vmax.f32 %v1869, 0.0
      %v1888 = vmax.f32 %v1872, 0.0
      %v1889 = vmax.f32 %v1877, 0.0
      %v1890 = vmax.f32 %v1880, 0.0
      %1891 = vst [vmem:[#allocation2 + $0x10] sm:$0xff] %v1883
      %1892 = vst [vmem:[#allocation2 + $0x18] sm:$0xff] %v1884
      %1893 = vst [vmem:[#allocation2 + $0x20] sm:$0xff] %v1885
      %1894 = vst [vmem:[#allocation2 + $0x28] sm:$0xff] %v1886
      %1895 = vst [vmem:[#allocation2 + $0x30] sm:$0xff] %v1887
      %1896 = vst [vmem:[#allocation2 + $0x38] sm:$0xff] %v1888
      %1897 = vst [vmem:[#allocation2 + $0x40] sm:$0xff] %v1889
      %1898 = vst [vmem:[#allocation2 + $0x48] sm:$0xff] %v1890
      %v1899 = vld [vmem:[#allocation2 + $0x7] sm:$0xff]
      %v1900 = vld [vmem:[#allocation2 + $0xf] sm:$0xff]
      %v1901 = vld [vmem:[#allocation2 + $0x17] sm:$0xff]
      %v1902 = vld [vmem:[#allocation2 + $0x1f] sm:$0xff]
      %v1903 = vld [vmem:[#allocation2 + $0x27] sm:$0xff]
      %v1904 = vld [vmem:[#allocation2 + $0x2f] sm:$0xff]
      %v1905 = vld [vmem:[#allocation2 + $0x37] sm:$0xff]
      %v1906 = vld [vmem:[#allocation2 + $0x3f] sm:$0xff]
      %v1907 = vld [vmem:[%s1] sm:$0xff]
      %v1908 = vld [vmem:[%s1 + $0x8] sm:$0xff]
      %v1909 = vld [vmem:[%s1 + $0x10] sm:$0xff]
      %v1910 = vld [vmem:[%s1 + $0x18] sm:$0xff]
      %v1911 = vld [vmem:[%s1 + $0x20] sm:$0xff]
      %v1912 = vld [vmem:[%s1 + $0x28] sm:$0xff]
      %v1913 = vld [vmem:[%s1 + $0x30] sm:$0xff]
      %v1914 = vld [vmem:[%s1 + $0x38] sm:$0xff]
      %1916 = vset.pattern.permute.xlu0 0
      %1917 = vperm.xlu0 %1916, %v1907
      %v1918 = vpop.permute.xlu0 %1917
      %1921 = vset.pattern.permute.xlu0 0
      %1922 = vperm.xlu0 %1921, %v1908
      %v1923 = vpop.permute.xlu0 %1922
      %1926 = vset.pattern.permute.xlu0 0
      %1927 = vperm.xlu0 %1926, %v1909
      %v1928 = vpop.permute.xlu0 %1927
      %1931 = vset.pattern.permute.xlu0 0
      %1932 = vperm.xlu0 %1931, %v1910
      %v1933 = vpop.permute.xlu0 %1932
      %1936 = vset.pattern.permute.xlu0 0
      %1937 = vperm.xlu0 %1936, %v1911
      %v1938 = vpop.permute.xlu0 %1937
      %1941 = vset.pattern.permute.xlu0 0
      %1942 = vperm.xlu0 %1941, %v1912
      %v1943 = vpop.permute.xlu0 %1942
      %1946 = vset.pattern.permute.xlu0 0
      %1947 = vperm.xlu0 %1946, %v1913
      %v1948 = vpop.permute.xlu0 %1947
      %1951 = vset.pattern.permute.xlu0 0
      %1952 = vperm.xlu0 %1951, %v1914
      %v1953 = vpop.permute.xlu0 %1952
      %v1955 = vmul.f32 %v1899, %v1918
      %v1956 = vmul.f32 %v1900, %v1923
      %v1957 = vmul.f32 %v1901, %v1928
      %v1958 = vmul.f32 %v1902, %v1933
      %v1959 = vmul.f32 %v1903, %v1938
      %v1960 = vmul.f32 %v1904, %v1943
      %v1961 = vmul.f32 %v1905, %v1948
      %v1962 = vmul.f32 %v1906, %v1953
      %v1963 = vpack.c.bf16 %v1956, %v1955
      %v1964 = vpack.c.bf16 %v1958, %v1957
      %v1965 = vpack.c.bf16 %v1960, %v1959
      %v1966 = vpack.c.bf16 %v1962, %v1961
      %1967 = vst [vmem:[#allocation3] sm:$0xff] %v1963
      %1968 = vst [vmem:[#allocation3 + $0x48] sm:$0xff] %v1964
      %1969 = vst [vmem:[#allocation3 + $0x90] sm:$0xff] %v1965
      %1970 = vst [vmem:[#allocation3 + $0xd8] sm:$0xff] %v1966
      %v1971 = vld [vmem:[#allocation2 + $0x8] sm:$0xff]
      %v1972 = vld [vmem:[#allocation2 + $0x10] sm:$0xff]
      %v1973 = vld [vmem:[#allocation2 + $0x18] sm:$0xff]
      %v1974 = vld [vmem:[#allocation2 + $0x20] sm:$0xff]
      %v1975 = vld [vmem:[#allocation2 + $0x28] sm:$0xff]
      %v1976 = vld [vmem:[#allocation2 + $0x30] sm:$0xff]
      %v1977 = vld [vmem:[#allocation2 + $0x38] sm:$0xff]
      %v1978 = vld [vmem:[#allocation2 + $0x40] sm:$0xff]
      %v1979 = vld [vmem:[%s1] sm:$0xff]
      %v1980 = vld [vmem:[%s1 + $0x8] sm:$0xff]
      %v1981 = vld [vmem:[%s1 + $0x10] sm:$0xff]
      %v1982 = vld [vmem:[%s1 + $0x18] sm:$0xff]
      %v1983 = vld [vmem:[%s1 + $0x20] sm:$0xff]
      %v1984 = vld [vmem:[%s1 + $0x28] sm:$0xff]
      %v1985 = vld [vmem:[%s1 + $0x30] sm:$0xff]
      %v1986 = vld [vmem:[%s1 + $0x38] sm:$0xff]
      %1988 = vset.pattern.permute.xlu0 1
      %1989 = vperm.xlu0 %1988, %v1979
      %v1990 = vpop.permute.xlu0 %1989
      %1993 = vset.pattern.permute.xlu0 1
      %1994 = vperm.xlu0 %1993, %v1980
      %v1995 = vpop.permute.xlu0 %1994
      %1998 = vset.pattern.permute.xlu0 1
      %1999 = vperm.xlu0 %1998, %v1981
      %v2000 = vpop.permute.xlu0 %1999
      %2003 = vset.pattern.permute.xlu0 1
      %2004 = vperm.xlu0 %2003, %v1982
      %v2005 = vpop.permute.xlu0 %2004
      %2008 = vset.pattern.permute.xlu0 1
      %2009 = vperm.xlu0 %2008, %v1983
      %v2010 = vpop.permute.xlu0 %2009
      %2013 = vset.pattern.permute.xlu0 1
      %2014 = vperm.xlu0 %2013, %v1984
      %v2015 = vpop.permute.xlu0 %2014
      %2018 = vset.pattern.permute.xlu0 1
      %2019 = vperm.xlu0 %2018, %v1985
      %v2020 = vpop.permute.xlu0 %2019
      %2023 = vset.pattern.permute.xlu0 1
      %2024 = vperm.xlu0 %2023, %v1986
      %v2025 = vpop.permute.xlu0 %2024
      %v2027 = vmul.f32 %v1971, %v1990
      %v2028 = vmul.f32 %v1972, %v1995
      %v2029 = vmul.f32 %v1973, %v2000
      %v2030 = vmul.f32 %v1974, %v2005
      %v2031 = vmul.f32 %v1975, %v2010
      %v2032 = vmul.f32 %v1976, %v2015
      %v2033 = vmul.f32 %v1977, %v2020
      %v2034 = vmul.f32 %v1978, %v2025
      %v2035 = vpack.c.bf16 %v2028, %v2027
      %v2036 = vpack.c.bf16 %v2030, %v2029
      %v2037 = vpack.c.bf16 %v2032, %v2031
      %v2038 = vpack.c.bf16 %v2034, %v2033
      %2039 = vst [vmem:[#allocation3 + $0x8] sm:$0xff] %v2035
      %2040 = vst [vmem:[#allocation3 + $0x50] sm:$0xff] %v2036
      %2041 = vst [vmem:[#allocation3 + $0x98] sm:$0xff] %v2037
      %2042 = vst [vmem:[#allocation3 + $0xe0] sm:$0xff] %v2038
      %v2043 = vld [vmem:[#allocation2 + $0x9] sm:$0xff]
      %v2044 = vld [vmem:[#allocation2 + $0x11] sm:$0xff]
      %v2045 = vld [vmem:[#allocation2 + $0x19] sm:$0xff]
      %v2046 = vld [vmem:[#allocation2 + $0x21] sm:$0xff]
      %v2047 = vld [vmem:[#allocation2 + $0x29] sm:$0xff]
      %v2048 = vld [vmem:[#allocation2 + $0x31] sm:$0xff]
      %v2049 = vld [vmem:[#allocation2 + $0x39] sm:$0xff]
      %v2050 = vld [vmem:[#allocation2 + $0x41] sm:$0xff]
      %v2051 = vld [vmem:[%s1] sm:$0xff]
      %v2052 = vld [vmem:[%s1 + $0x8] sm:$0xff]
      %v2053 = vld [vmem:[%s1 + $0x10] sm:$0xff]
      %v2054 = vld [vmem:[%s1 + $0x18] sm:$0xff]
      %v2055 = vld [vmem:[%s1 + $0x20] sm:$0xff]
      %v2056 = vld [vmem:[%s1 + $0x28] sm:$0xff]
      %v2057 = vld [vmem:[%s1 + $0x30] sm:$0xff]
      %v2058 = vld [vmem:[%s1 + $0x38] sm:$0xff]
      %2060 = vset.pattern.permute.xlu0 2
      %2061 = vperm.xlu0 %2060, %v2051
      %v2062 = vpop.permute.xlu0 %2061
      %2065 = vset.pattern.permute.xlu0 2
      %2066 = vperm.xlu0 %2065, %v2052
      %v2067 = vpop.permute.xlu0 %2066
      %2070 = vset.pattern.permute.xlu0 2
      %2071 = vperm.xlu0 %2070, %v2053
      %v2072 = vpop.permute.xlu0 %2071
      %2075 = vset.pattern.permute.xlu0 2
      %2076 = vperm.xlu0 %2075, %v2054
      %v2077 = vpop.permute.xlu0 %2076
      %2080 = vset.pattern.permute.xlu0 2
      %2081 = vperm.xlu0 %2080, %v2055
      %v2082 = vpop.permute.xlu0 %2081
      %2085 = vset.pattern.permute.xlu0 2
      %2086 = vperm.xlu0 %2085, %v2056
      %v2087 = vpop.permute.xlu0 %2086
      %2090 = vset.pattern.permute.xlu0 2
      %2091 = vperm.xlu0 %2090, %v2057
      %v2092 = vpop.permute.xlu0 %2091
      %2095 = vset.pattern.permute.xlu0 2
      %2096 = vperm.xlu0 %2095, %v2058
      %v2097 = vpop.permute.xlu0 %2096
      %v2099 = vmul.f32 %v2043, %v2062
      %v2100 = vmul.f32 %v2044, %v2067
      %v2101 = vmul.f32 %v2045, %v2072
      %v2102 = vmul.f32 %v2046, %v2077
      %v2103 = vmul.f32 %v2047, %v2082
      %v2104 = vmul.f32 %v2048, %v2087
      %v2105 = vmul.f32 %v2049, %v2092
      %v2106 = vmul.f32 %v2050, %v2097
      %v2107 = vpack.c.bf16 %v2100, %v2099
      %v2108 = vpack.c.bf16 %v2102, %v2101
      %v2109 = vpack.c.bf16 %v2104, %v2103
      %v2110 = vpack.c.bf16 %v2106, %v2105
      %2111 = vst [vmem:[#allocation3 + $0x10] sm:$0xff] %v2107
      %2112 = vst [vmem:[#allocation3 + $0x58] sm:$0xff] %v2108
      %2113 = vst [vmem:[#allocation3 + $0xa0] sm:$0xff] %v2109
      %2114 = vst [vmem:[#allocation3 + $0xe8] sm:$0xff] %v2110
      %v2115 = vld [vmem:[#allocation2 + $0xf] sm:$0xff]
      %v2116 = vld [vmem:[#allocation2 + $0x17] sm:$0xff]
      %v2117 = vld [vmem:[#allocation2 + $0x1f] sm:$0xff]
      %v2118 = vld [vmem:[#allocation2 + $0x27] sm:$0xff]
      %v2119 = vld [vmem:[#allocation2 + $0x2f] sm:$0xff]
      %v2120 = vld [vmem:[#allocation2 + $0x37] sm:$0xff]
      %v2121 = vld [vmem:[#allocation2 + $0x3f] sm:$0xff]
      %v2122 = vld [vmem:[#allocation2 + $0x47] sm:$0xff]
      %v2123 = vld [vmem:[%s1] sm:$0xff]
      %v2124 = vld [vmem:[%s1 + $0x8] sm:$0xff]
      %v2125 = vld [vmem:[%s1 + $0x10] sm:$0xff]
      %v2126 = vld [vmem:[%s1 + $0x18] sm:$0xff]
      %v2127 = vld [vmem:[%s1 + $0x20] sm:$0xff]
      %v2128 = vld [vmem:[%s1 + $0x28] sm:$0xff]
      %v2129 = vld [vmem:[%s1 + $0x30] sm:$0xff]
      %v2130 = vld [vmem:[%s1 + $0x38] sm:$0xff]
      %2132 = vset.pattern.permute.xlu0 3
      %2133 = vperm.xlu0 %2132, %v2123
      %v2134 = vpop.permute.xlu0 %2133
      %2137 = vset.pattern.permute.xlu0 3
      %2138 = vperm.xlu0 %2137, %v2124
      %v2139 = vpop.permute.xlu0 %2138
      %2142 = vset.pattern.permute.xlu0 3
      %2143 = vperm.xlu0 %2142, %v2125
      %v2144 = vpop.permute.xlu0 %2143
      %2147 = vset.pattern.permute.xlu0 3
      %2148 = vperm.xlu0 %2147, %v2126
      %v2149 = vpop.permute.xlu0 %2148
      %2152 = vset.pattern.permute.xlu0 3
      %2153 = vperm.xlu0 %2152, %v2127
      %v2154 = vpop.permute.xlu0 %2153
      %2157 = vset.pattern.permute.xlu0 3
      %2158 = vperm.xlu0 %2157, %v2128
      %v2159 = vpop.permute.xlu0 %2158
      %2162 = vset.pattern.permute.xlu0 3
      %2163 = vperm.xlu0 %2162, %v2129
      %v2164 = vpop.permute.xlu0 %2163
      %2167 = vset.pattern.permute.xlu0 3
      %2168 = vperm.xlu0 %2167, %v2130
      %v2169 = vpop.permute.xlu0 %2168
      %v2171 = vmul.f32 %v2115, %v2134
      %v2172 = vmul.f32 %v2116, %v2139
      %v2173 = vmul.f32 %v2117, %v2144
      %v2174 = vmul.f32 %v2118, %v2149
      %v2175 = vmul.f32 %v2119, %v2154
      %v2176 = vmul.f32 %v2120, %v2159
      %v2177 = vmul.f32 %v2121, %v2164
      %v2178 = vmul.f32 %v2122, %v2169
      %v2179 = vpack.c.bf16 %v2172, %v2171
      %v2180 = vpack.c.bf16 %v2174, %v2173
      %v2181 = vpack.c.bf16 %v2176, %v2175
      %v2182 = vpack.c.bf16 %v2178, %v2177
      %2183 = vst [vmem:[#allocation3 + $0x18] sm:$0xff] %v2179
      %2184 = vst [vmem:[#allocation3 + $0x60] sm:$0xff] %v2180
      %2185 = vst [vmem:[#allocation3 + $0xa8] sm:$0xff] %v2181
      %2186 = vst [vmem:[#allocation3 + $0xf0] sm:$0xff] %v2182
      %v2187 = vld [vmem:[#allocation2 + $0x10] sm:$0xff]
      %v2188 = vld [vmem:[#allocation2 + $0x18] sm:$0xff]
      %v2189 = vld [vmem:[#allocation2 + $0x20] sm:$0xff]
      %v2190 = vld [vmem:[#allocation2 + $0x28] sm:$0xff]
      %v2191 = vld [vmem:[#allocation2 + $0x30] sm:$0xff]
      %v2192 = vld [vmem:[#allocation2 + $0x38] sm:$0xff]
      %v2193 = vld [vmem:[#allocation2 + $0x40] sm:$0xff]
      %v2194 = vld [vmem:[#allocation2 + $0x48] sm:$0xff]
      %v2195 = vpack.c.bf16 %v2188, %v2187
      %v2196 = vpack.c.bf16 %v2190, %v2189
      %v2197 = vpack.c.bf16 %v2192, %v2191
      %v2198 = vpack.c.bf16 %v2194, %v2193
      %2199 = vst [vmem:[#allocation3 + $0x20] sm:$0xff] %v2195
      %2200 = vst [vmem:[#allocation3 + $0x68] sm:$0xff] %v2196
      %2201 = vst [vmem:[#allocation3 + $0xb0] sm:$0xff] %v2197
      %2202 = vst [vmem:[#allocation3 + $0xf8] sm:$0xff] %v2198
      %v2203 = vld [vmem:[#allocation2 + $0x11] sm:$0xff]
      %v2204 = vld [vmem:[#allocation2 + $0x19] sm:$0xff]
      %v2205 = vld [vmem:[#allocation2 + $0x21] sm:$0xff]
      %v2206 = vld [vmem:[#allocation2 + $0x29] sm:$0xff]
      %v2207 = vld [vmem:[#allocation2 + $0x31] sm:$0xff]
      %v2208 = vld [vmem:[#allocation2 + $0x39] sm:$0xff]
      %v2209 = vld [vmem:[#allocation2 + $0x41] sm:$0xff]
      %v2210 = vld [vmem:[#allocation2 + $0x49] sm:$0xff]
      %v2211 = vld [vmem:[%s1] sm:$0xff]
      %v2212 = vld [vmem:[%s1 + $0x8] sm:$0xff]
      %v2213 = vld [vmem:[%s1 + $0x10] sm:$0xff]
      %v2214 = vld [vmem:[%s1 + $0x18] sm:$0xff]
      %v2215 = vld [vmem:[%s1 + $0x20] sm:$0xff]
      %v2216 = vld [vmem:[%s1 + $0x28] sm:$0xff]
      %v2217 = vld [vmem:[%s1 + $0x30] sm:$0xff]
      %v2218 = vld [vmem:[%s1 + $0x38] sm:$0xff]
      %2220 = vset.pattern.permute.xlu0 5
      %2221 = vperm.xlu0 %2220, %v2211
      %v2222 = vpop.permute.xlu0 %2221
      %2225 = vset.pattern.permute.xlu0 5
      %2226 = vperm.xlu0 %2225, %v2212
      %v2227 = vpop.permute.xlu0 %2226
      %2230 = vset.pattern.permute.xlu0 5
      %2231 = vperm.xlu0 %2230, %v2213
      %v2232 = vpop.permute.xlu0 %2231
      %2235 = vset.pattern.permute.xlu0 5
      %2236 = vperm.xlu0 %2235, %v2214
      %v2237 = vpop.permute.xlu0 %2236
      %2240 = vset.pattern.permute.xlu0 5
      %2241 = vperm.xlu0 %2240, %v2215
      %v2242 = vpop.permute.xlu0 %2241
      %2245 = vset.pattern.permute.xlu0 5
      %2246 = vperm.xlu0 %2245, %v2216
      %v2247 = vpop.permute.xlu0 %2246
      %2250 = vset.pattern.permute.xlu0 5
      %2251 = vperm.xlu0 %2250, %v2217
      %v2252 = vpop.permute.xlu0 %2251
      %2255 = vset.pattern.permute.xlu0 5
      %2256 = vperm.xlu0 %2255, %v2218
      %v2257 = vpop.permute.xlu0 %2256
      %v2259 = vmul.f32 %v2203, %v2222
      %v2260 = vmul.f32 %v2204, %v2227
      %v2261 = vmul.f32 %v2205, %v2232
      %v2262 = vmul.f32 %v2206, %v2237
      %v2263 = vmul.f32 %v2207, %v2242
      %v2264 = vmul.f32 %v2208, %v2247
      %v2265 = vmul.f32 %v2209, %v2252
      %v2266 = vmul.f32 %v2210, %v2257
      %v2267 = vpack.c.bf16 %v2260, %v2259
      %v2268 = vpack.c.bf16 %v2262, %v2261
      %v2269 = vpack.c.bf16 %v2264, %v2263
      %v2270 = vpack.c.bf16 %v2266, %v2265
      %2271 = vst [vmem:[#allocation3 + $0x28] sm:$0xff] %v2267
      %2272 = vst [vmem:[#allocation3 + $0x70] sm:$0xff] %v2268
      %2273 = vst [vmem:[#allocation3 + $0xb8] sm:$0xff] %v2269
      %2274 = vst [vmem:[#allocation3 + $0x100] sm:$0xff] %v2270
      %v2275 = vld [vmem:[#allocation2 + $0x17] sm:$0xff]
      %v2276 = vld [vmem:[#allocation2 + $0x1f] sm:$0xff]
      %v2277 = vld [vmem:[#allocation2 + $0x27] sm:$0xff]
      %v2278 = vld [vmem:[#allocation2 + $0x2f] sm:$0xff]
      %v2279 = vld [vmem:[#allocation2 + $0x37] sm:$0xff]
      %v2280 = vld [vmem:[#allocation2 + $0x3f] sm:$0xff]
      %v2281 = vld [vmem:[#allocation2 + $0x47] sm:$0xff]
      %v2282 = vld [vmem:[#allocation2 + $0x4f] sm:$0xff]
      %v2283 = vld [vmem:[%s1] sm:$0xff]
      %v2284 = vld [vmem:[%s1 + $0x8] sm:$0xff]
      %v2285 = vld [vmem:[%s1 + $0x10] sm:$0xff]
      %v2286 = vld [vmem:[%s1 + $0x18] sm:$0xff]
      %v2287 = vld [vmem:[%s1 + $0x20] sm:$0xff]
      %v2288 = vld [vmem:[%s1 + $0x28] sm:$0xff]
      %v2289 = vld [vmem:[%s1 + $0x30] sm:$0xff]
      %v2290 = vld [vmem:[%s1 + $0x38] sm:$0xff]
      %2292 = vset.pattern.permute.xlu0 6
      %2293 = vperm.xlu0 %2292, %v2283
      %v2294 = vpop.permute.xlu0 %2293
      %2297 = vset.pattern.permute.xlu0 6
      %2298 = vperm.xlu0 %2297, %v2284
      %v2299 = vpop.permute.xlu0 %2298
      %2302 = vset.pattern.permute.xlu0 6
      %2303 = vperm.xlu0 %2302, %v2285
      %v2304 = vpop.permute.xlu0 %2303
      %2307 = vset.pattern.permute.xlu0 6
      %2308 = vperm.xlu0 %2307, %v2286
      %v2309 = vpop.permute.xlu0 %2308
      %2312 = vset.pattern.permute.xlu0 6
      %2313 = vperm.xlu0 %2312, %v2287
      %v2314 = vpop.permute.xlu0 %2313
      %2317 = vset.pattern.permute.xlu0 6
      %2318 = vperm.xlu0 %2317, %v2288
      %v2319 = vpop.permute.xlu0 %2318
      %2322 = vset.pattern.permute.xlu0 6
      %2323 = vperm.xlu0 %2322, %v2289
      %v2324 = vpop.permute.xlu0 %2323
      %2327 = vset.pattern.permute.xlu0 6
      %2328 = vperm.xlu0 %2327, %v2290
      %v2329 = vpop.permute.xlu0 %2328
      %v2331 = vmul.f32 %v2275, %v2294
      %v2332 = vmul.f32 %v2276, %v2299
      %v2333 = vmul.f32 %v2277, %v2304
      %v2334 = vmul.f32 %v2278, %v2309
      %v2335 = vmul.f32 %v2279, %v2314
      %v2336 = vmul.f32 %v2280, %v2319
      %v2337 = vmul.f32 %v2281, %v2324
      %v2338 = vmul.f32 %v2282, %v2329
      %v2339 = vpack.c.bf16 %v2332, %v2331
      %v2340 = vpack.c.bf16 %v2334, %v2333
      %v2341 = vpack.c.bf16 %v2336, %v2335
      %v2342 = vpack.c.bf16 %v2338, %v2337
      %2343 = vst [vmem:[#allocation3 + $0x30] sm:$0xff] %v2339
      %2344 = vst [vmem:[#allocation3 + $0x78] sm:$0xff] %v2340
      %2345 = vst [vmem:[#allocation3 + $0xc0] sm:$0xff] %v2341
      %2346 = vst [vmem:[#allocation3 + $0x108] sm:$0xff] %v2342
      %v2347 = vld [vmem:[#allocation2 + $0x18] sm:$0xff]
      %v2348 = vld [vmem:[#allocation2 + $0x20] sm:$0xff]
      %v2349 = vld [vmem:[#allocation2 + $0x28] sm:$0xff]
      %v2350 = vld [vmem:[#allocation2 + $0x30] sm:$0xff]
      %v2351 = vld [vmem:[#allocation2 + $0x38] sm:$0xff]
      %v2352 = vld [vmem:[#allocation2 + $0x40] sm:$0xff]
      %v2353 = vld [vmem:[#allocation2 + $0x48] sm:$0xff]
      %v2354 = vld [vmem:[#allocation2 + $0x50] sm:$0xff]
      %v2355 = vld [vmem:[%s1] sm:$0xff]
      %v2356 = vld [vmem:[%s1 + $0x8] sm:$0xff]
      %v2357 = vld [vmem:[%s1 + $0x10] sm:$0xff]
      %v2358 = vld [vmem:[%s1 + $0x18] sm:$0xff]
      %v2359 = vld [vmem:[%s1 + $0x20] sm:$0xff]
      %v2360 = vld [vmem:[%s1 + $0x28] sm:$0xff]
      %v2361 = vld [vmem:[%s1 + $0x30] sm:$0xff]
      %v2362 = vld [vmem:[%s1 + $0x38] sm:$0xff]
      %2364 = vset.pattern.permute.xlu0 7
      %2365 = vperm.xlu0 %2364, %v2355
      %v2366 = vpop.permute.xlu0 %2365
      %2369 = vset.pattern.permute.xlu0 7
      %2370 = vperm.xlu0 %2369, %v2356
      %v2371 = vpop.permute.xlu0 %2370
      %2374 = vset.pattern.permute.xlu0 7
      %2375 = vperm.xlu0 %2374, %v2357
      %v2376 = vpop.permute.xlu0 %2375
      %2379 = vset.pattern.permute.xlu0 7
      %2380 = vperm.xlu0 %2379, %v2358
      %v2381 = vpop.permute.xlu0 %2380
      %2384 = vset.pattern.permute.xlu0 7
      %2385 = vperm.xlu0 %2384, %v2359
      %v2386 = vpop.permute.xlu0 %2385
      %2389 = vset.pattern.permute.xlu0 7
      %2390 = vperm.xlu0 %2389, %v2360
      %v2391 = vpop.permute.xlu0 %2390
      %2394 = vset.pattern.permute.xlu0 7
      %2395 = vperm.xlu0 %2394, %v2361
      %v2396 = vpop.permute.xlu0 %2395
      %2399 = vset.pattern.permute.xlu0 7
      %2400 = vperm.xlu0 %2399, %v2362
      %v2401 = vpop.permute.xlu0 %2400
      %v2403 = vmul.f32 %v2347, %v2366
      %v2404 = vmul.f32 %v2348, %v2371
      %v2405 = vmul.f32 %v2349, %v2376
      %v2406 = vmul.f32 %v2350, %v2381
      %v2407 = vmul.f32 %v2351, %v2386
      %v2408 = vmul.f32 %v2352, %v2391
      %v2409 = vmul.f32 %v2353, %v2396
      %v2410 = vmul.f32 %v2354, %v2401
      %v2411 = vpack.c.bf16 %v2404, %v2403
      %v2412 = vpack.c.bf16 %v2406, %v2405
      %v2413 = vpack.c.bf16 %v2408, %v2407
      %v2414 = vpack.c.bf16 %v2410, %v2409
      %2415 = vst [vmem:[#allocation3 + $0x38] sm:$0xff] %v2411
      %2416 = vst [vmem:[#allocation3 + $0x80] sm:$0xff] %v2412
      %2417 = vst [vmem:[#allocation3 + $0xc8] sm:$0xff] %v2413
      %2418 = vst [vmem:[#allocation3 + $0x110] sm:$0xff] %v2414
      %v2419 = vld [vmem:[#allocation2 + $0x19] sm:$0xff]
      %v2420 = vld [vmem:[#allocation2 + $0x21] sm:$0xff]
      %v2421 = vld [vmem:[#allocation2 + $0x29] sm:$0xff]
      %v2422 = vld [vmem:[#allocation2 + $0x31] sm:$0xff]
      %v2423 = vld [vmem:[#allocation2 + $0x39] sm:$0xff]
      %v2424 = vld [vmem:[#allocation2 + $0x41] sm:$0xff]
      %v2425 = vld [vmem:[#allocation2 + $0x49] sm:$0xff]
      %v2426 = vld [vmem:[#allocation2 + $0x51] sm:$0xff]
      %v2427 = vld [vmem:[%s1] sm:$0xff]
      %v2428 = vld [vmem:[%s1 + $0x8] sm:$0xff]
      %v2429 = vld [vmem:[%s1 + $0x10] sm:$0xff]
      %v2430 = vld [vmem:[%s1 + $0x18] sm:$0xff]
      %v2431 = vld [vmem:[%s1 + $0x20] sm:$0xff]
      %v2432 = vld [vmem:[%s1 + $0x28] sm:$0xff]
      %v2433 = vld [vmem:[%s1 + $0x30] sm:$0xff]
      %v2434 = vld [vmem:[%s1 + $0x38] sm:$0xff]
      %2436 = vset.pattern.permute.xlu0 8
      %2437 = vperm.xlu0 %2436, %v2427
      %v2438 = vpop.permute.xlu0 %2437
      %2441 = vset.pattern.permute.xlu0 8
      %2442 = vperm.xlu0 %2441, %v2428
      %v2443 = vpop.permute.xlu0 %2442
      %2446 = vset.pattern.permute.xlu0 8
      %2447 = vperm.xlu0 %2446, %v2429
      %v2448 = vpop.permute.xlu0 %2447
      %2451 = vset.pattern.permute.xlu0 8
      %2452 = vperm.xlu0 %2451, %v2430
      %v2453 = vpop.permute.xlu0 %2452
      %2456 = vset.pattern.permute.xlu0 8
      %2457 = vperm.xlu0 %2456, %v2431
      %v2458 = vpop.permute.xlu0 %2457
      %2461 = vset.pattern.permute.xlu0 8
      %2462 = vperm.xlu0 %2461, %v2432
      %v2463 = vpop.permute.xlu0 %2462
      %2466 = vset.pattern.permute.xlu0 8
      %2467 = vperm.xlu0 %2466, %v2433
      %v2468 = vpop.permute.xlu0 %2467
      %2471 = vset.pattern.permute.xlu0 8
      %2472 = vperm.xlu0 %2471, %v2434
      %v2473 = vpop.permute.xlu0 %2472
      %v2475 = vmul.f32 %v2419, %v2438
      %v2476 = vmul.f32 %v2420, %v2443
      %v2477 = vmul.f32 %v2421, %v2448
      %v2478 = vmul.f32 %v2422, %v2453
      %v2479 = vmul.f32 %v2423, %v2458
      %v2480 = vmul.f32 %v2424, %v2463
      %v2481 = vmul.f32 %v2425, %v2468
      %v2482 = vmul.f32 %v2426, %v2473
      %v2483 = vpack.c.bf16 %v2476, %v2475
      %v2484 = vpack.c.bf16 %v2478, %v2477
      %v2485 = vpack.c.bf16 %v2480, %v2479
      %v2486 = vpack.c.bf16 %v2482, %v2481
      %2487 = vst [vmem:[#allocation3 + $0x40] sm:$0xff] %v2483
      %2488 = vst [vmem:[#allocation3 + $0x88] sm:$0xff] %v2484
      %2489 = vst [vmem:[#allocation3 + $0xd0] sm:$0xff] %v2485
      %2490 = vst [vmem:[#allocation3 + $0x118] sm:$0xff] %v2486
      %v2491 = vld [vmem:[#allocation3] sm:$0xff]
      %v2492 = vld [vmem:[#allocation3 + $0x8] sm:$0xff]
      %v2493 = vld [vmem:[#allocation3 + $0x10] sm:$0xff]
      %v2494 = vld [vmem:[#allocation3 + $0x18] sm:$0xff]
      %v2495 = vld [vmem:[#allocation3 + $0x20] sm:$0xff]
      %v2496 = vld [vmem:[#allocation3 + $0x28] sm:$0xff]
      %v2497 = vld [vmem:[#allocation3 + $0x30] sm:$0xff]
      %v2498 = vld [vmem:[#allocation3 + $0x38] sm:$0xff]
      %v2499 = vld [vmem:[#allocation3 + $0x40] sm:$0xff]
      %v2500 = vld [vmem:[#allocation3 + $0x48] sm:$0xff]
      %v2501 = vld [vmem:[#allocation3 + $0x50] sm:$0xff]
      %v2502 = vld [vmem:[#allocation3 + $0x58] sm:$0xff]
      %v2503 = vld [vmem:[#allocation3 + $0x60] sm:$0xff]
      %v2504 = vld [vmem:[#allocation3 + $0x68] sm:$0xff]
      %v2505 = vld [vmem:[#allocation3 + $0x70] sm:$0xff]
      %v2506 = vld [vmem:[#allocation3 + $0x78] sm:$0xff]
      %v2507 = vld [vmem:[#allocation3 + $0x80] sm:$0xff]
      %v2508 = vld [vmem:[#allocation3 + $0x88] sm:$0xff]
      %v2509 = vld [vmem:[#allocation3 + $0x90] sm:$0xff]
      %v2510 = vld [vmem:[#allocation3 + $0x98] sm:$0xff]
      %v2511 = vld [vmem:[#allocation3 + $0xa0] sm:$0xff]
      %v2512 = vld [vmem:[#allocation3 + $0xa8] sm:$0xff]
      %v2513 = vld [vmem:[#allocation3 + $0xb0] sm:$0xff]
      %v2514 = vld [vmem:[#allocation3 + $0xb8] sm:$0xff]
      %v2515 = vld [vmem:[#allocation3 + $0xc0] sm:$0xff]
      %v2516 = vld [vmem:[#allocation3 + $0xc8] sm:$0xff]
      %v2517 = vld [vmem:[#allocation3 + $0xd0] sm:$0xff]
      %v2518 = vld [vmem:[#allocation3 + $0xd8] sm:$0xff]
      %v2519 = vld [vmem:[#allocation3 + $0xe0] sm:$0xff]
      %v2520 = vld [vmem:[#allocation3 + $0xe8] sm:$0xff]
      %v2521 = vld [vmem:[#allocation3 + $0xf0] sm:$0xff]
      %v2522 = vld [vmem:[#allocation3 + $0xf8] sm:$0xff]
      %v2523 = vld [vmem:[#allocation3 + $0x100] sm:$0xff]
      %v2524 = vld [vmem:[#allocation3 + $0x108] sm:$0xff]
      %v2525 = vld [vmem:[#allocation3 + $0x110] sm:$0xff]
      %v2526 = vld [vmem:[#allocation3 + $0x118] sm:$0xff]
      %v2527 = vld [vmem:[%s7] sm:$0xf]
      %v2528 = vld [vmem:[%s7 + $0x4] sm:$0xf]
      %v2529 = vld [vmem:[%s7 + $0x8] sm:$0xf]
      %v2530 = vld [vmem:[%s7 + $0xc] sm:$0xf]
      %v2531 = vld [vmem:[%s7 + $0x10] sm:$0xf]
      %v2532 = vld [vmem:[%s7 + $0x14] sm:$0xf]
      %v2533 = vld [vmem:[%s7 + $0x18] sm:$0xf]
      %v2534 = vld [vmem:[%s7 + $0x1c] sm:$0xf]
      %v2535 = vld [vmem:[%s7 + $0x20] sm:$0xf]
      %v2536 = vld [vmem:[%s7 + $0x24] sm:$0xf]
      %v2537 = vld [vmem:[%s7 + $0x28] sm:$0xf]
      %v2538 = vld [vmem:[%s7 + $0x2c] sm:$0xf]
      %v2539 = vld [vmem:[%s7 + $0x30] sm:$0xf]
      %v2540 = vld [vmem:[%s7 + $0x34] sm:$0xf]
      %v2541 = vld [vmem:[%s7 + $0x38] sm:$0xf]
      %v2542 = vld [vmem:[%s7 + $0x3c] sm:$0xf]
      %v2543 = vld [vmem:[%s7 + $0x40] sm:$0xf]
      %v2544 = vld [vmem:[%s7 + $0x44] sm:$0xf]
      %v2545 = vld [vmem:[%s7 + $0x48] sm:$0xf]
      %v2546 = vld [vmem:[%s7 + $0x4c] sm:$0xf]
      %v2547 = vld [vmem:[%s7 + $0x50] sm:$0xf]
      %v2548 = vld [vmem:[%s7 + $0x54] sm:$0xf]
      %v2549 = vld [vmem:[%s7 + $0x58] sm:$0xf]
      %v2550 = vld [vmem:[%s7 + $0x5c] sm:$0xf]
      %v2551 = vld [vmem:[%s7 + $0x60] sm:$0xf]
      %v2552 = vld [vmem:[%s7 + $0x64] sm:$0xf]
      %v2553 = vld [vmem:[%s7 + $0x68] sm:$0xf]
      %v2554 = vld [vmem:[%s7 + $0x6c] sm:$0xf]
      %v2555 = vld [vmem:[%s7 + $0x70] sm:$0xf]
      %v2556 = vld [vmem:[%s7 + $0x74] sm:$0xf]
      %v2557 = vld [vmem:[%s7 + $0x78] sm:$0xf]
      %v2558 = vld [vmem:[%s7 + $0x7c] sm:$0xf]
      %v2559 = vld [vmem:[%s7 + $0x80] sm:$0xf]
      %v2560 = vld [vmem:[%s7 + $0x84] sm:$0xf]
      %v2561 = vld [vmem:[%s7 + $0x88] sm:$0xf]
      %v2562 = vld [vmem:[%s7 + $0x8c] sm:$0xf]
      %v2563 = vld [vmem:[%s7 + $0x90] sm:$0xf]
      %v2564 = vld [vmem:[%s7 + $0x94] sm:$0xf]
      %v2565 = vld [vmem:[%s7 + $0x98] sm:$0xf]
      %v2566 = vld [vmem:[%s7 + $0x9c] sm:$0xf]
      %v2567 = vld [vmem:[%s7 + $0xa0] sm:$0xf]
      %v2568 = vld [vmem:[%s7 + $0xa4] sm:$0xf]
      %v2569 = vld [vmem:[%s7 + $0xa8] sm:$0xf]
      %v2570 = vld [vmem:[%s7 + $0xac] sm:$0xf]
      %v2571 = vld [vmem:[%s7 + $0xb0] sm:$0xf]
      %v2572 = vld [vmem:[%s7 + $0xb4] sm:$0xf]
      %v2573 = vld [vmem:[%s7 + $0xb8] sm:$0xf]
      %v2574 = vld [vmem:[%s7 + $0xbc] sm:$0xf]
      %v2575 = vld [vmem:[%s7 + $0xc0] sm:$0xf]
      %v2576 = vld [vmem:[%s7 + $0xc4] sm:$0xf]
      %v2577 = vld [vmem:[%s7 + $0xc8] sm:$0xf]
      %v2578 = vld [vmem:[%s7 + $0xcc] sm:$0xf]
      %v2579 = vld [vmem:[%s7 + $0xd0] sm:$0xf]
      %v2580 = vld [vmem:[%s7 + $0xd4] sm:$0xf]
      %v2581 = vld [vmem:[%s7 + $0xd8] sm:$0xf]
      %v2582 = vld [vmem:[%s7 + $0xdc] sm:$0xf]
      %v2583 = vld [vmem:[%s7 + $0xe0] sm:$0xf]
      %v2584 = vld [vmem:[%s7 + $0xe4] sm:$0xf]
      %v2585 = vld [vmem:[%s7 + $0xe8] sm:$0xf]
      %v2586 = vld [vmem:[%s7 + $0xec] sm:$0xf]
      %v2587 = vld [vmem:[%s7 + $0xf0] sm:$0xf]
      %v2588 = vld [vmem:[%s7 + $0xf4] sm:$0xf]
      %v2589 = vld [vmem:[%s7 + $0xf8] sm:$0xf]
      %v2590 = vld [vmem:[%s7 + $0xfc] sm:$0xf]
      %v2591 = vld [vmem:[%s7 + $0x100] sm:$0xf]
      %v2592 = vld [vmem:[%s7 + $0x104] sm:$0xf]
      %v2593 = vld [vmem:[%s7 + $0x108] sm:$0xf]
      %v2594 = vld [vmem:[%s7 + $0x10c] sm:$0xf]
      %v2595 = vld [vmem:[%s7 + $0x110] sm:$0xf]
      %v2596 = vld [vmem:[%s7 + $0x114] sm:$0xf]
      %v2597 = vld [vmem:[%s7 + $0x118] sm:$0xf]
      %v2598 = vld [vmem:[%s7 + $0x11c] sm:$0xf]
      %v2599 = vld [vmem:[%s7 + $0x120] sm:$0xf]
      %v2600 = vld [vmem:[%s7 + $0x124] sm:$0xf]
      %v2601 = vld [vmem:[%s7 + $0x128] sm:$0xf]
      %v2602 = vld [vmem:[%s7 + $0x12c] sm:$0xf]
      %v2603 = vld [vmem:[%s7 + $0x130] sm:$0xf]
      %v2604 = vld [vmem:[%s7 + $0x134] sm:$0xf]
      %v2605 = vld [vmem:[%s7 + $0x138] sm:$0xf]
      %v2606 = vld [vmem:[%s7 + $0x13c] sm:$0xf]
      %v2607 = vld [vmem:[%s7 + $0x140] sm:$0xf]
      %v2608 = vld [vmem:[%s7 + $0x144] sm:$0xf]
      %v2609 = vld [vmem:[%s7 + $0x148] sm:$0xf]
      %v2610 = vld [vmem:[%s7 + $0x14c] sm:$0xf]
      %v2611 = vld [vmem:[%s7 + $0x150] sm:$0xf]
      %v2612 = vld [vmem:[%s7 + $0x154] sm:$0xf]
      %v2613 = vld [vmem:[%s7 + $0x158] sm:$0xf]
      %v2614 = vld [vmem:[%s7 + $0x15c] sm:$0xf]
      %v2615 = vld [vmem:[%s7 + $0x160] sm:$0xf]
      %v2616 = vld [vmem:[%s7 + $0x164] sm:$0xf]
      %v2617 = vld [vmem:[%s7 + $0x168] sm:$0xf]
      %v2618 = vld [vmem:[%s7 + $0x16c] sm:$0xf]
      %v2619 = vld [vmem:[%s7 + $0x170] sm:$0xf]
      %v2620 = vld [vmem:[%s7 + $0x174] sm:$0xf]
      %v2621 = vld [vmem:[%s7 + $0x178] sm:$0xf]
      %v2622 = vld [vmem:[%s7 + $0x17c] sm:$0xf]
      %v2623 = vld [vmem:[%s7 + $0x180] sm:$0xf]
      %v2624 = vld [vmem:[%s7 + $0x184] sm:$0xf]
      %v2625 = vld [vmem:[%s7 + $0x188] sm:$0xf]
      %v2626 = vld [vmem:[%s7 + $0x18c] sm:$0xf]
      %v2627 = vld [vmem:[%s7 + $0x190] sm:$0xf]
      %v2628 = vld [vmem:[%s7 + $0x194] sm:$0xf]
      %v2629 = vld [vmem:[%s7 + $0x198] sm:$0xf]
      %v2630 = vld [vmem:[%s7 + $0x19c] sm:$0xf]
      %v2631 = vld [vmem:[%s7 + $0x1a0] sm:$0xf]
      %v2632 = vld [vmem:[%s7 + $0x1a4] sm:$0xf]
      %v2633 = vld [vmem:[%s7 + $0x1a8] sm:$0xf]
      %v2634 = vld [vmem:[%s7 + $0x1ac] sm:$0xf]
      %v2635 = vld [vmem:[%s7 + $0x1b0] sm:$0xf]
      %v2636 = vld [vmem:[%s7 + $0x1b4] sm:$0xf]
      %v2637 = vld [vmem:[%s7 + $0x1b8] sm:$0xf]
      %v2638 = vld [vmem:[%s7 + $0x1bc] sm:$0xf]
      %v2639 = vld [vmem:[%s7 + $0x1c0] sm:$0xf]
      %v2640 = vld [vmem:[%s7 + $0x1c4] sm:$0xf]
      %v2641 = vld [vmem:[%s7 + $0x1c8] sm:$0xf]
      %v2642 = vld [vmem:[%s7 + $0x1cc] sm:$0xf]
      %v2643 = vld [vmem:[%s7 + $0x1d0] sm:$0xf]
      %v2644 = vld [vmem:[%s7 + $0x1d4] sm:$0xf]
      %v2645 = vld [vmem:[%s7 + $0x1d8] sm:$0xf]
      %v2646 = vld [vmem:[%s7 + $0x1dc] sm:$0xf]
      %v2647 = vld [vmem:[%s7 + $0x1e0] sm:$0xf]
      %v2648 = vld [vmem:[%s7 + $0x1e4] sm:$0xf]
      %v2649 = vld [vmem:[%s7 + $0x1e8] sm:$0xf]
      %v2650 = vld [vmem:[%s7 + $0x1ec] sm:$0xf]
      %v2651 = vld [vmem:[%s7 + $0x1f0] sm:$0xf]
      %v2652 = vld [vmem:[%s7 + $0x1f4] sm:$0xf]
      %v2653 = vld [vmem:[%s7 + $0x1f8] sm:$0xf]
      %v2654 = vld [vmem:[%s7 + $0x1fc] sm:$0xf]
      %v2655 = vld [vmem:[%s7 + $0x200] sm:$0xf]
      %v2656 = vld [vmem:[%s7 + $0x204] sm:$0xf]
      %v2657 = vld [vmem:[%s7 + $0x208] sm:$0xf]
      %v2658 = vld [vmem:[%s7 + $0x20c] sm:$0xf]
      %v2659 = vld [vmem:[%s7 + $0x210] sm:$0xf]
      %v2660 = vld [vmem:[%s7 + $0x214] sm:$0xf]
      %v2661 = vld [vmem:[%s7 + $0x218] sm:$0xf]
      %v2662 = vld [vmem:[%s7 + $0x21c] sm:$0xf]
      %v2663 = vld [vmem:[%s7 + $0x220] sm:$0xf]
      %v2664 = vld [vmem:[%s7 + $0x224] sm:$0xf]
      %v2665 = vld [vmem:[%s7 + $0x228] sm:$0xf]
      %v2666 = vld [vmem:[%s7 + $0x22c] sm:$0xf]
      %v2667 = vld [vmem:[%s7 + $0x230] sm:$0xf]
      %v2668 = vld [vmem:[%s7 + $0x234] sm:$0xf]
      %v2669 = vld [vmem:[%s7 + $0x238] sm:$0xf]
      %v2670 = vld [vmem:[%s7 + $0x23c] sm:$0xf]
      %v2671 = vld [vmem:[%s8] sm:$0x1]
      %v2673 = vlaneseq
      %v2674 = vshrl.u32 %v2673, 7
      %v2675 = vsub.s32 0, %v2674
      %v2676 = vrot.slane %v2671, %v2675
      %v2822 = vunpack.c.l.b16 %v2527
      %v2823 = vunpack.c.l.b16 %v2528
      %v2824 = vunpack.c.l.b16 %v2529
      %v2825 = vunpack.c.l.b16 %v2530
      %v2826 = vunpack.c.l.b16 %v2531
      %v2827 = vunpack.c.l.b16 %v2532
      %v2828 = vunpack.c.l.b16 %v2533
      %v2829 = vunpack.c.l.b16 %v2534
      %v2830 = vunpack.c.l.b16 %v2535
      %v2831 = vunpack.c.l.b16 %v2536
      %v2832 = vunpack.c.l.b16 %v2537
      %v2833 = vunpack.c.l.b16 %v2538
      %v2834 = vunpack.c.l.b16 %v2539
      %v2835 = vunpack.c.l.b16 %v2540
      %v2836 = vunpack.c.l.b16 %v2541
      %v2837 = vunpack.c.l.b16 %v2542
      %v2838 = vunpack.c.l.b16 %v2543
      %v2839 = vunpack.c.l.b16 %v2544
      %v2840 = vunpack.c.l.b16 %v2545
      %v2841 = vunpack.c.l.b16 %v2546
      %v2842 = vunpack.c.l.b16 %v2547
      %v2843 = vunpack.c.l.b16 %v2548
      %v2844 = vunpack.c.l.b16 %v2549
      %v2845 = vunpack.c.l.b16 %v2550
      %v2846 = vunpack.c.l.b16 %v2551
      %v2847 = vunpack.c.l.b16 %v2552
      %v2848 = vunpack.c.l.b16 %v2553
      %v2849 = vunpack.c.l.b16 %v2554
      %v2850 = vunpack.c.l.b16 %v2555
      %v2851 = vunpack.c.l.b16 %v2556
      %v2852 = vunpack.c.l.b16 %v2557
      %v2853 = vunpack.c.l.b16 %v2558
      %v2854 = vunpack.c.l.b16 %v2559
      %v2855 = vunpack.c.l.b16 %v2560
      %v2856 = vunpack.c.l.b16 %v2561
      %v2857 = vunpack.c.l.b16 %v2562
      %v2858 = vunpack.c.l.b16 %v2563
      %v2859 = vunpack.c.l.b16 %v2564
      %v2860 = vunpack.c.l.b16 %v2565
      %v2861 = vunpack.c.l.b16 %v2566
      %v2862 = vunpack.c.l.b16 %v2567
      %v2863 = vunpack.c.l.b16 %v2568
      %v2864 = vunpack.c.l.b16 %v2569
      %v2865 = vunpack.c.l.b16 %v2570
      %v2866 = vunpack.c.l.b16 %v2571
      %v2867 = vunpack.c.l.b16 %v2572
      %v2868 = vunpack.c.l.b16 %v2573
      %v2869 = vunpack.c.l.b16 %v2574
      %v2870 = vunpack.c.l.b16 %v2575
      %v2871 = vunpack.c.l.b16 %v2576
      %v2872 = vunpack.c.l.b16 %v2577
      %v2873 = vunpack.c.l.b16 %v2578
      %v2874 = vunpack.c.l.b16 %v2579
      %v2875 = vunpack.c.l.b16 %v2580
      %v2876 = vunpack.c.l.b16 %v2581
      %v2877 = vunpack.c.l.b16 %v2582
      %v2878 = vunpack.c.l.b16 %v2583
      %v2879 = vunpack.c.l.b16 %v2584
      %v2880 = vunpack.c.l.b16 %v2585
      %v2881 = vunpack.c.l.b16 %v2586
      %v2882 = vunpack.c.l.b16 %v2587
      %v2883 = vunpack.c.l.b16 %v2588
      %v2884 = vunpack.c.l.b16 %v2589
      %v2885 = vunpack.c.l.b16 %v2590
      %v2886 = vunpack.c.l.b16 %v2591
      %v2887 = vunpack.c.l.b16 %v2592
      %v2888 = vunpack.c.l.b16 %v2593
      %v2889 = vunpack.c.l.b16 %v2594
      %v2890 = vunpack.c.l.b16 %v2595
      %v2891 = vunpack.c.l.b16 %v2596
      %v2892 = vunpack.c.l.b16 %v2597
      %v2893 = vunpack.c.l.b16 %v2598
      %v2894 = vunpack.c.l.b16 %v2599
      %v2895 = vunpack.c.l.b16 %v2600
      %v2896 = vunpack.c.l.b16 %v2601
      %v2897 = vunpack.c.l.b16 %v2602
      %v2898 = vunpack.c.l.b16 %v2603
      %v2899 = vunpack.c.l.b16 %v2604
      %v2900 = vunpack.c.l.b16 %v2605
      %v2901 = vunpack.c.l.b16 %v2606
      %v2902 = vunpack.c.l.b16 %v2607
      %v2903 = vunpack.c.l.b16 %v2608
      %v2904 = vunpack.c.l.b16 %v2609
      %v2905 = vunpack.c.l.b16 %v2610
      %v2906 = vunpack.c.l.b16 %v2611
      %v2907 = vunpack.c.l.b16 %v2612
      %v2908 = vunpack.c.l.b16 %v2613
      %v2909 = vunpack.c.l.b16 %v2614
      %v2910 = vunpack.c.l.b16 %v2615
      %v2911 = vunpack.c.l.b16 %v2616
      %v2912 = vunpack.c.l.b16 %v2617
      %v2913 = vunpack.c.l.b16 %v2618
      %v2914 = vunpack.c.l.b16 %v2619
      %v2915 = vunpack.c.l.b16 %v2620
      %v2916 = vunpack.c.l.b16 %v2621
      %v2917 = vunpack.c.l.b16 %v2622
      %v2918 = vunpack.c.l.b16 %v2623
      %v2919 = vunpack.c.l.b16 %v2624
      %v2920 = vunpack.c.l.b16 %v2625
      %v2921 = vunpack.c.l.b16 %v2626
      %v2922 = vunpack.c.l.b16 %v2627
      %v2923 = vunpack.c.l.b16 %v2628
      %v2924 = vunpack.c.l.b16 %v2629
      %v2925 = vunpack.c.l.b16 %v2630
      %v2926 = vunpack.c.l.b16 %v2631
      %v2927 = vunpack.c.l.b16 %v2632
      %v2928 = vunpack.c.l.b16 %v2633
      %v2929 = vunpack.c.l.b16 %v2634
      %v2930 = vunpack.c.l.b16 %v2635
      %v2931 = vunpack.c.l.b16 %v2636
      %v2932 = vunpack.c.l.b16 %v2637
      %v2933 = vunpack.c.l.b16 %v2638
      %v2934 = vunpack.c.l.b16 %v2639
      %v2935 = vunpack.c.l.b16 %v2640
      %v2936 = vunpack.c.l.b16 %v2641
      %v2937 = vunpack.c.l.b16 %v2642
      %v2938 = vunpack.c.l.b16 %v2643
      %v2939 = vunpack.c.l.b16 %v2644
      %v2940 = vunpack.c.l.b16 %v2645
      %v2941 = vunpack.c.l.b16 %v2646
      %v2942 = vunpack.c.l.b16 %v2647
      %v2943 = vunpack.c.l.b16 %v2648
      %v2944 = vunpack.c.l.b16 %v2649
      %v2945 = vunpack.c.l.b16 %v2650
      %v2946 = vunpack.c.l.b16 %v2651
      %v2947 = vunpack.c.l.b16 %v2652
      %v2948 = vunpack.c.l.b16 %v2653
      %v2949 = vunpack.c.l.b16 %v2654
      %v2950 = vunpack.c.l.b16 %v2655
      %v2951 = vunpack.c.l.b16 %v2656
      %v2952 = vunpack.c.l.b16 %v2657
      %v2953 = vunpack.c.l.b16 %v2658
      %v2954 = vunpack.c.l.b16 %v2659
      %v2955 = vunpack.c.l.b16 %v2660
      %v2956 = vunpack.c.l.b16 %v2661
      %v2957 = vunpack.c.l.b16 %v2662
      %v2958 = vunpack.c.l.b16 %v2663
      %v2959 = vunpack.c.l.b16 %v2664
      %v2960 = vunpack.c.l.b16 %v2665
      %v2961 = vunpack.c.l.b16 %v2666
      %v2962 = vunpack.c.l.b16 %v2667
      %v2963 = vunpack.c.l.b16 %v2668
      %v2964 = vunpack.c.l.b16 %v2669
      %v2965 = vunpack.c.l.b16 %v2670
      %v2966 = vpack.c.b16 %v2823, %v2822
      %v2967 = vpack.c.b16 %v2825, %v2824
      %v2968 = vpack.c.b16 %v2827, %v2826
      %v2969 = vpack.c.b16 %v2829, %v2828
      %v2970 = vpack.c.b16 %v2831, %v2830
      %v2971 = vpack.c.b16 %v2833, %v2832
      %v2972 = vpack.c.b16 %v2835, %v2834
      %v2973 = vpack.c.b16 %v2837, %v2836
      %v2974 = vpack.c.b16 %v2839, %v2838
      %v2975 = vpack.c.b16 %v2841, %v2840
      %v2976 = vpack.c.b16 %v2843, %v2842
      %v2977 = vpack.c.b16 %v2845, %v2844
      %v2978 = vpack.c.b16 %v2847, %v2846
      %v2979 = vpack.c.b16 %v2849, %v2848
      %v2980 = vpack.c.b16 %v2851, %v2850
      %v2981 = vpack.c.b16 %v2853, %v2852
      %v2982 = vpack.c.b16 %v2855, %v2854
      %v2983 = vpack.c.b16 %v2857, %v2856
      %v2984 = vpack.c.b16 %v2859, %v2858
      %v2985 = vpack.c.b16 %v2861, %v2860
      %v2986 = vpack.c.b16 %v2863, %v2862
      %v2987 = vpack.c.b16 %v2865, %v2864
      %v2988 = vpack.c.b16 %v2867, %v2866
      %v2989 = vpack.c.b16 %v2869, %v2868
      %v2990 = vpack.c.b16 %v2871, %v2870
      %v2991 = vpack.c.b16 %v2873, %v2872
      %v2992 = vpack.c.b16 %v2875, %v2874
      %v2993 = vpack.c.b16 %v2877, %v2876
      %v2994 = vpack.c.b16 %v2879, %v2878
      %v2995 = vpack.c.b16 %v2881, %v2880
      %v2996 = vpack.c.b16 %v2883, %v2882
      %v2997 = vpack.c.b16 %v2885, %v2884
      %v2998 = vpack.c.b16 %v2887, %v2886
      %v2999 = vpack.c.b16 %v2889, %v2888
      %v3000 = vpack.c.b16 %v2891, %v2890
      %v3001 = vpack.c.b16 %v2893, %v2892
      %v3002 = vpack.c.b16 %v2895, %v2894
      %v3003 = vpack.c.b16 %v2897, %v2896
      %v3004 = vpack.c.b16 %v2899, %v2898
      %v3005 = vpack.c.b16 %v2901, %v2900
      %v3006 = vpack.c.b16 %v2903, %v2902
      %v3007 = vpack.c.b16 %v2905, %v2904
      %v3008 = vpack.c.b16 %v2907, %v2906
      %v3009 = vpack.c.b16 %v2909, %v2908
      %v3010 = vpack.c.b16 %v2911, %v2910
      %v3011 = vpack.c.b16 %v2913, %v2912
      %v3012 = vpack.c.b16 %v2915, %v2914
      %v3013 = vpack.c.b16 %v2917, %v2916
      %v3014 = vpack.c.b16 %v2919, %v2918
      %v3015 = vpack.c.b16 %v2921, %v2920
      %v3016 = vpack.c.b16 %v2923, %v2922
      %v3017 = vpack.c.b16 %v2925, %v2924
      %v3018 = vpack.c.b16 %v2927, %v2926
      %v3019 = vpack.c.b16 %v2929, %v2928
      %v3020 = vpack.c.b16 %v2931, %v2930
      %v3021 = vpack.c.b16 %v2933, %v2932
      %v3022 = vpack.c.b16 %v2935, %v2934
      %v3023 = vpack.c.b16 %v2937, %v2936
      %v3024 = vpack.c.b16 %v2939, %v2938
      %v3025 = vpack.c.b16 %v2941, %v2940
      %v3026 = vpack.c.b16 %v2943, %v2942
      %v3027 = vpack.c.b16 %v2945, %v2944
      %v3028 = vpack.c.b16 %v2947, %v2946
      %v3029 = vpack.c.b16 %v2949, %v2948
      %v3030 = vpack.c.b16 %v2951, %v2950
      %v3031 = vpack.c.b16 %v2953, %v2952
      %v3032 = vpack.c.b16 %v2955, %v2954
      %v3033 = vpack.c.b16 %v2957, %v2956
      %v3034 = vpack.c.b16 %v2959, %v2958
      %v3035 = vpack.c.b16 %v2961, %v2960
      %v3036 = vpack.c.b16 %v2963, %v2962
      %v3037 = vpack.c.b16 %v2965, %v2964
      %3110 = vmatprep.subr.bf16.mxu0 0
      %3111 = vmatpush1.bf16.msra.mxu0 %v2966
      %3112 = vmatprep.subr.bf16.mxu0 0
      %3113 = vmatpush1.bf16.msra.mxu0 %v2967
      %3114 = vmatprep.subr.bf16.mxu0 0
      %3115 = vmatpush1.bf16.msra.mxu0 %v2968
      %3116 = vmatprep.subr.bf16.mxu0 0
      %3117 = vmatpush1.bf16.msra.mxu0 %v2969
      %3118 = vmatprep.subr.bf16.mxu0 0
      %3119 = vmatpush1.bf16.msra.mxu0 %v2970
      %3120 = vmatprep.subr.bf16.mxu0 0
      %3121 = vmatpush1.bf16.msra.mxu0 %v2971
      %3122 = vmatprep.subr.bf16.mxu0 0
      %3123 = vmatpush1.bf16.msra.mxu0 %v2972
      %3124 = vmatprep.subr.bf16.mxu0 0
      %3125 = vmatpush1.bf16.msra.mxu0 %v2973
      %3126 = vmatprep.subr.bf16.mxu0 0
      %3127 = vmatpush1.bf16.msra.mxu0 %v2974
      %3128 = vmatprep.subr.bf16.mxu0 0
      %3129 = vmatpush1.bf16.msra.mxu0 %v2975
      %3130 = vmatprep.subr.bf16.mxu0 0
      %3131 = vmatpush1.bf16.msra.mxu0 %v2976
      %3132 = vmatprep.subr.bf16.mxu0 0
      %3133 = vmatpush1.bf16.msra.mxu0 %v2977
      %3134 = vmatprep.subr.bf16.mxu0 0
      %3135 = vmatpush1.bf16.msra.mxu0 %v2978
      %3136 = vmatprep.subr.bf16.mxu0 0
      %3137 = vmatpush1.bf16.msra.mxu0 %v2979
      %3138 = vmatprep.subr.bf16.mxu0 0
      %3139 = vmatpush1.bf16.msra.mxu0 %v2980
      %3140 = vmatprep.subr.bf16.mxu0 0
      %3141 = vmatpush1.bf16.msra.mxu0 %v2981
      %3142 = vmatprep.mubr.bf16.mxu0 %v2492
      %3143 = vmatmul.mubr.bf16.gmra.mrb[0].mxu0 %v2491
      %v3144 = vpop.f32.mrb[0].mxu0
      %v3145 = vadd.f32 %v2676, %v3144
      %v3146 = vpop.f32.mrb[0].mxu0
      %v3147 = vpop.f32.mrb[0].mxu0
      %v3148 = vadd.f32 %v2676, %v3147
      %v3149 = vpop.f32.mrb[0].mxu0
      %3150 = vmatprep.mubr.bf16.mxu0 %v2501
      %3151 = vmatmul.mubr.bf16.gmra.mrb[0].mxu0 %v2500
      %v3152 = vpop.f32.mrb[0].mxu0
      %v3153 = vadd.f32 %v2676, %v3152
      %v3154 = vpop.f32.mrb[0].mxu0
      %v3155 = vpop.f32.mrb[0].mxu0
      %v3156 = vadd.f32 %v2676, %v3155
      %v3157 = vpop.f32.mrb[0].mxu0
      %3158 = vmatprep.mubr.bf16.mxu0 %v2510
      %3159 = vmatmul.mubr.bf16.gmra.mrb[0].mxu0 %v2509
      %v3160 = vpop.f32.mrb[0].mxu0
      %v3161 = vadd.f32 %v2676, %v3160
      %v3162 = vpop.f32.mrb[0].mxu0
      %v3163 = vpop.f32.mrb[0].mxu0
      %v3164 = vadd.f32 %v2676, %v3163
      %v3165 = vpop.f32.mrb[0].mxu0
      %3166 = vmatprep.mubr.bf16.mxu0 %v2519
      %3167 = vmatmul.mubr.bf16.gmra.mrb[0].mxu0 %v2518
      %v3168 = vpop.f32.mrb[0].mxu0
      %v3169 = vadd.f32 %v2676, %v3168
      %v3170 = vpop.f32.mrb[0].mxu0
      %v3171 = vpop.f32.mrb[0].mxu0
      %v3172 = vadd.f32 %v2676, %v3171
      %v3173 = vpop.f32.mrb[0].mxu0
      %3174 = vdwg.mxu0
      %3175 = vmatprep.subr.bf16.mxu0 0
      %3176 = vmatpush1.bf16.msra.mxu0 %v2982
      %3177 = vmatprep.subr.bf16.mxu0 0
      %3178 = vmatpush1.bf16.msra.mxu0 %v2983
      %3179 = vmatprep.subr.bf16.mxu0 0
      %3180 = vmatpush1.bf16.msra.mxu0 %v2984
      %3181 = vmatprep.subr.bf16.mxu0 0
      %3182 = vmatpush1.bf16.msra.mxu0 %v2985
      %3183 = vmatprep.subr.bf16.mxu0 0
      %3184 = vmatpush1.bf16.msra.mxu0 %v2986
      %3185 = vmatprep.subr.bf16.mxu0 0
      %3186 = vmatpush1.bf16.msra.mxu0 %v2987
      %3187 = vmatprep.subr.bf16.mxu0 0
      %3188 = vmatpush1.bf16.msra.mxu0 %v2988
      %3189 = vmatprep.subr.bf16.mxu0 0
      %3190 = vmatpush1.bf16.msra.mxu0 %v2989
      %3191 = vmatprep.subr.bf16.mxu0 0
      %3192 = vmatpush1.bf16.msra.mxu0 %v2990
      %3193 = vmatprep.subr.bf16.mxu0 0
      %3194 = vmatpush1.bf16.msra.mxu0 %v2991
      %3195 = vmatprep.subr.bf16.mxu0 0
      %3196 = vmatpush1.bf16.msra.mxu0 %v2992
      %3197 = vmatprep.subr.bf16.mxu0 0
      %3198 = vmatpush1.bf16.msra.mxu0 %v2993
      %3199 = vmatprep.subr.bf16.mxu0 0
      %3200 = vmatpush1.bf16.msra.mxu0 %v2994
      %3201 = vmatprep.subr.bf16.mxu0 0
      %3202 = vmatpush1.bf16.msra.mxu0 %v2995
      %3203 = vmatprep.subr.bf16.mxu0 0
      %3204 = vmatpush1.bf16.msra.mxu0 %v2996
      %3205 = vmatprep.subr.bf16.mxu0 0
      %3206 = vmatpush1.bf16.msra.mxu0 %v2997
      %3207 = vmatprep.mubr.bf16.mxu0 %v2494
      %3208 = vmatmul.mubr.bf16.gmra.mrb[0].mxu0 %v2493
      %v3209 = vpop.f32.mrb[0].mxu0
      %v3210 = vadd.f32 %v3145, %v3209
      %v3211 = vpop.f32.mrb[0].mxu0
      %v3212 = vpop.f32.mrb[0].mxu0
      %v3213 = vadd.f32 %v3148, %v3212
      %v3214 = vpop.f32.mrb[0].mxu0
      %3215 = vmatprep.mubr.bf16.mxu0 %v2503
      %3216 = vmatmul.mubr.bf16.gmra.mrb[0].mxu0 %v2502
      %v3217 = vpop.f32.mrb[0].mxu0
      %v3218 = vadd.f32 %v3153, %v3217
      %v3219 = vpop.f32.mrb[0].mxu0
      %v3220 = vpop.f32.mrb[0].mxu0
      %v3221 = vadd.f32 %v3156, %v3220
      %v3222 = vpop.f32.mrb[0].mxu0
      %3223 = vmatprep.mubr.bf16.mxu0 %v2512
      %3224 = vmatmul.mubr.bf16.gmra.mrb[0].mxu0 %v2511
      %v3225 = vpop.f32.mrb[0].mxu0
      %v3226 = vadd.f32 %v3161, %v3225
      %v3227 = vpop.f32.mrb[0].mxu0
      %v3228 = vpop.f32.mrb[0].mxu0
      %v3229 = vadd.f32 %v3164, %v3228
      %v3230 = vpop.f32.mrb[0].mxu0
      %3231 = vmatprep.mubr.bf16.mxu0 %v2521
      %3232 = vmatmul.mubr.bf16.gmra.mrb[0].mxu0 %v2520
      %v3233 = vpop.f32.mrb[0].mxu0
      %v3234 = vadd.f32 %v3169, %v3233
      %v3235 = vpop.f32.mrb[0].mxu0
      %v3236 = vpop.f32.mrb[0].mxu0
      %v3237 = vadd.f32 %v3172, %v3236
      %v3238 = vpop.f32.mrb[0].mxu0
      %3239 = vdwg.mxu0
      %3240 = vmatprep.subr.bf16.mxu0 0
      %3241 = vmatpush1.bf16.msra.mxu0 %v2998
      %3242 = vmatprep.subr.bf16.mxu0 0
      %3243 = vmatpush1.bf16.msra.mxu0 %v2999
      %3244 = vmatprep.subr.bf16.mxu0 0
      %3245 = vmatpush1.bf16.msra.mxu0 %v3000
      %3246 = vmatprep.subr.bf16.mxu0 0
      %3247 = vmatpush1.bf16.msra.mxu0 %v3001
      %3248 = vmatprep.subr.bf16.mxu0 0
      %3249 = vmatpush1.bf16.msra.mxu0 %v3002
      %3250 = vmatprep.subr.bf16.mxu0 0
      %3251 = vmatpush1.bf16.msra.mxu0 %v3003
      %3252 = vmatprep.subr.bf16.mxu0 0
      %3253 = vmatpush1.bf16.msra.mxu0 %v3004
      %3254 = vmatprep.subr.bf16.mxu0 0
      %3255 = vmatpush1.bf16.msra.mxu0 %v3005
      %3256 = vmatprep.subr.bf16.mxu0 0
      %3257 = vmatpush1.bf16.msra.mxu0 %v3006
      %3258 = vmatprep.subr.bf16.mxu0 0
      %3259 = vmatpush1.bf16.msra.mxu0 %v3007
      %3260 = vmatprep.subr.bf16.mxu0 0
      %3261 = vmatpush1.bf16.msra.mxu0 %v3008
      %3262 = vmatprep.subr.bf16.mxu0 0
      %3263 = vmatpush1.bf16.msra.mxu0 %v3009
      %3264 = vmatprep.subr.bf16.mxu0 0
      %3265 = vmatpush1.bf16.msra.mxu0 %v3010
      %3266 = vmatprep.subr.bf16.mxu0 0
      %3267 = vmatpush1.bf16.msra.mxu0 %v3011
      %3268 = vmatprep.subr.bf16.mxu0 0
      %3269 = vmatpush1.bf16.msra.mxu0 %v3012
      %3270 = vmatprep.subr.bf16.mxu0 0
      %3271 = vmatpush1.bf16.msra.mxu0 %v3013
      %3272 = vmatprep.mubr.bf16.mxu0 %v2496
      %3273 = vmatmul.mubr.bf16.gmra.mrb[0].mxu0 %v2495
      %v3274 = vpop.f32.mrb[0].mxu0
      %v3275 = vadd.f32 %v3210, %v3274
      %v3276 = vpop.f32.mrb[0].mxu0
      %v3277 = vpop.f32.mrb[0].mxu0
      %v3278 = vadd.f32 %v3213, %v3277
      %v3279 = vpop.f32.mrb[0].mxu0
      %3280 = vmatprep.mubr.bf16.mxu0 %v2505
      %3281 = vmatmul.mubr.bf16.gmra.mrb[0].mxu0 %v2504
      %v3282 = vpop.f32.mrb[0].mxu0
      %v3283 = vadd.f32 %v3218, %v3282
      %v3284 = vpop.f32.mrb[0].mxu0
      %v3285 = vpop.f32.mrb[0].mxu0
      %v3286 = vadd.f32 %v3221, %v3285
      %v3287 = vpop.f32.mrb[0].mxu0
      %3288 = vmatprep.mubr.bf16.mxu0 %v2514
      %3289 = vmatmul.mubr.bf16.gmra.mrb[0].mxu0 %v2513
      %v3290 = vpop.f32.mrb[0].mxu0
      %v3291 = vadd.f32 %v3226, %v3290
      %v3292 = vpop.f32.mrb[0].mxu0
      %v3293 = vpop.f32.mrb[0].mxu0
      %v3294 = vadd.f32 %v3229, %v3293
      %v3295 = vpop.f32.mrb[0].mxu0
      %3296 = vmatprep.mubr.bf16.mxu0 %v2523
      %3297 = vmatmul.mubr.bf16.gmra.mrb[0].mxu0 %v2522
      %v3298 = vpop.f32.mrb[0].mxu0
      %v3299 = vadd.f32 %v3234, %v3298
      %v3300 = vpop.f32.mrb[0].mxu0
      %v3301 = vpop.f32.mrb[0].mxu0
      %v3302 = vadd.f32 %v3237, %v3301
      %v3303 = vpop.f32.mrb[0].mxu0
      %3304 = vdwg.mxu0
      %3305 = vmatprep.subr.bf16.mxu0 0
      %3306 = vmatpush1.bf16.msra.mxu0 %v3014
      %3307 = vmatprep.subr.bf16.mxu0 0
      %3308 = vmatpush1.bf16.msra.mxu0 %v3015
      %3309 = vmatprep.subr.bf16.mxu0 0
      %3310 = vmatpush1.bf16.msra.mxu0 %v3016
      %3311 = vmatprep.subr.bf16.mxu0 0
      %3312 = vmatpush1.bf16.msra.mxu0 %v3017
      %3313 = vmatprep.subr.bf16.mxu0 0
      %3314 = vmatpush1.bf16.msra.mxu0 %v3018
      %3315 = vmatprep.subr.bf16.mxu0 0
      %3316 = vmatpush1.bf16.msra.mxu0 %v3019
      %3317 = vmatprep.subr.bf16.mxu0 0
      %3318 = vmatpush1.bf16.msra.mxu0 %v3020
      %3319 = vmatprep.subr.bf16.mxu0 0
      %3320 = vmatpush1.bf16.msra.mxu0 %v3021
      %3321 = vmatprep.subr.bf16.mxu0 0
      %3322 = vmatpush1.bf16.msra.mxu0 %v3022
      %3323 = vmatprep.subr.bf16.mxu0 0
      %3324 = vmatpush1.bf16.msra.mxu0 %v3023
      %3325 = vmatprep.subr.bf16.mxu0 0
      %3326 = vmatpush1.bf16.msra.mxu0 %v3024
      %3327 = vmatprep.subr.bf16.mxu0 0
      %3328 = vmatpush1.bf16.msra.mxu0 %v3025
      %3329 = vmatprep.subr.bf16.mxu0 0
      %3330 = vmatpush1.bf16.msra.mxu0 %v3026
      %3331 = vmatprep.subr.bf16.mxu0 0
      %3332 = vmatpush1.bf16.msra.mxu0 %v3027
      %3333 = vmatprep.subr.bf16.mxu0 0
      %3334 = vmatpush1.bf16.msra.mxu0 %v3028
      %3335 = vmatprep.subr.bf16.mxu0 0
      %3336 = vmatpush1.bf16.msra.mxu0 %v3029
      %3337 = vmatprep.mubr.bf16.mxu0 %v2498
      %3338 = vmatmul.mubr.bf16.gmra.mrb[0].mxu0 %v2497
      %v3339 = vpop.f32.mrb[0].mxu0
      %v3340 = vadd.f32 %v3275, %v3339
      %v3341 = vpop.f32.mrb[0].mxu0
      %v3342 = vpop.f32.mrb[0].mxu0
      %v3343 = vadd.f32 %v3278, %v3342
      %v3344 = vpop.f32.mrb[0].mxu0
      %3345 = vmatprep.mubr.bf16.mxu0 %v2507
      %3346 = vmatmul.mubr.bf16.gmra.mrb[0].mxu0 %v2506
      %v3347 = vpop.f32.mrb[0].mxu0
      %v3348 = vadd.f32 %v3283, %v3347
      %v3349 = vpop.f32.mrb[0].mxu0
      %v3350 = vpop.f32.mrb[0].mxu0
      %v3351 = vadd.f32 %v3286, %v3350
      %v3352 = vpop.f32.mrb[0].mxu0
      %3353 = vmatprep.mubr.bf16.mxu0 %v2516
      %3354 = vmatmul.mubr.bf16.gmra.mrb[0].mxu0 %v2515
      %v3355 = vpop.f32.mrb[0].mxu0
      %v3356 = vadd.f32 %v3291, %v3355
      %v3357 = vpop.f32.mrb[0].mxu0
      %v3358 = vpop.f32.mrb[0].mxu0
      %v3359 = vadd.f32 %v3294, %v3358
      %v3360 = vpop.f32.mrb[0].mxu0
      %3361 = vmatprep.mubr.bf16.mxu0 %v2525
      %3362 = vmatmul.mubr.bf16.gmra.mrb[0].mxu0 %v2524
      %v3363 = vpop.f32.mrb[0].mxu0
      %v3364 = vadd.f32 %v3299, %v3363
      %v3365 = vpop.f32.mrb[0].mxu0
      %v3366 = vpop.f32.mrb[0].mxu0
      %v3367 = vadd.f32 %v3302, %v3366
      %v3368 = vpop.f32.mrb[0].mxu0
      %3369 = vdwg.mxu0
      %3370 = vmatprep.subr.bf16.mxu0 0
      %3371 = vmatpush1.bf16.msra.mxu0 %v3030
      %3372 = vmatprep.subr.bf16.mxu0 0
      %3373 = vmatpush1.bf16.msra.mxu0 %v3031
      %3374 = vmatprep.subr.bf16.mxu0 0
      %3375 = vmatpush1.bf16.msra.mxu0 %v3032
      %3376 = vmatprep.subr.bf16.mxu0 0
      %3377 = vmatpush1.bf16.msra.mxu0 %v3033
      %3378 = vmatprep.subr.bf16.mxu0 0
      %3379 = vmatpush1.bf16.msra.mxu0 %v3034
      %3380 = vmatprep.subr.bf16.mxu0 0
      %3381 = vmatpush1.bf16.msra.mxu0 %v3035
      %3382 = vmatprep.subr.bf16.mxu0 0
      %3383 = vmatpush1.bf16.msra.mxu0 %v3036
      %3384 = vmatprep.subr.bf16.mxu0 0
      %3385 = vmatpush1.bf16.msra.mxu0 %v3037
      %3386 = vmatprep.subr.bf16.mxu0 0
      %3387 = vmatpush1.bf16.msra.mxu0 0
      %3388 = vmatprep.subr.bf16.mxu0 0
      %3389 = vmatpush1.bf16.msra.mxu0 0
      %3390 = vmatprep.subr.bf16.mxu0 0
      %3391 = vmatpush1.bf16.msra.mxu0 0
      %3392 = vmatprep.subr.bf16.mxu0 0
      %3393 = vmatpush1.bf16.msra.mxu0 0
      %3394 = vmatprep.subr.bf16.mxu0 0
      %3395 = vmatpush1.bf16.msra.mxu0 0
      %3396 = vmatprep.subr.bf16.mxu0 0
      %3397 = vmatpush1.bf16.msra.mxu0 0
      %3398 = vmatprep.subr.bf16.mxu0 0
      %3399 = vmatpush1.bf16.msra.mxu0 0
      %3400 = vmatprep.subr.bf16.mxu0 0
      %3401 = vmatpush1.bf16.msra.mxu0 0
      %3402 = vmatprep.mubr.bf16.mxu0 0
      %3403 = vmatmul.mubr.bf16.gmra.mrb[0].mxu0 %v2499
      %v3404 = vpop.f32.mrb[0].mxu0
      %v3405 = vadd.f32 %v3340, %v3404
      %v3406 = vpop.f32.mrb[0].mxu0
      %v3407 = vpop.f32.mrb[0].mxu0
      %v3408 = vadd.f32 %v3343, %v3407
      %v3409 = vpop.f32.mrb[0].mxu0
      %3410 = vmatprep.mubr.bf16.mxu0 0
      %3411 = vmatmul.mubr.bf16.gmra.mrb[0].mxu0 %v2508
      %v3412 = vpop.f32.mrb[0].mxu0
      %v3413 = vadd.f32 %v3348, %v3412
      %v3414 = vpop.f32.mrb[0].mxu0
      %v3415 = vpop.f32.mrb[0].mxu0
      %v3416 = vadd.f32 %v3351, %v3415
      %v3417 = vpop.f32.mrb[0].mxu0
      %3418 = vmatprep.mubr.bf16.mxu0 0
      %3419 = vmatmul.mubr.bf16.gmra.mrb[0].mxu0 %v2517
      %v3420 = vpop.f32.mrb[0].mxu0
      %v3421 = vadd.f32 %v3356, %v3420
      %v3422 = vpop.f32.mrb[0].mxu0
      %v3423 = vpop.f32.mrb[0].mxu0
      %v3424 = vadd.f32 %v3359, %v3423
      %v3425 = vpop.f32.mrb[0].mxu0
      %3426 = vmatprep.mubr.bf16.mxu0 0
      %3427 = vmatmul.mubr.bf16.gmra.mrb[0].mxu0 %v2526
      %v3428 = vpop.f32.mrb[0].mxu0
      %v3429 = vadd.f32 %v3364, %v3428
      %v3430 = vpop.f32.mrb[0].mxu0
      %v3431 = vpop.f32.mrb[0].mxu0
      %v3432 = vadd.f32 %v3367, %v3431
      %v3433 = vpop.f32.mrb[0].mxu0
      %3434 = vdwg.mxu0
      %v3435 = vmax.f32 %v3405, 0.0
      %v3436 = vmax.f32 %v3408, 0.0
      %v3437 = vmax.f32 %v3413, 0.0
      %v3438 = vmax.f32 %v3416, 0.0
      %v3439 = vmax.f32 %v3421, 0.0
      %v3440 = vmax.f32 %v3424, 0.0
      %v3441 = vmax.f32 %v3429, 0.0
      %v3442 = vmax.f32 %v3432, 0.0
      %v3443 = vpack.c.bf16 %v3436, %v3435
      %v3444 = vpack.c.bf16 %v3438, %v3437
      %v3445 = vpack.c.bf16 %v3440, %v3439
      %v3446 = vpack.c.bf16 %v3442, %v3441
      %v3447 = vld [vmem:[%s9] sm:$0xf]
      %v3448 = vld [vmem:[%s9 + $0x4] sm:$0xf]
      %v3449 = vld [vmem:[%s9 + $0x8] sm:$0xf]
      %v3450 = vld [vmem:[%s9 + $0xc] sm:$0xf]
      %v3451 = vld [vmem:[%s9 + $0x10] sm:$0xf]
      %v3452 = vld [vmem:[%s9 + $0x14] sm:$0xf]
      %v3453 = vld [vmem:[%s9 + $0x18] sm:$0xf]
      %v3454 = vld [vmem:[%s9 + $0x1c] sm:$0xf]
      %v3455 = vld [vmem:[%s9 + $0x20] sm:$0xf]
      %v3456 = vld [vmem:[%s9 + $0x24] sm:$0xf]
      %v3457 = vld [vmem:[%s9 + $0x28] sm:$0xf]
      %v3458 = vld [vmem:[%s9 + $0x2c] sm:$0xf]
      %v3459 = vld [vmem:[%s9 + $0x30] sm:$0xf]
      %v3460 = vld [vmem:[%s9 + $0x34] sm:$0xf]
      %v3461 = vld [vmem:[%s9 + $0x38] sm:$0xf]
      %v3462 = vld [vmem:[%s9 + $0x3c] sm:$0xf]
      %v3463 = vld [vmem:[%s10] sm:$0x1]
      %v3465 = vlaneseq
      %v3466 = vshrl.u32 %v3465, 7
      %v3467 = vsub.s32 0, %v3466
      %v3468 = vrot.slane %v3463, %v3467
      %v3486 = vunpack.c.l.b16 %v3447
      %v3487 = vunpack.c.l.b16 %v3448
      %v3488 = vunpack.c.l.b16 %v3449
      %v3489 = vunpack.c.l.b16 %v3450
      %v3490 = vunpack.c.l.b16 %v3451
      %v3491 = vunpack.c.l.b16 %v3452
      %v3492 = vunpack.c.l.b16 %v3453
      %v3493 = vunpack.c.l.b16 %v3454
      %v3494 = vunpack.c.l.b16 %v3455
      %v3495 = vunpack.c.l.b16 %v3456
      %v3496 = vunpack.c.l.b16 %v3457
      %v3497 = vunpack.c.l.b16 %v3458
      %v3498 = vunpack.c.l.b16 %v3459
      %v3499 = vunpack.c.l.b16 %v3460
      %v3500 = vunpack.c.l.b16 %v3461
      %v3501 = vunpack.c.l.b16 %v3462
      %v3502 = vpack.c.b16 %v3487, %v3486
      %v3503 = vpack.c.b16 %v3489, %v3488
      %v3504 = vpack.c.b16 %v3491, %v3490
      %v3505 = vpack.c.b16 %v3493, %v3492
      %v3506 = vpack.c.b16 %v3495, %v3494
      %v3507 = vpack.c.b16 %v3497, %v3496
      %v3508 = vpack.c.b16 %v3499, %v3498
      %v3509 = vpack.c.b16 %v3501, %v3500
      %3518 = vmatprep.subr.bf16.mxu0 0
      %3519 = vmatpush1.bf16.msra.mxu0 %v3502
      %3520 = vmatprep.subr.bf16.mxu0 0
      %3521 = vmatpush1.bf16.msra.mxu0 %v3503
      %3522 = vmatprep.subr.bf16.mxu0 0
      %3523 = vmatpush1.bf16.msra.mxu0 %v3504
      %3524 = vmatprep.subr.bf16.mxu0 0
      %3525 = vmatpush1.bf16.msra.mxu0 %v3505
      %3526 = vmatprep.subr.bf16.mxu0 0
      %3527 = vmatpush1.bf16.msra.mxu0 %v3506
      %3528 = vmatprep.subr.bf16.mxu0 0
      %3529 = vmatpush1.bf16.msra.mxu0 %v3507
      %3530 = vmatprep.subr.bf16.mxu0 0
      %3531 = vmatpush1.bf16.msra.mxu0 %v3508
      %3532 = vmatprep.subr.bf16.mxu0 0
      %3533 = vmatpush1.bf16.msra.mxu0 %v3509
      %3534 = vmatprep.subr.bf16.mxu0 0
      %3535 = vmatpush1.bf16.msra.mxu0 0
      %3536 = vmatprep.subr.bf16.mxu0 0
      %3537 = vmatpush1.bf16.msra.mxu0 0
      %3538 = vmatprep.subr.bf16.mxu0 0
      %3539 = vmatpush1.bf16.msra.mxu0 0
      %3540 = vmatprep.subr.bf16.mxu0 0
      %3541 = vmatpush1.bf16.msra.mxu0 0
      %3542 = vmatprep.subr.bf16.mxu0 0
      %3543 = vmatpush1.bf16.msra.mxu0 0
      %3544 = vmatprep.subr.bf16.mxu0 0
      %3545 = vmatpush1.bf16.msra.mxu0 0
      %3546 = vmatprep.subr.bf16.mxu0 0
      %3547 = vmatpush1.bf16.msra.mxu0 0
      %3548 = vmatprep.subr.bf16.mxu0 0
      %3549 = vmatpush1.bf16.msra.mxu0 0
      %3550 = vmatprep.mubr.bf16.mxu0 0
      %3551 = vmatmul.mubr.bf16.gmra.mrb[0].mxu0 %v3443
      %v3552 = vpop.f32.mrb[0].mxu0
      %v3553 = vadd.f32 %v3468, %v3552
      %v3554 = vpop.f32.mrb[0].mxu0
      %v3555 = vpop.f32.mrb[0].mxu0
      %v3556 = vadd.f32 %v3468, %v3555
      %v3557 = vpop.f32.mrb[0].mxu0
      %3558 = vmatprep.mubr.bf16.mxu0 0
      %3559 = vmatmul.mubr.bf16.gmra.mrb[0].mxu0 %v3444
      %v3560 = vpop.f32.mrb[0].mxu0
      %v3561 = vadd.f32 %v3468, %v3560
      %v3562 = vpop.f32.mrb[0].mxu0
      %v3563 = vpop.f32.mrb[0].mxu0
      %v3564 = vadd.f32 %v3468, %v3563
      %v3565 = vpop.f32.mrb[0].mxu0
      %3566 = vmatprep.mubr.bf16.mxu0 0
      %3567 = vmatmul.mubr.bf16.gmra.mrb[0].mxu0 %v3445
      %v3568 = vpop.f32.mrb[0].mxu0
      %v3569 = vadd.f32 %v3468, %v3568
      %v3570 = vpop.f32.mrb[0].mxu0
      %v3571 = vpop.f32.mrb[0].mxu0
      %v3572 = vadd.f32 %v3468, %v3571
      %v3573 = vpop.f32.mrb[0].mxu0
      %3574 = vmatprep.mubr.bf16.mxu0 0
      %3575 = vmatmul.mubr.bf16.gmra.mrb[0].mxu0 %v3446
      %v3576 = vpop.f32.mrb[0].mxu0
      %v3577 = vadd.f32 %v3468, %v3576
      %v3578 = vpop.f32.mrb[0].mxu0
      %v3579 = vpop.f32.mrb[0].mxu0
      %v3580 = vadd.f32 %v3468, %v3579
      %v3581 = vpop.f32.mrb[0].mxu0
      %3582 = vdwg.mxu0
      %v3583 = vmax.f32 %v3553, 0.0
      %v3584 = vmax.f32 %v3556, 0.0
      %v3585 = vmax.f32 %v3561, 0.0
      %v3586 = vmax.f32 %v3564, 0.0
      %v3587 = vmax.f32 %v3569, 0.0
      %v3588 = vmax.f32 %v3572, 0.0
      %v3589 = vmax.f32 %v3577, 0.0
      %v3590 = vmax.f32 %v3580, 0.0
      %v3591 = vld [vmem:[%s11] sm:$0xff]
      %v3592 = vld [vmem:[%s11 + $0x8] sm:$0xff]
      %v3593 = vld [vmem:[%s11 + $0x10] sm:$0xff]
      %v3594 = vld [vmem:[%s11 + $0x18] sm:$0xff]
      %v3595 = vld [vmem:[%s11 + $0x20] sm:$0xff]
      %v3596 = vld [vmem:[%s11 + $0x28] sm:$0xff]
      %v3597 = vld [vmem:[%s11 + $0x30] sm:$0xff]
      %v3598 = vld [vmem:[%s11 + $0x38] sm:$0xff]
      %3600 = vset.pattern.permute.xlu0 0
      %3601 = vperm.xlu0 %3600, %v3583
      %v3602 = vpop.permute.xlu0 %3601
      %3605 = vset.pattern.permute.xlu0 0
      %3606 = vperm.xlu0 %3605, %v3584
      %v3607 = vpop.permute.xlu0 %3606
      %3610 = vset.pattern.permute.xlu0 0
      %3611 = vperm.xlu0 %3610, %v3585
      %v3612 = vpop.permute.xlu0 %3611
      %3615 = vset.pattern.permute.xlu0 0
      %3616 = vperm.xlu0 %3615, %v3586
      %v3617 = vpop.permute.xlu0 %3616
      %3620 = vset.pattern.permute.xlu0 0
      %3621 = vperm.xlu0 %3620, %v3587
      %v3622 = vpop.permute.xlu0 %3621
      %3625 = vset.pattern.permute.xlu0 0
      %3626 = vperm.xlu0 %3625, %v3588
      %v3627 = vpop.permute.xlu0 %3626
      %3630 = vset.pattern.permute.xlu0 0
      %3631 = vperm.xlu0 %3630, %v3589
      %v3632 = vpop.permute.xlu0 %3631
      %3635 = vset.pattern.permute.xlu0 0
      %3636 = vperm.xlu0 %3635, %v3590
      %v3637 = vpop.permute.xlu0 %3636
      %v3639 = vmul.f32 %v3602, %v3591
      %v3640 = vmul.f32 %v3607, %v3592
      %v3641 = vmul.f32 %v3612, %v3593
      %v3642 = vmul.f32 %v3617, %v3594
      %v3643 = vmul.f32 %v3622, %v3595
      %v3644 = vmul.f32 %v3627, %v3596
      %v3645 = vmul.f32 %v3632, %v3597
      %v3646 = vmul.f32 %v3637, %v3598
      %v3647 = vld [vmem:[%s12] sm:$0xff]
      %v3648 = vld [vmem:[%s12 + $0x8] sm:$0xff]
      %v3649 = vld [vmem:[%s12 + $0x10] sm:$0xff]
      %v3650 = vld [vmem:[%s12 + $0x18] sm:$0xff]
      %v3651 = vld [vmem:[%s12 + $0x20] sm:$0xff]
      %v3652 = vld [vmem:[%s12 + $0x28] sm:$0xff]
      %v3653 = vld [vmem:[%s12 + $0x30] sm:$0xff]
      %v3654 = vld [vmem:[%s12 + $0x38] sm:$0xff]
      %3655 = vset.pattern.permute.xlu0 1
      %3656 = vperm.xlu0 %3655, %v3583
      %v3657 = vpop.permute.xlu0 %3656
      %3659 = vset.pattern.permute.xlu0 1
      %3660 = vperm.xlu0 %3659, %v3584
      %v3661 = vpop.permute.xlu0 %3660
      %3663 = vset.pattern.permute.xlu0 1
      %3664 = vperm.xlu0 %3663, %v3585
      %v3665 = vpop.permute.xlu0 %3664
      %3667 = vset.pattern.permute.xlu0 1
      %3668 = vperm.xlu0 %3667, %v3586
      %v3669 = vpop.permute.xlu0 %3668
      %3671 = vset.pattern.permute.xlu0 1
      %3672 = vperm.xlu0 %3671, %v3587
      %v3673 = vpop.permute.xlu0 %3672
      %3675 = vset.pattern.permute.xlu0 1
      %3676 = vperm.xlu0 %3675, %v3588
      %v3677 = vpop.permute.xlu0 %3676
      %3679 = vset.pattern.permute.xlu0 1
      %3680 = vperm.xlu0 %3679, %v3589
      %v3681 = vpop.permute.xlu0 %3680
      %3683 = vset.pattern.permute.xlu0 1
      %3684 = vperm.xlu0 %3683, %v3590
      %v3685 = vpop.permute.xlu0 %3684
      %v3687 = vmul.f32 %v3657, %v3647
      %v3688 = vmul.f32 %v3661, %v3648
      %v3689 = vmul.f32 %v3665, %v3649
      %v3690 = vmul.f32 %v3669, %v3650
      %v3691 = vmul.f32 %v3673, %v3651
      %v3692 = vmul.f32 %v3677, %v3652
      %v3693 = vmul.f32 %v3681, %v3653
      %v3694 = vmul.f32 %v3685, %v3654
      %v3695 = vadd.f32 %v3639, %v3687
      %v3696 = vadd.f32 %v3640, %v3688
      %v3697 = vadd.f32 %v3641, %v3689
      %v3698 = vadd.f32 %v3642, %v3690
      %v3699 = vadd.f32 %v3643, %v3691
      %v3700 = vadd.f32 %v3644, %v3692
      %v3701 = vadd.f32 %v3645, %v3693
      %v3702 = vadd.f32 %v3646, %v3694
      %v3703 = vld [vmem:[%s13] sm:$0xff]
      %v3704 = vld [vmem:[%s13 + $0x8] sm:$0xff]
      %v3705 = vld [vmem:[%s13 + $0x10] sm:$0xff]
      %v3706 = vld [vmem:[%s13 + $0x18] sm:$0xff]
      %v3707 = vld [vmem:[%s13 + $0x20] sm:$0xff]
      %v3708 = vld [vmem:[%s13 + $0x28] sm:$0xff]
      %v3709 = vld [vmem:[%s13 + $0x30] sm:$0xff]
      %v3710 = vld [vmem:[%s13 + $0x38] sm:$0xff]
      %3711 = vset.pattern.permute.xlu0 2
      %3712 = vperm.xlu0 %3711, %v3583
      %v3713 = vpop.permute.xlu0 %3712
      %3715 = vset.pattern.permute.xlu0 2
      %3716 = vperm.xlu0 %3715, %v3584
      %v3717 = vpop.permute.xlu0 %3716
      %3719 = vset.pattern.permute.xlu0 2
      %3720 = vperm.xlu0 %3719, %v3585
      %v3721 = vpop.permute.xlu0 %3720
      %3723 = vset.pattern.permute.xlu0 2
      %3724 = vperm.xlu0 %3723, %v3586
      %v3725 = vpop.permute.xlu0 %3724
      %3727 = vset.pattern.permute.xlu0 2
      %3728 = vperm.xlu0 %3727, %v3587
      %v3729 = vpop.permute.xlu0 %3728
      %3731 = vset.pattern.permute.xlu0 2
      %3732 = vperm.xlu0 %3731, %v3588
      %v3733 = vpop.permute.xlu0 %3732
      %3735 = vset.pattern.permute.xlu0 2
      %3736 = vperm.xlu0 %3735, %v3589
      %v3737 = vpop.permute.xlu0 %3736
      %3739 = vset.pattern.permute.xlu0 2
      %3740 = vperm.xlu0 %3739, %v3590
      %v3741 = vpop.permute.xlu0 %3740
      %v3743 = vmul.f32 %v3713, %v3703
      %v3744 = vmul.f32 %v3717, %v3704
      %v3745 = vmul.f32 %v3721, %v3705
      %v3746 = vmul.f32 %v3725, %v3706
      %v3747 = vmul.f32 %v3729, %v3707
      %v3748 = vmul.f32 %v3733, %v3708
      %v3749 = vmul.f32 %v3737, %v3709
      %v3750 = vmul.f32 %v3741, %v3710
      %v3751 = vadd.f32 %v3695, %v3743
      %v3752 = vadd.f32 %v3696, %v3744
      %v3753 = vadd.f32 %v3697, %v3745
      %v3754 = vadd.f32 %v3698, %v3746
      %v3755 = vadd.f32 %v3699, %v3747
      %v3756 = vadd.f32 %v3700, %v3748
      %v3757 = vadd.f32 %v3701, %v3749
      %v3758 = vadd.f32 %v3702, %v3750
      %v3759 = vld [vmem:[%s2] sm:$0x1]
      %v3760 = vpack.c.bf16 %v3752, %v3751
      %v3761 = vpack.c.bf16 %v3754, %v3753
      %v3762 = vpack.c.bf16 %v3756, %v3755
      %v3763 = vpack.c.bf16 %v3758, %v3757
      %v3764 = vld [vmem:[%s14] sm:$0x1]
      %v3766 = vsel %vm695, %v3759, 0
      %3768 = vmatprep.subr.bf16.mxu0 0
      %3769 = vmatpush1.bf16.msra.mxu0 %v3760
      %3770 = vmatprep.subr.bf16.mxu0 0
      %3771 = vmatpush1.bf16.msra.mxu0 %v3761
      %3772 = vmatprep.subr.bf16.mxu0 0
      %3773 = vmatpush1.bf16.msra.mxu0 %v3762
      %3774 = vmatprep.subr.bf16.mxu0 0
      %3775 = vmatpush1.bf16.msra.mxu0 %v3763
      %3776 = vmatprep.subr.bf16.mxu0 0
      %3777 = vmatpush1.bf16.msra.mxu0 0
      %3778 = vmatprep.subr.bf16.mxu0 0
      %3779 = vmatpush1.bf16.msra.mxu0 0
      %3780 = vmatprep.subr.bf16.mxu0 0
      %3781 = vmatpush1.bf16.msra.mxu0 0
      %3782 = vmatprep.subr.bf16.mxu0 0
      %3783 = vmatpush1.bf16.msra.mxu0 0
      %3784 = vmatprep.subr.bf16.mxu0 0
      %3785 = vmatpush1.bf16.msra.mxu0 0
      %3786 = vmatprep.subr.bf16.mxu0 0
      %3787 = vmatpush1.bf16.msra.mxu0 0
      %3788 = vmatprep.subr.bf16.mxu0 0
      %3789 = vmatpush1.bf16.msra.mxu0 0
      %3790 = vmatprep.subr.bf16.mxu0 0
      %3791 = vmatpush1.bf16.msra.mxu0 0
      %3792 = vmatprep.subr.bf16.mxu0 0
      %3793 = vmatpush1.bf16.msra.mxu0 0
      %3794 = vmatprep.subr.bf16.mxu0 0
      %3795 = vmatpush1.bf16.msra.mxu0 0
      %3796 = vmatprep.subr.bf16.mxu0 0
      %3797 = vmatpush1.bf16.msra.mxu0 0
      %3798 = vmatprep.subr.bf16.mxu0 0
      %3799 = vmatpush1.bf16.msra.mxu0 0
      %3800 = vmatprep.mubr.bf16.mxu0 0
      %3801 = vmatmul.mubr.bf16.gmra.mrb[0].mxu0 %v3766
      %v3802 = vpop.f32.mrb[0].mxu0
      %v3803 = vadd.f32 %v3764, %v3802
      %v3804 = vpop.f32.mrb[0].mxu0
      %v3805 = vpop.f32.mrb[0].mxu0
      %v3806 = vpop.f32.mrb[0].mxu0
      %3807 = vdwg.mxu0
      %vm3808 = vcmask 516096
      %v3809 = vsel %vm3808, %v3803, -inf
      %3810 = vmax.xlane.f32.xlu0 %v3809
      %v3811 = vpop.xlane.xlu0 %3810
      %v3812 = vsub.f32 %v3803, %v3811
      %v3813 = vmul.f32 %v3812, 1.442695
      %v3814 = vpow.pop %v3813
      %v3815 = vsel %vm3808, %v3814, 0.0
      %3816 = vadd.xlane.f32.xlu0 %v3815
      %v3817 = vpop.xlane.xlu0 %3816
      %v3818 = vlog2.pop %v3817
      %v3819 = vmul.f32 %v3818, 0.6931472
      %v3820 = vsub.f32 %v3812, %v3819
      %v3821 = vmax.f32 %v3803, 0.0
      %v3822 = vld [vmem:[%s15] sm:$0x1]
      %v3824 = vlaneseq
      %v3825 = vshrl.u32 %v3824, 7
      %v3826 = vsub.s32 0, %v3825
      %v3827 = vrot.slane %v3822, %v3826
      %3828 = vrot.lane.b32.xlu0 %v3827, 64
      %v3829 = vpop.permute.xlu0 %3828
      %v3831 = vmul.f32 %v3821, %v3829
      %3833 = vrot.lane.b32.xlu0 %v3831, 64
      %v3834 = vpop.permute.xlu0 %3833
      %v3836 = vsel %vm3808, %v3834, 0.0
      %3837 = vadd.xlane.f32.xlu0 %v3836
      %v3838 = vpop.xlane.xlu0 %3837
      %v3839 = vld [vmem:[#allocation4] sm:$0x1]
      %v3840 = vadd.f32 %v3838, %v3839
      %v3841 = vtanh.pop %v3840
      %3843 = vrot.lane.b32.xlu0 %v3841, 64
      %v3844 = vpop.permute.xlu0 %3843
      %v3846 = vsel %vm695, %v3820, %v3844
      %vm3847 = vcmask 531456
      %v3848 = vsel %vm3847, %v3846, 0.0
      %3849 = vst [vmem:[%s546] sm:$0x1] %v3848
      %p3850 = scmp.lt.s32.totalorder %s30, 1
      %s3851 = scalar_select %p3850, %s30, 1
      %s3852 = scalar_lea.vmem %s17, %s3851
      // Predicated region
      $region89: #{alpha_zero_forward.1} parent=87 // pred_check
        %p3853 = pneg %p410
      $region90: #{alpha_zero_forward.1} parent=87 // pred_check_branch
        %3855 = sbr.rel (%p3853) target = $region92
      $region91: #{alpha_zero_forward.1} parent=87 // pred_region
        _
      $region92: #{alpha_zero_forward.1} parent=87 // pred_fallthru
        _
    $region88: #{alpha_zero_forward.1} parent=5 // pred_fallthru
      _
    %p3856 = scmp.le.s32.totalorder 2, %s25
    // Predicated region
    $region93: #{alpha_zero_forward.1} parent=5 // pred_check
      %p3857 = pneg %p3856
    $region94: #{alpha_zero_forward.1} parent=5 // pred_check_branch
      %3859 = sbr.rel (%p3857) target = $region96
    $region95: #{alpha_zero_forward.1} parent=5 // pred_region
      %s3860 = ssub.s32 %s25, 2
      // Predicated region
      $region97: #{alpha_zero_forward.1} parent=95 // pred_check
        %p3861 = pneg %p416
      $region98: #{alpha_zero_forward.1} parent=95 // pred_check_branch
        %3863 = sbr.rel (%p3861) target = $region100
      $region99: #{alpha_zero_forward.1} parent=95 // pred_region
        %p3864 = scmp.lt.s32.totalorder %s31, 1
        %s3865 = scalar_select %p3864, %s31, 1
        %s3866 = scalar_lea.vmem %s17, %s3865
      $region100: #{alpha_zero_forward.1} parent=95 // pred_fallthru
        _
    $region96: #{alpha_zero_forward.1} parent=5 // pred_fallthru
      _
  $region6: #{alpha_zero_forward.1} parent=0 // loop_footer
    %s29 = sadd.s32 1, %s25
  $region7: #{alpha_zero_forward.1} parent=0 // loop_footer_branch
    %24 = sbr.rel target = $region3
  $region8: #{alpha_zero_forward.1} parent=0 // loop_exit
    _

</llo_original>
